<compile_context>
chip_gen: v7x
topology: tpu7x:2x2x1
jax: 0.10.0
libtpu: 0.0.40
codegen_flags: <defaults>
</compile_context>

<pallas_src>
import jax
import jax.numpy as jnp
from jax import lax
from jax.experimental import pallas as pl
from jax.experimental.pallas import tpu as pltpu

LN_EPS = 1e-5
NEG_BIG = 1e9


def _layer_norm(x, g, b):
    mu = jnp.mean(x, axis=-1, keepdims=True)
    var = jnp.mean((x - mu) ** 2, axis=-1, keepdims=True)
    return (x - mu) * lax.rsqrt(var + LN_EPS) * g + b


# ----------------------------------------------------------------------------
# Fused DecoderLayer kernel (one batch element per grid step).
# ----------------------------------------------------------------------------
def _make_decoder_kernel(n_head, d_k, d_v, norm, slf_mask_kind, enc_mask_kind):
    bf16 = jnp.bfloat16
    f32 = jnp.float32

    def mha(xq, xkv, mask_bias, npm, w, attn_ref, ctx_ref):
        """One MultiHeadAttention block (+ residual, LayerNorm, non_pad_mask)."""
        wq, bq, wk, bk, wv, bv, wo, bo, ln_g, ln_b = w
        residual = xq

        xq_b = xq.astype(bf16)
        xkv_b = xq_b if (xkv is xq) else xkv.astype(bf16)

        # Lane-dense projections: one full-width MXU pass each, no activation
        # replication.  1/sqrt(d_k) is already folded into wq / bq.
        q = jnp.dot(xq_b, wq[...], preferred_element_type=f32) + bq[...]    # (Lq, H*d_k)
        k = jnp.dot(xkv_b, wk[...], preferred_element_type=f32) + bk[...]   # (Lk, H*d_k)
        v = jnp.dot(xkv_b, wv[...], preferred_element_type=f32) + bv[...]   # (Lk, H*d_v)
        qb, kb, vb = q.astype(bf16), k.astype(bf16), v.astype(bf16)

        # Heads are split only for the score / context contractions (static lane
        # slices; the per-head matmuls here have N = Lk / N = d_v, identical MXU work
        # to a head-batched dot_general).  Per-head softmax probs are stored straight
        # into the bf16 attention-map output; per-head contexts land in a shared
        # (Lq, H*d_v) bf16 scratch so the output projection is a single matmul.
        for h in range(n_head):  # static unroll
            q_h = qb[:, h * d_k:(h + 1) * d_k]
            k_h = kb[:, h * d_k:(h + 1) * d_k]
            v_h = vb[:, h * d_v:(h + 1) * d_v]

            s = jnp.einsum("qd,kd->qk", q_h, k_h, preferred_element_type=f32)
            if mask_bias is not None:
                s = s - mask_bias
            m = jnp.max(s, axis=-1, keepdims=True)
            e = jnp.exp(s - m)
            # approx reciprocal -> EUP slot; ~1e-3 rel. error, fine for these outputs.
            p = e * pl.reciprocal(jnp.sum(e, axis=-1, keepdims=True), approx=True)

            attn_ref[0, h] = p.astype(attn_ref.dtype)
            ctx_ref[:, h * d_v:(h + 1) * d_v] = jnp.dot(
                p.astype(bf16), v_h, preferred_element_type=f32).astype(bf16)

        # Collapsed output projection: head reduction happens inside the MXU
        # accumulator of a single (Lq, H*d_v) x (H*d_v, D) pass.
        o = jnp.dot(ctx_ref[...], wo[...], preferred_element_type=f32) + bo[...]
        o = o + residual
        o = _layer_norm(o, ln_g[...], ln_b[...])
        return o * npm

    def kernel(*refs):
        it = iter(refs)
        dec_ref = next(it)
        enc_ref = next(it)
        npm_ref = next(it)
        slf_mask_ref = next(it) if slf_mask_kind == "dense" else None
        enc_mask_ref = next(it) if enc_mask_kind == "dense" else None
        slf_w = tuple(next(it) for _ in range(10))
        enc_w = tuple(next(it) for _ in range(10))
        w1, b1, w2, b2, ffn_g, ffn_b = (next(it) for _ in range(6))
        out_ref, slf_attn_ref, enc_attn_ref = (next(it) for _ in range(3))
        ctx_ref = next(it)   # VMEM scratch (Ld, H*d_v) bf16, reused by both MHA stages

        x0 = dec_ref[0]      # (Ld, D) f32
        enc = enc_ref[0]     # (Le, D) f32
        npm = npm_ref[0]     # (Ld, 1) f32
        ld = x0.shape[0]

        # Self-attention mask built on the VPU (no O(L^2) mask DMA for causal / none).
        if slf_mask_kind == "causal":
            row = lax.broadcasted_iota(jnp.int32, (ld, ld), 0)
            col = lax.broadcasted_iota(jnp.int32, (ld, ld), 1)
            slf_bias = jnp.where(col > row, jnp.float32(NEG_BIG), jnp.float32(0.0))
        elif slf_mask_kind == "dense":
            slf_bias = NEG_BIG * slf_mask_ref[0].astype(f32)      # int8 -> f32 in-kernel
        else:
            slf_bias = None
        enc_bias = (NEG_BIG * enc_mask_ref[0].astype(f32)
                    if enc_mask_kind == "dense" else None)

        # Stage 1: masked self-attention.
        x1 = mha(x0, x0, slf_bias, npm, slf_w, slf_attn_ref, ctx_ref)
        # Stage 2: encoder-decoder attention.
        x2 = mha(x1, enc, enc_bias, npm, enc_w, enc_attn_ref, ctx_ref)
        # Stage 3: position-wise FFN (1x1 convs over NCL == per-position linears).
        hid = jnp.dot(x2.astype(bf16), w1[...], preferred_element_type=f32) + b1[...]
        hid = jnp.maximum(hid, 0.0)
        y = jnp.dot(hid.astype(bf16), w2[...], preferred_element_type=f32) + b2[...]
        y = y + x2
        if norm:
            y = _layer_norm(y, ffn_g[...], ffn_b[...])
        out_ref[0] = y * npm

    return kernel


# ----------------------------------------------------------------------------
# Wrapper: weight re-layout (bf16 matmul operands, scale folded into Q path).
# ----------------------------------------------------------------------------
def _prep_mha_params(p, n_head, d_k, d_v):
    bf16, f32 = jnp.bfloat16, jnp.float32
    scale = 1.0 / (float(d_k) ** 0.5)
    return [
        (p["wq"].astype(f32) * scale).astype(bf16),   # (D, H*d_k)  scale folded in
        (p["bq"].astype(f32) * scale),                # (1, H*d_k)
        p["wk"].astype(bf16),                         # (D, H*d_k)
        p["bk"].astype(f32),
        p["wv"].astype(bf16),                         # (D, H*d_v)
        p["bv"].astype(f32),
        p["wo"].astype(bf16),                         # (H*d_v, D)
        p["bo"].astype(f32),
        p["ln_g"].astype(f32),
        p["ln_b"].astype(f32),
    ]


def _prep_ffn_params(p):
    bf16, f32 = jnp.bfloat16, jnp.float32
    return [p["w1"].astype(bf16), p["b1"].astype(f32),
            p["w2"].astype(bf16), p["b2"].astype(f32),
            p["ln_g"].astype(f32), p["ln_b"].astype(f32)]


def _full_spec(arr):
    nd = arr.ndim
    return pl.BlockSpec(arr.shape, lambda b, _n=nd: (0,) * _n)


def _batch_spec(shape):
    nd = len(shape)
    return pl.BlockSpec((1,) + tuple(shape[1:]), lambda b, _n=nd: (b,) + (0,) * (_n - 1))


def _vmem_limit_bytes():
    # 75% of physical VMEM: ~48 MiB on v7x (64 MiB/TC), ~96 MiB on v5e/v6e (128 MiB),
    # leaving headroom for double buffers and compiler scratch.
    try:
        cap = pltpu.get_tpu_info().vmem_capacity_bytes
    except Exception:
        cap = 64 * 1024 * 1024
    return int(cap) * 3 // 4


def decoder_layer(params, dec_input, enc_output, non_pad_mask=None,
                  slf_attn_mask=None, dec_enc_attn_mask=None, norm=True,
                  *, n_head, d_k, d_v, slf_causal=False):
    f32 = jnp.float32
    B, Ld, D = dec_input.shape
    Le = enc_output.shape[1]

    npm = jnp.ones((B, Ld, 1), f32) if non_pad_mask is None else non_pad_mask.astype(f32)
    slf_mask_kind = "dense" if slf_attn_mask is not None else ("causal" if slf_causal else "none")
    enc_mask_kind = "dense" if dec_enc_attn_mask is not None else "none"

    kernel = _make_decoder_kernel(n_head, d_k, d_v, norm, slf_mask_kind, enc_mask_kind)

    inputs = [dec_input.astype(f32), enc_output.astype(f32), npm]
    in_specs = [_batch_spec(dec_input.shape), _batch_spec(enc_output.shape), _batch_spec(npm.shape)]
    if slf_mask_kind == "dense":
        m = (slf_attn_mask != 0).astype(jnp.int8)        # int8 mask: 4x less DMA than f32
        inputs.append(m); in_specs.append(_batch_spec(m.shape))
    if enc_mask_kind == "dense":
        m = (dec_enc_attn_mask != 0).astype(jnp.int8)
        inputs.append(m); in_specs.append(_batch_spec(m.shape))

    weight_args = (_prep_mha_params(params["slf_attn"], n_head, d_k, d_v)
                   + _prep_mha_params(params["enc_attn"], n_head, d_k, d_v)
                   + _prep_ffn_params(params["pos_ffn"]))
    inputs += weight_args
    # Weight blocks use a constant index_map -> stay resident across the batch grid.
    in_specs += [_full_spec(w) for w in weight_args]

    out_shape = (
        jax.ShapeDtypeStruct((B, Ld, D), f32),
        jax.ShapeDtypeStruct((B, n_head, Ld, Ld), jnp.bfloat16),   # attn maps in bf16
        jax.ShapeDtypeStruct((B, n_head, Ld, Le), jnp.bfloat16),
    )
    out_specs = (
        pl.BlockSpec((1, Ld, D), lambda b: (b, 0, 0)),
        pl.BlockSpec((1, n_head, Ld, Ld), lambda b: (b, 0, 0, 0)),
        pl.BlockSpec((1, n_head, Ld, Le), lambda b: (b, 0, 0, 0)),
    )

    dec_out, slf_attn, enc_attn = pl.pallas_call(
        kernel,
        grid=(B,),
        in_specs=in_specs,
        out_specs=out_specs,
        out_shape=out_shape,
        scratch_shapes=[pltpu.VMEM((Ld, n_head * d_v), jnp.bfloat16)],
        compiler_params=pltpu.CompilerParams(
            dimension_semantics=("parallel",),      # batch sharded across TCs (megacore/v7x)
            vmem_limit_bytes=_vmem_limit_bytes(),
        ),
    )(*inputs)

    # TODO(synk): the reference MultiHeadAttention's extra `sfm_attn` return is not in the
    # provided source; in eval mode (no dropout) it should equal the softmax attention, so
    # we return the enc-dec attention weights for it.
    sfm_attn = enc_attn
    return dec_out, sfm_attn, slf_attn, enc_attn


# ----------------------------------------------------------------------------
# Deterministic parameter init (synthetic; shapes follow the PyTorch module).
# ----------------------------------------------------------------------------
def init_params(key, d_model, d_inner, n_head, d_k, d_v):
    ks = iter(jax.random.split(key, 24))
    f32 = jnp.float32

    def lin(fan_in, fan_out):
        w = 0.05 * jax.random.normal(next(ks), (fan_in, fan_out), f32)
        b = 0.01 * jax.random.normal(next(ks), (1, fan_out), f32)
        return w, b

    def mha():
        wq, bq = lin(d_model, n_head * d_k)
        wk, bk = lin(d_model, n_head * d_k)
        wv, bv = lin(d_model, n_head * d_v)
        wo, bo = lin(n_head * d_v, d_model)
        return dict(wq=wq, bq=bq, wk=wk, bk=bk, wv=wv, bv=bv, wo=wo, bo=bo,
                    ln_g=jnp.ones((1, d_model), f32), ln_b=jnp.zeros((1, d_model), f32))

    w1, b1 = lin(d_model, d_inner)
    w2, b2 = lin(d_inner, d_model)
    ffn = dict(w1=w1, b1=b1, w2=w2, b2=b2,
               ln_g=jnp.ones((1, d_model), f32), ln_b=jnp.zeros((1, d_model), f32))
    return dict(slf_attn=mha(), enc_attn=mha(), pos_ffn=ffn)


# ----------------------------------------------------------------------------
# Pure-JAX reference with matching bf16 matmul-operand precision (f32 accumulation).
# ----------------------------------------------------------------------------
def _ref_mha(p, q, k, v, mask, npm, n_head, d_k, d_v):
    bf16, f32 = jnp.bfloat16, jnp.float32
    B, Lq, D = q.shape
    residual = q

    def proj(x, w, b, dh):
        y = jnp.einsum("bld,dk->blk", x.astype(bf16), w.astype(bf16),
                       preferred_element_type=f32) + b
        return y.reshape(B, -1, n_head, dh).transpose(0, 2, 1, 3)

    qh = proj(q, p["wq"], p["bq"], d_k)
    kh = proj(k, p["wk"], p["bk"], d_k)
    vh = proj(v, p["wv"], p["bv"], d_v)
    s = jnp.einsum("bhqd,bhkd->bhqk", qh.astype(bf16), kh.astype(bf16),
                   preferred_element_type=f32) * (1.0 / float(d_k) ** 0.5)
    if mask is not None:
        s = s - NEG_BIG * mask[:, None]
    a = jax.nn.softmax(s, axis=-1)
    ctx = jnp.einsum("bhqk,bhkd->bhqd", a.astype(bf16), vh.astype(bf16),
                     preferred_element_type=f32)
    o = ctx.transpose(0, 2, 1, 3).reshape(B, Lq, n_head * d_v)
    o = jnp.einsum("bld,dm->blm", o.astype(bf16), p["wo"].astype(bf16),
                   preferred_element_type=f32) + p["bo"] + residual
    mu = o.mean(-1, keepdims=True)
    var = ((o - mu) ** 2).mean(-1, keepdims=True)
    o = (o - mu) * lax.rsqrt(var + LN_EPS) * p["ln_g"] + p["ln_b"]
    return o * npm, a


def _ref_decoder(params, dec_input, enc_output, npm, slf_m, de_m, n_head, d_k, d_v, norm=True):
    bf16, f32 = jnp.bfloat16, jnp.float32
    o, slf_a = _ref_mha(params["slf_attn"], dec_input, dec_input, dec_input, slf_m, npm,
                        n_head, d_k, d_v)
    o, enc_a = _ref_mha(params["enc_attn"], o, enc_output, enc_output, de_m, npm,
                        n_head, d_k, d_v)
    p = params["pos_ffn"]
    res = o
    h = jnp.einsum("bld,de->ble", o.astype(bf16), p["w1"].astype(bf16),
                   preferred_element_type=f32) + p["b1"]
    h = jnp.maximum(h, 0.0)
    y = jnp.einsum("ble,ed->bld", h.astype(bf16), p["w2"].astype(bf16),
                   preferred_element_type=f32) + p["b2"]
    y = y + res
    if norm:
        mu = y.mean(-1, keepdims=True)
        var = ((y - mu) ** 2).mean(-1, keepdims=True)
        y = (y - mu) * lax.rsqrt(var + LN_EPS) * p["ln_g"] + p["ln_b"]
    return y * npm, enc_a, slf_a, enc_a


if __name__ == "__main__":
    B, L_dec, L_enc = 2, 8, 8
    d_model, d_inner, n_head, d_k, d_v = 32, 64, 4, 8, 8

    key = jax.random.PRNGKey(0)
    k_param, k_dec, k_enc = jax.random.split(key, 3)
    params = init_params(k_param, d_model, d_inner, n_head, d_k, d_v)

    dec_input = jax.random.normal(k_dec, (B, L_dec, d_model), jnp.float32)
    enc_output = jax.random.normal(k_enc, (B, L_enc, d_model), jnp.float32)
    non_pad_mask = jnp.ones((B, L_dec, 1), jnp.float32)

    # Dense enc-dec padding mask (exercises the int8 dense-mask path): last 2 encoder
    # positions of batch element 1 are masked.  Causal self-mask is built in-kernel.
    dec_enc_mask = jnp.zeros((B, L_dec, L_enc), jnp.float32).at[1, :, L_enc - 2:].set(1.0)

    dec_out, sfm_attn, dec_slf_attn, dec_enc_attn = decoder_layer(
        params, dec_input, enc_output, non_pad_mask,
        slf_attn_mask=None, dec_enc_attn_mask=dec_enc_mask, norm=True,
        n_head=n_head, d_k=d_k, d_v=d_v, slf_causal=True)
    jax.block_until_ready((dec_out, sfm_attn, dec_slf_attn, dec_enc_attn))

    # Correctness check against the pure-JAX reference (same causal mask, dense form).
    causal = jnp.triu(jnp.ones((L_dec, L_dec), jnp.float32), k=1)[None].repeat(B, axis=0)
    r_out, r_sfm, r_slf, r_enc = _ref_decoder(
        params, dec_input, enc_output, non_pad_mask, causal, dec_enc_mask,
        n_head, d_k, d_v, norm=True)

    assert dec_out.shape == (B, L_dec, d_model)
    assert dec_slf_attn.shape == (B, n_head, L_dec, L_dec)
    assert dec_enc_attn.shape == (B, n_head, L_dec, L_enc)
    assert jnp.allclose(dec_out, r_out, atol=2e-2, rtol=2e-2)
    assert jnp.allclose(dec_slf_attn.astype(jnp.float32), r_slf, atol=2e-2, rtol=2e-2)
    assert jnp.allclose(dec_enc_attn.astype(jnp.float32), r_enc, atol=2e-2, rtol=2e-2)

    print("KERNEL_OK")
</pallas_src>

<mosaic_0001>
module attributes {stable_mosaic.version = 11 : i64} {
  func.func @kernel(%arg0: i32, %arg1: memref<1x8x32xf32, #tpu.memory_space<vmem>>, %arg2: memref<1x8x32xf32, #tpu.memory_space<vmem>>, %arg3: memref<1x8x1xf32, #tpu.memory_space<vmem>>, %arg4: memref<1x8x8xi8, #tpu.memory_space<vmem>>, %arg5: memref<32x32xbf16, #tpu.memory_space<vmem>>, %arg6: memref<1x32xf32, #tpu.memory_space<vmem>>, %arg7: memref<32x32xbf16, #tpu.memory_space<vmem>>, %arg8: memref<1x32xf32, #tpu.memory_space<vmem>>, %arg9: memref<32x32xbf16, #tpu.memory_space<vmem>>, %arg10: memref<1x32xf32, #tpu.memory_space<vmem>>, %arg11: memref<32x32xbf16, #tpu.memory_space<vmem>>, %arg12: memref<1x32xf32, #tpu.memory_space<vmem>>, %arg13: memref<1x32xf32, #tpu.memory_space<vmem>>, %arg14: memref<1x32xf32, #tpu.memory_space<vmem>>, %arg15: memref<32x32xbf16, #tpu.memory_space<vmem>>, %arg16: memref<1x32xf32, #tpu.memory_space<vmem>>, %arg17: memref<32x32xbf16, #tpu.memory_space<vmem>>, %arg18: memref<1x32xf32, #tpu.memory_space<vmem>>, %arg19: memref<32x32xbf16, #tpu.memory_space<vmem>>, %arg20: memref<1x32xf32, #tpu.memory_space<vmem>>, %arg21: memref<32x32xbf16, #tpu.memory_space<vmem>>, %arg22: memref<1x32xf32, #tpu.memory_space<vmem>>, %arg23: memref<1x32xf32, #tpu.memory_space<vmem>>, %arg24: memref<1x32xf32, #tpu.memory_space<vmem>>, %arg25: memref<32x64xbf16, #tpu.memory_space<vmem>>, %arg26: memref<1x64xf32, #tpu.memory_space<vmem>>, %arg27: memref<64x32xbf16, #tpu.memory_space<vmem>>, %arg28: memref<1x32xf32, #tpu.memory_space<vmem>>, %arg29: memref<1x32xf32, #tpu.memory_space<vmem>>, %arg30: memref<1x32xf32, #tpu.memory_space<vmem>>, %arg31: memref<1x8x32xf32, #tpu.memory_space<vmem>>, %arg32: memref<1x4x8x8xbf16, #tpu.memory_space<vmem>>, %arg33: memref<1x4x8x8xbf16, #tpu.memory_space<vmem>>, %arg34: memref<8x32xbf16, #tpu.memory_space<vmem>>) attributes {dimension_semantics = [#tpu.dimension_semantics<parallel>], iteration_bounds = array<i64: 2>, scalar_prefetch = 0 : i64, scratch_operands = 1 : i64, tpu.core_type = #tpu.core_type<tc>, window_params = [{transform_indices = @transform_0, window_bounds = array<i64: 1, 8, 32>}, {transform_indices = @transform_1, window_bounds = array<i64: 1, 8, 32>}, {transform_indices = @transform_2, window_bounds = array<i64: 1, 8, 1>}, {transform_indices = @transform_3, window_bounds = array<i64: 1, 8, 8>}, {pipeline_mode = #tpu.pipeline_mode<synchronous>, transform_indices = @transform_4, window_bounds = array<i64: 32, 32>}, {pipeline_mode = #tpu.pipeline_mode<synchronous>, transform_indices = @transform_5, window_bounds = array<i64: 1, 32>}, {pipeline_mode = #tpu.pipeline_mode<synchronous>, transform_indices = @transform_6, window_bounds = array<i64: 32, 32>}, {pipeline_mode = #tpu.pipeline_mode<synchronous>, transform_indices = @transform_7, window_bounds = array<i64: 1, 32>}, {pipeline_mode = #tpu.pipeline_mode<synchronous>, transform_indices = @transform_8, window_bounds = array<i64: 32, 32>}, {pipeline_mode = #tpu.pipeline_mode<synchronous>, transform_indices = @transform_9, window_bounds = array<i64: 1, 32>}, {pipeline_mode = #tpu.pipeline_mode<synchronous>, transform_indices = @transform_10, window_bounds = array<i64: 32, 32>}, {pipeline_mode = #tpu.pipeline_mode<synchronous>, transform_indices = @transform_11, window_bounds = array<i64: 1, 32>}, {pipeline_mode = #tpu.pipeline_mode<synchronous>, transform_indices = @transform_12, window_bounds = array<i64: 1, 32>}, {pipeline_mode = #tpu.pipeline_mode<synchronous>, transform_indices = @transform_13, window_bounds = array<i64: 1, 32>}, {pipeline_mode = #tpu.pipeline_mode<synchronous>, transform_indices = @transform_14, window_bounds = array<i64: 32, 32>}, {pipeline_mode = #tpu.pipeline_mode<synchronous>, transform_indices = @transform_15, window_bounds = array<i64: 1, 32>}, {pipeline_mode = #tpu.pipeline_mode<synchronous>, transform_indices = @transform_16, window_bounds = array<i64: 32, 32>}, {pipeline_mode = #tpu.pipeline_mode<synchronous>, transform_indices = @transform_17, window_bounds = array<i64: 1, 32>}, {pipeline_mode = #tpu.pipeline_mode<synchronous>, transform_indices = @transform_18, window_bounds = array<i64: 32, 32>}, {pipeline_mode = #tpu.pipeline_mode<synchronous>, transform_indices = @transform_19, window_bounds = array<i64: 1, 32>}, {pipeline_mode = #tpu.pipeline_mode<synchronous>, transform_indices = @transform_20, window_bounds = array<i64: 32, 32>}, {pipeline_mode = #tpu.pipeline_mode<synchronous>, transform_indices = @transform_21, window_bounds = array<i64: 1, 32>}, {pipeline_mode = #tpu.pipeline_mode<synchronous>, transform_indices = @transform_22, window_bounds = array<i64: 1, 32>}, {pipeline_mode = #tpu.pipeline_mode<synchronous>, transform_indices = @transform_23, window_bounds = array<i64: 1, 32>}, {pipeline_mode = #tpu.pipeline_mode<synchronous>, transform_indices = @transform_24, window_bounds = array<i64: 32, 64>}, {pipeline_mode = #tpu.pipeline_mode<synchronous>, transform_indices = @transform_25, window_bounds = array<i64: 1, 64>}, {pipeline_mode = #tpu.pipeline_mode<synchronous>, transform_indices = @transform_26, window_bounds = array<i64: 64, 32>}, {pipeline_mode = #tpu.pipeline_mode<synchronous>, transform_indices = @transform_27, window_bounds = array<i64: 1, 32>}, {pipeline_mode = #tpu.pipeline_mode<synchronous>, transform_indices = @transform_28, window_bounds = array<i64: 1, 32>}, {pipeline_mode = #tpu.pipeline_mode<synchronous>, transform_indices = @transform_29, window_bounds = array<i64: 1, 32>}, {transform_indices = @transform_30, window_bounds = array<i64: 1, 8, 32>}, {transform_indices = @transform_31, window_bounds = array<i64: 1, 4, 8, 8>}, {transform_indices = @transform_32, window_bounds = array<i64: 1, 4, 8, 8>}]} {
    %c0 = arith.constant 0 : index
    %c0_0 = arith.constant 0 : index
    %c0_1 = arith.constant 0 : index
    %0 = vector.load %arg1[%c0, %c0_0, %c0_1] : memref<1x8x32xf32, #tpu.memory_space<vmem>>, vector<1x8x32xf32>
    %1 = vector.shape_cast %0 : vector<1x8x32xf32> to vector<8x32xf32>
    %c0_2 = arith.constant 0 : index
    %c0_3 = arith.constant 0 : index
    %c0_4 = arith.constant 0 : index
    %2 = vector.load %arg2[%c0_2, %c0_3, %c0_4] : memref<1x8x32xf32, #tpu.memory_space<vmem>>, vector<1x8x32xf32>
    %3 = vector.shape_cast %2 : vector<1x8x32xf32> to vector<8x32xf32>
    %c0_5 = arith.constant 0 : index
    %c0_6 = arith.constant 0 : index
    %c0_7 = arith.constant 0 : index
    %4 = vector.load %arg3[%c0_5, %c0_6, %c0_7] : memref<1x8x1xf32, #tpu.memory_space<vmem>>, vector<1x8x1xf32>
    %5 = vector.shape_cast %4 : vector<1x8x1xf32> to vector<8x1xf32>
    %6 = tpu.iota {dimensions = array<i32: 0>} : vector<8x8xi32>
    %7 = tpu.iota {dimensions = array<i32: 1>} : vector<8x8xi32>
    %8 = arith.cmpi sgt, %7, %6 : vector<8x8xi32>
    %cst = arith.constant 1.000000e+09 : f32
    %cst_8 = arith.constant 0.000000e+00 : f32
    %9 = vector.broadcast %cst : f32 to vector<8x8xf32>
    %10 = vector.broadcast %cst_8 : f32 to vector<8x8xf32>
    %11 = arith.select %8, %9, %10 : vector<8x8xi1>, vector<8x8xf32>
    %c0_9 = arith.constant 0 : index
    %c0_10 = arith.constant 0 : index
    %c0_11 = arith.constant 0 : index
    %12 = vector.load %arg4[%c0_9, %c0_10, %c0_11] : memref<1x8x8xi8, #tpu.memory_space<vmem>>, vector<1x8x8xi8>
    %13 = vector.shape_cast %12 : vector<1x8x8xi8> to vector<8x8xi8>
    %14 = arith.sitofp %13 : vector<8x8xi8> to vector<8x8xf32>
    %cst_12 = arith.constant 1.000000e+09 : f32
    %15 = vector.broadcast %cst_12 : f32 to vector<8x8xf32>
    %16 = arith.mulf %15, %14 : vector<8x8xf32>
    %17 = arith.truncf %1 : vector<8x32xf32> to vector<8x32xbf16>
    %c0_13 = arith.constant 0 : index
    %c0_14 = arith.constant 0 : index
    %18 = vector.load %arg5[%c0_13, %c0_14] : memref<32x32xbf16, #tpu.memory_space<vmem>>, vector<32x32xbf16>
    %cst_15 = arith.constant dense<0.000000e+00> : vector<8x32xf32>
    %19 = tpu.matmul %17, %18, %cst_15 {dimension_numbers = #tpu.dot_dimension_numbers<[1], [0], [0], [1], [0, 0, 1, 1], [], []>} : vector<8x32xbf16>, vector<32x32xbf16>, vector<8x32xf32> -> vector<8x32xf32>
    %c0_16 = arith.constant 0 : index
    %c0_17 = arith.constant 0 : index
    %20 = vector.load %arg6[%c0_16, %c0_17] : memref<1x32xf32, #tpu.memory_space<vmem>>, vector<1x32xf32>
    %21 = vector.broadcast %20 : vector<1x32xf32> to vector<8x32xf32>
    %22 = arith.addf %19, %21 : vector<8x32xf32>
    %c0_18 = arith.constant 0 : index
    %c0_19 = arith.constant 0 : index
    %23 = vector.load %arg7[%c0_18, %c0_19] : memref<32x32xbf16, #tpu.memory_space<vmem>>, vector<32x32xbf16>
    %cst_20 = arith.constant dense<0.000000e+00> : vector<8x32xf32>
    %24 = tpu.matmul %17, %23, %cst_20 {dimension_numbers = #tpu.dot_dimension_numbers<[1], [0], [0], [1], [0, 0, 1, 1], [], []>} : vector<8x32xbf16>, vector<32x32xbf16>, vector<8x32xf32> -> vector<8x32xf32>
    %c0_21 = arith.constant 0 : index
    %c0_22 = arith.constant 0 : index
    %25 = vector.load %arg8[%c0_21, %c0_22] : memref<1x32xf32, #tpu.memory_space<vmem>>, vector<1x32xf32>
    %26 = vector.broadcast %25 : vector<1x32xf32> to vector<8x32xf32>
    %27 = arith.addf %24, %26 : vector<8x32xf32>
    %c0_23 = arith.constant 0 : index
    %c0_24 = arith.constant 0 : index
    %28 = vector.load %arg9[%c0_23, %c0_24] : memref<32x32xbf16, #tpu.memory_space<vmem>>, vector<32x32xbf16>
    %cst_25 = arith.constant dense<0.000000e+00> : vector<8x32xf32>
    %29 = tpu.matmul %17, %28, %cst_25 {dimension_numbers = #tpu.dot_dimension_numbers<[1], [0], [0], [1], [0, 0, 1, 1], [], []>} : vector<8x32xbf16>, vector<32x32xbf16>, vector<8x32xf32> -> vector<8x32xf32>
    %c0_26 = arith.constant 0 : index
    %c0_27 = arith.constant 0 : index
    %30 = vector.load %arg10[%c0_26, %c0_27] : memref<1x32xf32, #tpu.memory_space<vmem>>, vector<1x32xf32>
    %31 = vector.broadcast %30 : vector<1x32xf32> to vector<8x32xf32>
    %32 = arith.addf %29, %31 : vector<8x32xf32>
    %33 = arith.truncf %22 : vector<8x32xf32> to vector<8x32xbf16>
    %34 = arith.truncf %27 : vector<8x32xf32> to vector<8x32xbf16>
    %35 = arith.truncf %32 : vector<8x32xf32> to vector<8x32xbf16>
    %36 = vector.extract_strided_slice %33 {offsets = [0, 0], sizes = [8, 8], strides = [1, 1]} : vector<8x32xbf16> to vector<8x8xbf16>
    %37 = vector.extract_strided_slice %34 {offsets = [0, 0], sizes = [8, 8], strides = [1, 1]} : vector<8x32xbf16> to vector<8x8xbf16>
    %38 = vector.extract_strided_slice %35 {offsets = [0, 0], sizes = [8, 8], strides = [1, 1]} : vector<8x32xbf16> to vector<8x8xbf16>
    "tpu.trace_start"() <{level = 10 : i32, message = "qd,kd->qk"}> : () -> ()
    %cst_28 = arith.constant dense<0.000000e+00> : vector<8x8xf32>
    %39 = tpu.matmul %36, %37, %cst_28 {dimension_numbers = #tpu.dot_dimension_numbers<[1], [1], [0], [0], [0, 0, 1, 0], [], []>} : vector<8x8xbf16>, vector<8x8xbf16>, vector<8x8xf32> -> vector<8x8xf32>
    "tpu.trace_stop"() : () -> ()
    %40 = arith.subf %39, %11 : vector<8x8xf32>
    %cst_29 = arith.constant dense<0xFF800000> : vector<8xf32>
    %41 = vector.multi_reduction <maximumf>, %40, %cst_29 [1] : vector<8x8xf32> to vector<8xf32>
    %42 = vector.shape_cast %41 : vector<8xf32> to vector<8x1xf32>
    %43 = vector.broadcast %42 : vector<8x1xf32> to vector<8x8xf32>
    %44 = arith.subf %40, %43 : vector<8x8xf32>
    %45 = math.exp %44 : vector<8x8xf32>
    %cst_30 = arith.constant dense<0.000000e+00> : vector<8xf32>
    %46 = vector.multi_reduction <add>, %45, %cst_30 [1] : vector<8x8xf32> to vector<8xf32>
    %47 = vector.shape_cast %46 : vector<8xf32> to vector<8x1xf32>
    %48 = tpu.reciprocal %47 {approx = true} : vector<8x1xf32> -> vector<8x1xf32>
    %49 = vector.broadcast %48 : vector<8x1xf32> to vector<8x8xf32>
    %50 = arith.mulf %45, %49 : vector<8x8xf32>
    %51 = arith.truncf %50 : vector<8x8xf32> to vector<8x8xbf16>
    %c0_31 = arith.constant 0 : index
    %c0_32 = arith.constant 0 : index
    %c0_33 = arith.constant 0 : index
    %c0_34 = arith.constant 0 : index
    %52 = vector.load %arg32[%c0_31, %c0_32, %c0_33, %c0_34] : memref<1x4x8x8xbf16, #tpu.memory_space<vmem>>, vector<1x1x8x8xbf16>
    %53 = vector.shape_cast %52 : vector<1x1x8x8xbf16> to vector<8x8xbf16>
    %54 = vector.shape_cast %51 : vector<8x8xbf16> to vector<1x1x8x8xbf16>
    tpu.vector_store %arg32[%c0_31, %c0_32, %c0_33, %c0_34], %54 {strides = array<i32>} : memref<1x4x8x8xbf16, #tpu.memory_space<vmem>>, vector<1x1x8x8xbf16>,
    %55 = arith.truncf %50 : vector<8x8xf32> to vector<8x8xbf16>
    %cst_35 = arith.constant dense<0.000000e+00> : vector<8x8xf32>
    %56 = tpu.matmul %55, %38, %cst_35 {dimension_numbers = #tpu.dot_dimension_numbers<[1], [0], [0], [1], [0, 0, 1, 1], [], []>} : vector<8x8xbf16>, vector<8x8xbf16>, vector<8x8xf32> -> vector<8x8xf32>
    %57 = arith.truncf %56 : vector<8x8xf32> to vector<8x8xbf16>
    %c0_36 = arith.constant 0 : index
    %c0_37 = arith.constant 0 : index
    %58 = vector.load %arg34[%c0_36, %c0_37] : memref<8x32xbf16, #tpu.memory_space<vmem>>, vector<8x8xbf16>
    tpu.vector_store %arg34[%c0_36, %c0_37], %57 {strides = array<i32>} : memref<8x32xbf16, #tpu.memory_space<vmem>>, vector<8x8xbf16>,
    %59 = vector.extract_strided_slice %33 {offsets = [0, 8], sizes = [8, 8], strides = [1, 1]} : vector<8x32xbf16> to vector<8x8xbf16>
    %60 = vector.extract_strided_slice %34 {offsets = [0, 8], sizes = [8, 8], strides = [1, 1]} : vector<8x32xbf16> to vector<8x8xbf16>
    %61 = vector.extract_strided_slice %35 {offsets = [0, 8], sizes = [8, 8], strides = [1, 1]} : vector<8x32xbf16> to vector<8x8xbf16>
    "tpu.trace_start"() <{level = 10 : i32, message = "qd,kd->qk"}> : () -> ()
    %cst_38 = arith.constant dense<0.000000e+00> : vector<8x8xf32>
    %62 = tpu.matmul %59, %60, %cst_38 {dimension_numbers = #tpu.dot_dimension_numbers<[1], [1], [0], [0], [0, 0, 1, 0], [], []>} : vector<8x8xbf16>, vector<8x8xbf16>, vector<8x8xf32> -> vector<8x8xf32>
    "tpu.trace_stop"() : () -> ()
    %63 = arith.subf %62, %11 : vector<8x8xf32>
    %cst_39 = arith.constant dense<0xFF800000> : vector<8xf32>
    %64 = vector.multi_reduction <maximumf>, %63, %cst_39 [1] : vector<8x8xf32> to vector<8xf32>
    %65 = vector.shape_cast %64 : vector<8xf32> to vector<8x1xf32>
    %66 = vector.broadcast %65 : vector<8x1xf32> to vector<8x8xf32>
    %67 = arith.subf %63, %66 : vector<8x8xf32>
    %68 = math.exp %67 : vector<8x8xf32>
    %cst_40 = arith.constant dense<0.000000e+00> : vector<8xf32>
    %69 = vector.multi_reduction <add>, %68, %cst_40 [1] : vector<8x8xf32> to vector<8xf32>
    %70 = vector.shape_cast %69 : vector<8xf32> to vector<8x1xf32>
    %71 = tpu.reciprocal %70 {approx = true} : vector<8x1xf32> -> vector<8x1xf32>
    %72 = vector.broadcast %71 : vector<8x1xf32> to vector<8x8xf32>
    %73 = arith.mulf %68, %72 : vector<8x8xf32>
    %74 = arith.truncf %73 : vector<8x8xf32> to vector<8x8xbf16>
    %c0_41 = arith.constant 0 : index
    %c1 = arith.constant 1 : index
    %c0_42 = arith.constant 0 : index
    %c0_43 = arith.constant 0 : index
    %75 = vector.load %arg32[%c0_41, %c1, %c0_42, %c0_43] : memref<1x4x8x8xbf16, #tpu.memory_space<vmem>>, vector<1x1x8x8xbf16>
    %76 = vector.shape_cast %75 : vector<1x1x8x8xbf16> to vector<8x8xbf16>
    %77 = vector.shape_cast %74 : vector<8x8xbf16> to vector<1x1x8x8xbf16>
    tpu.vector_store %arg32[%c0_41, %c1, %c0_42, %c0_43], %77 {strides = array<i32>} : memref<1x4x8x8xbf16, #tpu.memory_space<vmem>>, vector<1x1x8x8xbf16>,
    %78 = arith.truncf %73 : vector<8x8xf32> to vector<8x8xbf16>
    %cst_44 = arith.constant dense<0.000000e+00> : vector<8x8xf32>
    %79 = tpu.matmul %78, %61, %cst_44 {dimension_numbers = #tpu.dot_dimension_numbers<[1], [0], [0], [1], [0, 0, 1, 1], [], []>} : vector<8x8xbf16>, vector<8x8xbf16>, vector<8x8xf32> -> vector<8x8xf32>
    %80 = arith.truncf %79 : vector<8x8xf32> to vector<8x8xbf16>
    %c0_45 = arith.constant 0 : index
    %c8 = arith.constant 8 : index
    %81 = vector.load %arg34[%c0_45, %c8] : memref<8x32xbf16, #tpu.memory_space<vmem>>, vector<8x8xbf16>
    tpu.vector_store %arg34[%c0_45, %c8], %80 {strides = array<i32>} : memref<8x32xbf16, #tpu.memory_space<vmem>>, vector<8x8xbf16>,
    %82 = vector.extract_strided_slice %33 {offsets = [0, 16], sizes = [8, 8], strides = [1, 1]} : vector<8x32xbf16> to vector<8x8xbf16>
    %83 = vector.extract_strided_slice %34 {offsets = [0, 16], sizes = [8, 8], strides = [1, 1]} : vector<8x32xbf16> to vector<8x8xbf16>
    %84 = vector.extract_strided_slice %35 {offsets = [0, 16], sizes = [8, 8], strides = [1, 1]} : vector<8x32xbf16> to vector<8x8xbf16>
    "tpu.trace_start"() <{level = 10 : i32, message = "qd,kd->qk"}> : () -> ()
    %cst_46 = arith.constant dense<0.000000e+00> : vector<8x8xf32>
    %85 = tpu.matmul %82, %83, %cst_46 {dimension_numbers = #tpu.dot_dimension_numbers<[1], [1], [0], [0], [0, 0, 1, 0], [], []>} : vector<8x8xbf16>, vector<8x8xbf16>, vector<8x8xf32> -> vector<8x8xf32>
    "tpu.trace_stop"() : () -> ()
    %86 = arith.subf %85, %11 : vector<8x8xf32>
    %cst_47 = arith.constant dense<0xFF800000> : vector<8xf32>
    %87 = vector.multi_reduction <maximumf>, %86, %cst_47 [1] : vector<8x8xf32> to vector<8xf32>
    %88 = vector.shape_cast %87 : vector<8xf32> to vector<8x1xf32>
    %89 = vector.broadcast %88 : vector<8x1xf32> to vector<8x8xf32>
    %90 = arith.subf %86, %89 : vector<8x8xf32>
    %91 = math.exp %90 : vector<8x8xf32>
    %cst_48 = arith.constant dense<0.000000e+00> : vector<8xf32>
    %92 = vector.multi_reduction <add>, %91, %cst_48 [1] : vector<8x8xf32> to vector<8xf32>
    %93 = vector.shape_cast %92 : vector<8xf32> to vector<8x1xf32>
    %94 = tpu.reciprocal %93 {approx = true} : vector<8x1xf32> -> vector<8x1xf32>
    %95 = vector.broadcast %94 : vector<8x1xf32> to vector<8x8xf32>
    %96 = arith.mulf %91, %95 : vector<8x8xf32>
    %97 = arith.truncf %96 : vector<8x8xf32> to vector<8x8xbf16>
    %c0_49 = arith.constant 0 : index
    %c2 = arith.constant 2 : index
    %c0_50 = arith.constant 0 : index
    %c0_51 = arith.constant 0 : index
    %98 = vector.load %arg32[%c0_49, %c2, %c0_50, %c0_51] : memref<1x4x8x8xbf16, #tpu.memory_space<vmem>>, vector<1x1x8x8xbf16>
    %99 = vector.shape_cast %98 : vector<1x1x8x8xbf16> to vector<8x8xbf16>
    %100 = vector.shape_cast %97 : vector<8x8xbf16> to vector<1x1x8x8xbf16>
    tpu.vector_store %arg32[%c0_49, %c2, %c0_50, %c0_51], %100 {strides = array<i32>} : memref<1x4x8x8xbf16, #tpu.memory_space<vmem>>, vector<1x1x8x8xbf16>,
    %101 = arith.truncf %96 : vector<8x8xf32> to vector<8x8xbf16>
    %cst_52 = arith.constant dense<0.000000e+00> : vector<8x8xf32>
    %102 = tpu.matmul %101, %84, %cst_52 {dimension_numbers = #tpu.dot_dimension_numbers<[1], [0], [0], [1], [0, 0, 1, 1], [], []>} : vector<8x8xbf16>, vector<8x8xbf16>, vector<8x8xf32> -> vector<8x8xf32>
    %103 = arith.truncf %102 : vector<8x8xf32> to vector<8x8xbf16>
    %c0_53 = arith.constant 0 : index
    %c16 = arith.constant 16 : index
    %104 = vector.load %arg34[%c0_53, %c16] : memref<8x32xbf16, #tpu.memory_space<vmem>>, vector<8x8xbf16>
    tpu.vector_store %arg34[%c0_53, %c16], %103 {strides = array<i32>} : memref<8x32xbf16, #tpu.memory_space<vmem>>, vector<8x8xbf16>,
    %105 = vector.extract_strided_slice %33 {offsets = [0, 24], sizes = [8, 8], strides = [1, 1]} : vector<8x32xbf16> to vector<8x8xbf16>
    %106 = vector.extract_strided_slice %34 {offsets = [0, 24], sizes = [8, 8], strides = [1, 1]} : vector<8x32xbf16> to vector<8x8xbf16>
    %107 = vector.extract_strided_slice %35 {offsets = [0, 24], sizes = [8, 8], strides = [1, 1]} : vector<8x32xbf16> to vector<8x8xbf16>
    "tpu.trace_start"() <{level = 10 : i32, message = "qd,kd->qk"}> : () -> ()
    %cst_54 = arith.constant dense<0.000000e+00> : vector<8x8xf32>
    %108 = tpu.matmul %105, %106, %cst_54 {dimension_numbers = #tpu.dot_dimension_numbers<[1], [1], [0], [0], [0, 0, 1, 0], [], []>} : vector<8x8xbf16>, vector<8x8xbf16>, vector<8x8xf32> -> vector<8x8xf32>
    "tpu.trace_stop"() : () -> ()
    %109 = arith.subf %108, %11 : vector<8x8xf32>
    %cst_55 = arith.constant dense<0xFF800000> : vector<8xf32>
    %110 = vector.multi_reduction <maximumf>, %109, %cst_55 [1] : vector<8x8xf32> to vector<8xf32>
    %111 = vector.shape_cast %110 : vector<8xf32> to vector<8x1xf32>
    %112 = vector.broadcast %111 : vector<8x1xf32> to vector<8x8xf32>
    %113 = arith.subf %109, %112 : vector<8x8xf32>
    %114 = math.exp %113 : vector<8x8xf32>
    %cst_56 = arith.constant dense<0.000000e+00> : vector<8xf32>
    %115 = vector.multi_reduction <add>, %114, %cst_56 [1] : vector<8x8xf32> to vector<8xf32>
    %116 = vector.shape_cast %115 : vector<8xf32> to vector<8x1xf32>
    %117 = tpu.reciprocal %116 {approx = true} : vector<8x1xf32> -> vector<8x1xf32>
    %118 = vector.broadcast %117 : vector<8x1xf32> to vector<8x8xf32>
    %119 = arith.mulf %114, %118 : vector<8x8xf32>
    %120 = arith.truncf %119 : vector<8x8xf32> to vector<8x8xbf16>
    %c0_57 = arith.constant 0 : index
    %c3 = arith.constant 3 : index
    %c0_58 = arith.constant 0 : index
    %c0_59 = arith.constant 0 : index
    %121 = vector.load %arg32[%c0_57, %c3, %c0_58, %c0_59] : memref<1x4x8x8xbf16, #tpu.memory_space<vmem>>, vector<1x1x8x8xbf16>
    %122 = vector.shape_cast %121 : vector<1x1x8x8xbf16> to vector<8x8xbf16>
    %123 = vector.shape_cast %120 : vector<8x8xbf16> to vector<1x1x8x8xbf16>
    tpu.vector_store %arg32[%c0_57, %c3, %c0_58, %c0_59], %123 {strides = array<i32>} : memref<1x4x8x8xbf16, #tpu.memory_space<vmem>>, vector<1x1x8x8xbf16>,
    %124 = arith.truncf %119 : vector<8x8xf32> to vector<8x8xbf16>
    %cst_60 = arith.constant dense<0.000000e+00> : vector<8x8xf32>
    %125 = tpu.matmul %124, %107, %cst_60 {dimension_numbers = #tpu.dot_dimension_numbers<[1], [0], [0], [1], [0, 0, 1, 1], [], []>} : vector<8x8xbf16>, vector<8x8xbf16>, vector<8x8xf32> -> vector<8x8xf32>
    %126 = arith.truncf %125 : vector<8x8xf32> to vector<8x8xbf16>
    %c0_61 = arith.constant 0 : index
    %c24 = arith.constant 24 : index
    %127 = vector.load %arg34[%c0_61, %c24] : memref<8x32xbf16, #tpu.memory_space<vmem>>, vector<8x8xbf16>
    tpu.vector_store %arg34[%c0_61, %c24], %126 {strides = array<i32>} : memref<8x32xbf16, #tpu.memory_space<vmem>>, vector<8x8xbf16>,
    %c0_62 = arith.constant 0 : index
    %c0_63 = arith.constant 0 : index
    %128 = vector.load %arg34[%c0_62, %c0_63] : memref<8x32xbf16, #tpu.memory_space<vmem>>, vector<8x32xbf16>
    %c0_64 = arith.constant 0 : index
    %c0_65 = arith.constant 0 : index
    %129 = vector.load %arg11[%c0_64, %c0_65] : memref<32x32xbf16, #tpu.memory_space<vmem>>, vector<32x32xbf16>
    %cst_66 = arith.constant dense<0.000000e+00> : vector<8x32xf32>
    %130 = tpu.matmul %128, %129, %cst_66 {dimension_numbers = #tpu.dot_dimension_numbers<[1], [0], [0], [1], [0, 0, 1, 1], [], []>} : vector<8x32xbf16>, vector<32x32xbf16>, vector<8x32xf32> -> vector<8x32xf32>
    %c0_67 = arith.constant 0 : index
    %c0_68 = arith.constant 0 : index
    %131 = vector.load %arg12[%c0_67, %c0_68] : memref<1x32xf32, #tpu.memory_space<vmem>>, vector<1x32xf32>
    %132 = vector.broadcast %131 : vector<1x32xf32> to vector<8x32xf32>
    %133 = arith.addf %130, %132 : vector<8x32xf32>
    %134 = arith.addf %133, %1 : vector<8x32xf32>
    %c0_69 = arith.constant 0 : index
    %c0_70 = arith.constant 0 : index
    %135 = vector.load %arg13[%c0_69, %c0_70] : memref<1x32xf32, #tpu.memory_space<vmem>>, vector<1x32xf32>
    %c0_71 = arith.constant 0 : index
    %c0_72 = arith.constant 0 : index
    %136 = vector.load %arg14[%c0_71, %c0_72] : memref<1x32xf32, #tpu.memory_space<vmem>>, vector<1x32xf32>
    %cst_73 = arith.constant dense<0.000000e+00> : vector<8xf32>
    %137 = vector.multi_reduction <add>, %134, %cst_73 [1] : vector<8x32xf32> to vector<8xf32>
    %138 = vector.shape_cast %137 : vector<8xf32> to vector<8x1xf32>
    %cst_74 = arith.constant 3.200000e+01 : f32
    %139 = vector.broadcast %cst_74 : f32 to vector<8x1xf32>
    %140 = arith.divf %138, %139 : vector<8x1xf32>
    %141 = vector.broadcast %140 : vector<8x1xf32> to vector<8x32xf32>
    %142 = arith.subf %134, %141 : vector<8x32xf32>
    %143 = arith.mulf %142, %142 : vector<8x32xf32>
    %cst_75 = arith.constant dense<0.000000e+00> : vector<8xf32>
    %144 = vector.multi_reduction <add>, %143, %cst_75 [1] : vector<8x32xf32> to vector<8xf32>
    %145 = vector.shape_cast %144 : vector<8xf32> to vector<8x1xf32>
    %cst_76 = arith.constant 3.200000e+01 : f32
    %146 = vector.broadcast %cst_76 : f32 to vector<8x1xf32>
    %147 = arith.divf %145, %146 : vector<8x1xf32>
    %148 = vector.broadcast %140 : vector<8x1xf32> to vector<8x32xf32>
    %149 = arith.subf %134, %148 : vector<8x32xf32>
    %cst_77 = arith.constant 9.99999974E-6 : f32
    %150 = vector.broadcast %cst_77 : f32 to vector<8x1xf32>
    %151 = arith.addf %147, %150 : vector<8x1xf32>
    %152 = math.rsqrt %151 : vector<8x1xf32>
    %153 = vector.broadcast %152 : vector<8x1xf32> to vector<8x32xf32>
    %154 = arith.mulf %149, %153 : vector<8x32xf32>
    %155 = vector.broadcast %135 : vector<1x32xf32> to vector<8x32xf32>
    %156 = arith.mulf %154, %155 : vector<8x32xf32>
    %157 = vector.broadcast %136 : vector<1x32xf32> to vector<8x32xf32>
    %158 = arith.addf %156, %157 : vector<8x32xf32>
    %159 = vector.broadcast %5 : vector<8x1xf32> to vector<8x32xf32>
    %160 = arith.mulf %158, %159 : vector<8x32xf32>
    %161 = arith.truncf %160 : vector<8x32xf32> to vector<8x32xbf16>
    %162 = arith.truncf %3 : vector<8x32xf32> to vector<8x32xbf16>
    %c0_78 = arith.constant 0 : index
    %c0_79 = arith.constant 0 : index
    %163 = vector.load %arg15[%c0_78, %c0_79] : memref<32x32xbf16, #tpu.memory_space<vmem>>, vector<32x32xbf16>
    %cst_80 = arith.constant dense<0.000000e+00> : vector<8x32xf32>
    %164 = tpu.matmul %161, %163, %cst_80 {dimension_numbers = #tpu.dot_dimension_numbers<[1], [0], [0], [1], [0, 0, 1, 1], [], []>} : vector<8x32xbf16>, vector<32x32xbf16>, vector<8x32xf32> -> vector<8x32xf32>
    %c0_81 = arith.constant 0 : index
    %c0_82 = arith.constant 0 : index
    %165 = vector.load %arg16[%c0_81, %c0_82] : memref<1x32xf32, #tpu.memory_space<vmem>>, vector<1x32xf32>
    %166 = vector.broadcast %165 : vector<1x32xf32> to vector<8x32xf32>
    %167 = arith.addf %164, %166 : vector<8x32xf32>
    %c0_83 = arith.constant 0 : index
    %c0_84 = arith.constant 0 : index
    %168 = vector.load %arg17[%c0_83, %c0_84] : memref<32x32xbf16, #tpu.memory_space<vmem>>, vector<32x32xbf16>
    %cst_85 = arith.constant dense<0.000000e+00> : vector<8x32xf32>
    %169 = tpu.matmul %162, %168, %cst_85 {dimension_numbers = #tpu.dot_dimension_numbers<[1], [0], [0], [1], [0, 0, 1, 1], [], []>} : vector<8x32xbf16>, vector<32x32xbf16>, vector<8x32xf32> -> vector<8x32xf32>
    %c0_86 = arith.constant 0 : index
    %c0_87 = arith.constant 0 : index
    %170 = vector.load %arg18[%c0_86, %c0_87] : memref<1x32xf32, #tpu.memory_space<vmem>>, vector<1x32xf32>
    %171 = vector.broadcast %170 : vector<1x32xf32> to vector<8x32xf32>
    %172 = arith.addf %169, %171 : vector<8x32xf32>
    %c0_88 = arith.constant 0 : index
    %c0_89 = arith.constant 0 : index
    %173 = vector.load %arg19[%c0_88, %c0_89] : memref<32x32xbf16, #tpu.memory_space<vmem>>, vector<32x32xbf16>
    %cst_90 = arith.constant dense<0.000000e+00> : vector<8x32xf32>
    %174 = tpu.matmul %162, %173, %cst_90 {dimension_numbers = #tpu.dot_dimension_numbers<[1], [0], [0], [1], [0, 0, 1, 1], [], []>} : vector<8x32xbf16>, vector<32x32xbf16>, vector<8x32xf32> -> vector<8x32xf32>
    %c0_91 = arith.constant 0 : index
    %c0_92 = arith.constant 0 : index
    %175 = vector.load %arg20[%c0_91, %c0_92] : memref<1x32xf32, #tpu.memory_space<vmem>>, vector<1x32xf32>
    %176 = vector.broadcast %175 : vector<1x32xf32> to vector<8x32xf32>
    %177 = arith.addf %174, %176 : vector<8x32xf32>
    %178 = arith.truncf %167 : vector<8x32xf32> to vector<8x32xbf16>
    %179 = arith.truncf %172 : vector<8x32xf32> to vector<8x32xbf16>
    %180 = arith.truncf %177 : vector<8x32xf32> to vector<8x32xbf16>
    %181 = vector.extract_strided_slice %178 {offsets = [0, 0], sizes = [8, 8], strides = [1, 1]} : vector<8x32xbf16> to vector<8x8xbf16>
    %182 = vector.extract_strided_slice %179 {offsets = [0, 0], sizes = [8, 8], strides = [1, 1]} : vector<8x32xbf16> to vector<8x8xbf16>
    %183 = vector.extract_strided_slice %180 {offsets = [0, 0], sizes = [8, 8], strides = [1, 1]} : vector<8x32xbf16> to vector<8x8xbf16>
    "tpu.trace_start"() <{level = 10 : i32, message = "qd,kd->qk"}> : () -> ()
    %cst_93 = arith.constant dense<0.000000e+00> : vector<8x8xf32>
    %184 = tpu.matmul %181, %182, %cst_93 {dimension_numbers = #tpu.dot_dimension_numbers<[1], [1], [0], [0], [0, 0, 1, 0], [], []>} : vector<8x8xbf16>, vector<8x8xbf16>, vector<8x8xf32> -> vector<8x8xf32>
    "tpu.trace_stop"() : () -> ()
    %185 = arith.subf %184, %16 : vector<8x8xf32>
    %cst_94 = arith.constant dense<0xFF800000> : vector<8xf32>
    %186 = vector.multi_reduction <maximumf>, %185, %cst_94 [1] : vector<8x8xf32> to vector<8xf32>
    %187 = vector.shape_cast %186 : vector<8xf32> to vector<8x1xf32>
    %188 = vector.broadcast %187 : vector<8x1xf32> to vector<8x8xf32>
    %189 = arith.subf %185, %188 : vector<8x8xf32>
    %190 = math.exp %189 : vector<8x8xf32>
    %cst_95 = arith.constant dense<0.000000e+00> : vector<8xf32>
    %191 = vector.multi_reduction <add>, %190, %cst_95 [1] : vector<8x8xf32> to vector<8xf32>
    %192 = vector.shape_cast %191 : vector<8xf32> to vector<8x1xf32>
    %193 = tpu.reciprocal %192 {approx = true} : vector<8x1xf32> -> vector<8x1xf32>
    %194 = vector.broadcast %193 : vector<8x1xf32> to vector<8x8xf32>
    %195 = arith.mulf %190, %194 : vector<8x8xf32>
    %196 = arith.truncf %195 : vector<8x8xf32> to vector<8x8xbf16>
    %c0_96 = arith.constant 0 : index
    %c0_97 = arith.constant 0 : index
    %c0_98 = arith.constant 0 : index
    %c0_99 = arith.constant 0 : index
    %197 = vector.load %arg33[%c0_96, %c0_97, %c0_98, %c0_99] : memref<1x4x8x8xbf16, #tpu.memory_space<vmem>>, vector<1x1x8x8xbf16>
    %198 = vector.shape_cast %197 : vector<1x1x8x8xbf16> to vector<8x8xbf16>
    %199 = vector.shape_cast %196 : vector<8x8xbf16> to vector<1x1x8x8xbf16>
    tpu.vector_store %arg33[%c0_96, %c0_97, %c0_98, %c0_99], %199 {strides = array<i32>} : memref<1x4x8x8xbf16, #tpu.memory_space<vmem>>, vector<1x1x8x8xbf16>,
    %200 = arith.truncf %195 : vector<8x8xf32> to vector<8x8xbf16>
    %cst_100 = arith.constant dense<0.000000e+00> : vector<8x8xf32>
    %201 = tpu.matmul %200, %183, %cst_100 {dimension_numbers = #tpu.dot_dimension_numbers<[1], [0], [0], [1], [0, 0, 1, 1], [], []>} : vector<8x8xbf16>, vector<8x8xbf16>, vector<8x8xf32> -> vector<8x8xf32>
    %202 = arith.truncf %201 : vector<8x8xf32> to vector<8x8xbf16>
    %c0_101 = arith.constant 0 : index
    %c0_102 = arith.constant 0 : index
    %203 = vector.load %arg34[%c0_101, %c0_102] : memref<8x32xbf16, #tpu.memory_space<vmem>>, vector<8x8xbf16>
    tpu.vector_store %arg34[%c0_101, %c0_102], %202 {strides = array<i32>} : memref<8x32xbf16, #tpu.memory_space<vmem>>, vector<8x8xbf16>,
    %204 = vector.extract_strided_slice %178 {offsets = [0, 8], sizes = [8, 8], strides = [1, 1]} : vector<8x32xbf16> to vector<8x8xbf16>
    %205 = vector.extract_strided_slice %179 {offsets = [0, 8], sizes = [8, 8], strides = [1, 1]} : vector<8x32xbf16> to vector<8x8xbf16>
    %206 = vector.extract_strided_slice %180 {offsets = [0, 8], sizes = [8, 8], strides = [1, 1]} : vector<8x32xbf16> to vector<8x8xbf16>
    "tpu.trace_start"() <{level = 10 : i32, message = "qd,kd->qk"}> : () -> ()
    %cst_103 = arith.constant dense<0.000000e+00> : vector<8x8xf32>
    %207 = tpu.matmul %204, %205, %cst_103 {dimension_numbers = #tpu.dot_dimension_numbers<[1], [1], [0], [0], [0, 0, 1, 0], [], []>} : vector<8x8xbf16>, vector<8x8xbf16>, vector<8x8xf32> -> vector<8x8xf32>
    "tpu.trace_stop"() : () -> ()
    %208 = arith.subf %207, %16 : vector<8x8xf32>
    %cst_104 = arith.constant dense<0xFF800000> : vector<8xf32>
    %209 = vector.multi_reduction <maximumf>, %208, %cst_104 [1] : vector<8x8xf32> to vector<8xf32>
    %210 = vector.shape_cast %209 : vector<8xf32> to vector<8x1xf32>
    %211 = vector.broadcast %210 : vector<8x1xf32> to vector<8x8xf32>
    %212 = arith.subf %208, %211 : vector<8x8xf32>
    %213 = math.exp %212 : vector<8x8xf32>
    %cst_105 = arith.constant dense<0.000000e+00> : vector<8xf32>
    %214 = vector.multi_reduction <add>, %213, %cst_105 [1] : vector<8x8xf32> to vector<8xf32>
    %215 = vector.shape_cast %214 : vector<8xf32> to vector<8x1xf32>
    %216 = tpu.reciprocal %215 {approx = true} : vector<8x1xf32> -> vector<8x1xf32>
    %217 = vector.broadcast %216 : vector<8x1xf32> to vector<8x8xf32>
    %218 = arith.mulf %213, %217 : vector<8x8xf32>
    %219 = arith.truncf %218 : vector<8x8xf32> to vector<8x8xbf16>
    %c0_106 = arith.constant 0 : index
    %c1_107 = arith.constant 1 : index
    %c0_108 = arith.constant 0 : index
    %c0_109 = arith.constant 0 : index
    %220 = vector.load %arg33[%c0_106, %c1_107, %c0_108, %c0_109] : memref<1x4x8x8xbf16, #tpu.memory_space<vmem>>, vector<1x1x8x8xbf16>
    %221 = vector.shape_cast %220 : vector<1x1x8x8xbf16> to vector<8x8xbf16>
    %222 = vector.shape_cast %219 : vector<8x8xbf16> to vector<1x1x8x8xbf16>
    tpu.vector_store %arg33[%c0_106, %c1_107, %c0_108, %c0_109], %222 {strides = array<i32>} : memref<1x4x8x8xbf16, #tpu.memory_space<vmem>>, vector<1x1x8x8xbf16>,
    %223 = arith.truncf %218 : vector<8x8xf32> to vector<8x8xbf16>
    %cst_110 = arith.constant dense<0.000000e+00> : vector<8x8xf32>
    %224 = tpu.matmul %223, %206, %cst_110 {dimension_numbers = #tpu.dot_dimension_numbers<[1], [0], [0], [1], [0, 0, 1, 1], [], []>} : vector<8x8xbf16>, vector<8x8xbf16>, vector<8x8xf32> -> vector<8x8xf32>
    %225 = arith.truncf %224 : vector<8x8xf32> to vector<8x8xbf16>
    %c0_111 = arith.constant 0 : index
    %c8_112 = arith.constant 8 : index
    %226 = vector.load %arg34[%c0_111, %c8_112] : memref<8x32xbf16, #tpu.memory_space<vmem>>, vector<8x8xbf16>
    tpu.vector_store %arg34[%c0_111, %c8_112], %225 {strides = array<i32>} : memref<8x32xbf16, #tpu.memory_space<vmem>>, vector<8x8xbf16>,
    %227 = vector.extract_strided_slice %178 {offsets = [0, 16], sizes = [8, 8], strides = [1, 1]} : vector<8x32xbf16> to vector<8x8xbf16>
    %228 = vector.extract_strided_slice %179 {offsets = [0, 16], sizes = [8, 8], strides = [1, 1]} : vector<8x32xbf16> to vector<8x8xbf16>
    %229 = vector.extract_strided_slice %180 {offsets = [0, 16], sizes = [8, 8], strides = [1, 1]} : vector<8x32xbf16> to vector<8x8xbf16>
    "tpu.trace_start"() <{level = 10 : i32, message = "qd,kd->qk"}> : () -> ()
    %cst_113 = arith.constant dense<0.000000e+00> : vector<8x8xf32>
    %230 = tpu.matmul %227, %228, %cst_113 {dimension_numbers = #tpu.dot_dimension_numbers<[1], [1], [0], [0], [0, 0, 1, 0], [], []>} : vector<8x8xbf16>, vector<8x8xbf16>, vector<8x8xf32> -> vector<8x8xf32>
    "tpu.trace_stop"() : () -> ()
    %231 = arith.subf %230, %16 : vector<8x8xf32>
    %cst_114 = arith.constant dense<0xFF800000> : vector<8xf32>
    %232 = vector.multi_reduction <maximumf>, %231, %cst_114 [1] : vector<8x8xf32> to vector<8xf32>
    %233 = vector.shape_cast %232 : vector<8xf32> to vector<8x1xf32>
    %234 = vector.broadcast %233 : vector<8x1xf32> to vector<8x8xf32>
    %235 = arith.subf %231, %234 : vector<8x8xf32>
    %236 = math.exp %235 : vector<8x8xf32>
    %cst_115 = arith.constant dense<0.000000e+00> : vector<8xf32>
    %237 = vector.multi_reduction <add>, %236, %cst_115 [1] : vector<8x8xf32> to vector<8xf32>
    %238 = vector.shape_cast %237 : vector<8xf32> to vector<8x1xf32>
    %239 = tpu.reciprocal %238 {approx = true} : vector<8x1xf32> -> vector<8x1xf32>
    %240 = vector.broadcast %239 : vector<8x1xf32> to vector<8x8xf32>
    %241 = arith.mulf %236, %240 : vector<8x8xf32>
    %242 = arith.truncf %241 : vector<8x8xf32> to vector<8x8xbf16>
    %c0_116 = arith.constant 0 : index
    %c2_117 = arith.constant 2 : index
    %c0_118 = arith.constant 0 : index
    %c0_119 = arith.constant 0 : index
    %243 = vector.load %arg33[%c0_116, %c2_117, %c0_118, %c0_119] : memref<1x4x8x8xbf16, #tpu.memory_space<vmem>>, vector<1x1x8x8xbf16>
    %244 = vector.shape_cast %243 : vector<1x1x8x8xbf16> to vector<8x8xbf16>
    %245 = vector.shape_cast %242 : vector<8x8xbf16> to vector<1x1x8x8xbf16>
    tpu.vector_store %arg33[%c0_116, %c2_117, %c0_118, %c0_119], %245 {strides = array<i32>} : memref<1x4x8x8xbf16, #tpu.memory_space<vmem>>, vector<1x1x8x8xbf16>,
    %246 = arith.truncf %241 : vector<8x8xf32> to vector<8x8xbf16>
    %cst_120 = arith.constant dense<0.000000e+00> : vector<8x8xf32>
    %247 = tpu.matmul %246, %229, %cst_120 {dimension_numbers = #tpu.dot_dimension_numbers<[1], [0], [0], [1], [0, 0, 1, 1], [], []>} : vector<8x8xbf16>, vector<8x8xbf16>, vector<8x8xf32> -> vector<8x8xf32>
    %248 = arith.truncf %247 : vector<8x8xf32> to vector<8x8xbf16>
    %c0_121 = arith.constant 0 : index
    %c16_122 = arith.constant 16 : index
    %249 = vector.load %arg34[%c0_121, %c16_122] : memref<8x32xbf16, #tpu.memory_space<vmem>>, vector<8x8xbf16>
    tpu.vector_store %arg34[%c0_121, %c16_122], %248 {strides = array<i32>} : memref<8x32xbf16, #tpu.memory_space<vmem>>, vector<8x8xbf16>,
    %250 = vector.extract_strided_slice %178 {offsets = [0, 24], sizes = [8, 8], strides = [1, 1]} : vector<8x32xbf16> to vector<8x8xbf16>
    %251 = vector.extract_strided_slice %179 {offsets = [0, 24], sizes = [8, 8], strides = [1, 1]} : vector<8x32xbf16> to vector<8x8xbf16>
    %252 = vector.extract_strided_slice %180 {offsets = [0, 24], sizes = [8, 8], strides = [1, 1]} : vector<8x32xbf16> to vector<8x8xbf16>
    "tpu.trace_start"() <{level = 10 : i32, message = "qd,kd->qk"}> : () -> ()
    %cst_123 = arith.constant dense<0.000000e+00> : vector<8x8xf32>
    %253 = tpu.matmul %250, %251, %cst_123 {dimension_numbers = #tpu.dot_dimension_numbers<[1], [1], [0], [0], [0, 0, 1, 0], [], []>} : vector<8x8xbf16>, vector<8x8xbf16>, vector<8x8xf32> -> vector<8x8xf32>
    "tpu.trace_stop"() : () -> ()
    %254 = arith.subf %253, %16 : vector<8x8xf32>
    %cst_124 = arith.constant dense<0xFF800000> : vector<8xf32>
    %255 = vector.multi_reduction <maximumf>, %254, %cst_124 [1] : vector<8x8xf32> to vector<8xf32>
    %256 = vector.shape_cast %255 : vector<8xf32> to vector<8x1xf32>
    %257 = vector.broadcast %256 : vector<8x1xf32> to vector<8x8xf32>
    %258 = arith.subf %254, %257 : vector<8x8xf32>
    %259 = math.exp %258 : vector<8x8xf32>
    %cst_125 = arith.constant dense<0.000000e+00> : vector<8xf32>
    %260 = vector.multi_reduction <add>, %259, %cst_125 [1] : vector<8x8xf32> to vector<8xf32>
    %261 = vector.shape_cast %260 : vector<8xf32> to vector<8x1xf32>
    %262 = tpu.reciprocal %261 {approx = true} : vector<8x1xf32> -> vector<8x1xf32>
    %263 = vector.broadcast %262 : vector<8x1xf32> to vector<8x8xf32>
    %264 = arith.mulf %259, %263 : vector<8x8xf32>
    %265 = arith.truncf %264 : vector<8x8xf32> to vector<8x8xbf16>
    %c0_126 = arith.constant 0 : index
    %c3_127 = arith.constant 3 : index
    %c0_128 = arith.constant 0 : index
    %c0_129 = arith.constant 0 : index
    %266 = vector.load %arg33[%c0_126, %c3_127, %c0_128, %c0_129] : memref<1x4x8x8xbf16, #tpu.memory_space<vmem>>, vector<1x1x8x8xbf16>
    %267 = vector.shape_cast %266 : vector<1x1x8x8xbf16> to vector<8x8xbf16>
    %268 = vector.shape_cast %265 : vector<8x8xbf16> to vector<1x1x8x8xbf16>
    tpu.vector_store %arg33[%c0_126, %c3_127, %c0_128, %c0_129], %268 {strides = array<i32>} : memref<1x4x8x8xbf16, #tpu.memory_space<vmem>>, vector<1x1x8x8xbf16>,
    %269 = arith.truncf %264 : vector<8x8xf32> to vector<8x8xbf16>
    %cst_130 = arith.constant dense<0.000000e+00> : vector<8x8xf32>
    %270 = tpu.matmul %269, %252, %cst_130 {dimension_numbers = #tpu.dot_dimension_numbers<[1], [0], [0], [1], [0, 0, 1, 1], [], []>} : vector<8x8xbf16>, vector<8x8xbf16>, vector<8x8xf32> -> vector<8x8xf32>
    %271 = arith.truncf %270 : vector<8x8xf32> to vector<8x8xbf16>
    %c0_131 = arith.constant 0 : index
    %c24_132 = arith.constant 24 : index
    %272 = vector.load %arg34[%c0_131, %c24_132] : memref<8x32xbf16, #tpu.memory_space<vmem>>, vector<8x8xbf16>
    tpu.vector_store %arg34[%c0_131, %c24_132], %271 {strides = array<i32>} : memref<8x32xbf16, #tpu.memory_space<vmem>>, vector<8x8xbf16>,
    %c0_133 = arith.constant 0 : index
    %c0_134 = arith.constant 0 : index
    %273 = vector.load %arg34[%c0_133, %c0_134] : memref<8x32xbf16, #tpu.memory_space<vmem>>, vector<8x32xbf16>
    %c0_135 = arith.constant 0 : index
    %c0_136 = arith.constant 0 : index
    %274 = vector.load %arg21[%c0_135, %c0_136] : memref<32x32xbf16, #tpu.memory_space<vmem>>, vector<32x32xbf16>
    %cst_137 = arith.constant dense<0.000000e+00> : vector<8x32xf32>
    %275 = tpu.matmul %273, %274, %cst_137 {dimension_numbers = #tpu.dot_dimension_numbers<[1], [0], [0], [1], [0, 0, 1, 1], [], []>} : vector<8x32xbf16>, vector<32x32xbf16>, vector<8x32xf32> -> vector<8x32xf32>
    %c0_138 = arith.constant 0 : index
    %c0_139 = arith.constant 0 : index
    %276 = vector.load %arg22[%c0_138, %c0_139] : memref<1x32xf32, #tpu.memory_space<vmem>>, vector<1x32xf32>
    %277 = vector.broadcast %276 : vector<1x32xf32> to vector<8x32xf32>
    %278 = arith.addf %275, %277 : vector<8x32xf32>
    %279 = arith.addf %278, %160 : vector<8x32xf32>
    %c0_140 = arith.constant 0 : index
    %c0_141 = arith.constant 0 : index
    %280 = vector.load %arg23[%c0_140, %c0_141] : memref<1x32xf32, #tpu.memory_space<vmem>>, vector<1x32xf32>
    %c0_142 = arith.constant 0 : index
    %c0_143 = arith.constant 0 : index
    %281 = vector.load %arg24[%c0_142, %c0_143] : memref<1x32xf32, #tpu.memory_space<vmem>>, vector<1x32xf32>
    %cst_144 = arith.constant dense<0.000000e+00> : vector<8xf32>
    %282 = vector.multi_reduction <add>, %279, %cst_144 [1] : vector<8x32xf32> to vector<8xf32>
    %283 = vector.shape_cast %282 : vector<8xf32> to vector<8x1xf32>
    %cst_145 = arith.constant 3.200000e+01 : f32
    %284 = vector.broadcast %cst_145 : f32 to vector<8x1xf32>
    %285 = arith.divf %283, %284 : vector<8x1xf32>
    %286 = vector.broadcast %285 : vector<8x1xf32> to vector<8x32xf32>
    %287 = arith.subf %279, %286 : vector<8x32xf32>
    %288 = arith.mulf %287, %287 : vector<8x32xf32>
    %cst_146 = arith.constant dense<0.000000e+00> : vector<8xf32>
    %289 = vector.multi_reduction <add>, %288, %cst_146 [1] : vector<8x32xf32> to vector<8xf32>
    %290 = vector.shape_cast %289 : vector<8xf32> to vector<8x1xf32>
    %cst_147 = arith.constant 3.200000e+01 : f32
    %291 = vector.broadcast %cst_147 : f32 to vector<8x1xf32>
    %292 = arith.divf %290, %291 : vector<8x1xf32>
    %293 = vector.broadcast %285 : vector<8x1xf32> to vector<8x32xf32>
    %294 = arith.subf %279, %293 : vector<8x32xf32>
    %cst_148 = arith.constant 9.99999974E-6 : f32
    %295 = vector.broadcast %cst_148 : f32 to vector<8x1xf32>
    %296 = arith.addf %292, %295 : vector<8x1xf32>
    %297 = math.rsqrt %296 : vector<8x1xf32>
    %298 = vector.broadcast %297 : vector<8x1xf32> to vector<8x32xf32>
    %299 = arith.mulf %294, %298 : vector<8x32xf32>
    %300 = vector.broadcast %280 : vector<1x32xf32> to vector<8x32xf32>
    %301 = arith.mulf %299, %300 : vector<8x32xf32>
    %302 = vector.broadcast %281 : vector<1x32xf32> to vector<8x32xf32>
    %303 = arith.addf %301, %302 : vector<8x32xf32>
    %304 = vector.broadcast %5 : vector<8x1xf32> to vector<8x32xf32>
    %305 = arith.mulf %303, %304 : vector<8x32xf32>
    %306 = arith.truncf %305 : vector<8x32xf32> to vector<8x32xbf16>
    %c0_149 = arith.constant 0 : index
    %c0_150 = arith.constant 0 : index
    %307 = vector.load %arg25[%c0_149, %c0_150] : memref<32x64xbf16, #tpu.memory_space<vmem>>, vector<32x64xbf16>
    %cst_151 = arith.constant dense<0.000000e+00> : vector<8x64xf32>
    %308 = tpu.matmul %306, %307, %cst_151 {dimension_numbers = #tpu.dot_dimension_numbers<[1], [0], [0], [1], [0, 0, 1, 1], [], []>} : vector<8x32xbf16>, vector<32x64xbf16>, vector<8x64xf32> -> vector<8x64xf32>
    %c0_152 = arith.constant 0 : index
    %c0_153 = arith.constant 0 : index
    %309 = vector.load %arg26[%c0_152, %c0_153] : memref<1x64xf32, #tpu.memory_space<vmem>>, vector<1x64xf32>
    %310 = vector.broadcast %309 : vector<1x64xf32> to vector<8x64xf32>
    %311 = arith.addf %308, %310 : vector<8x64xf32>
    %cst_154 = arith.constant 0.000000e+00 : f32
    %312 = vector.broadcast %cst_154 : f32 to vector<8x64xf32>
    %313 = arith.maximumf %311, %312 : vector<8x64xf32>
    %314 = arith.truncf %313 : vector<8x64xf32> to vector<8x64xbf16>
    %c0_155 = arith.constant 0 : index
    %c0_156 = arith.constant 0 : index
    %315 = vector.load %arg27[%c0_155, %c0_156] : memref<64x32xbf16, #tpu.memory_space<vmem>>, vector<64x32xbf16>
    %cst_157 = arith.constant dense<0.000000e+00> : vector<8x32xf32>
    %316 = tpu.matmul %314, %315, %cst_157 {dimension_numbers = #tpu.dot_dimension_numbers<[1], [0], [0], [1], [0, 0, 1, 1], [], []>} : vector<8x64xbf16>, vector<64x32xbf16>, vector<8x32xf32> -> vector<8x32xf32>
    %c0_158 = arith.constant 0 : index
    %c0_159 = arith.constant 0 : index
    %317 = vector.load %arg28[%c0_158, %c0_159] : memref<1x32xf32, #tpu.memory_space<vmem>>, vector<1x32xf32>
    %318 = vector.broadcast %317 : vector<1x32xf32> to vector<8x32xf32>
    %319 = arith.addf %316, %318 : vector<8x32xf32>
    %320 = arith.addf %319, %305 : vector<8x32xf32>
    %c0_160 = arith.constant 0 : index
    %c0_161 = arith.constant 0 : index
    %321 = vector.load %arg29[%c0_160, %c0_161] : memref<1x32xf32, #tpu.memory_space<vmem>>, vector<1x32xf32>
    %c0_162 = arith.constant 0 : index
    %c0_163 = arith.constant 0 : index
    %322 = vector.load %arg30[%c0_162, %c0_163] : memref<1x32xf32, #tpu.memory_space<vmem>>, vector<1x32xf32>
    %cst_164 = arith.constant dense<0.000000e+00> : vector<8xf32>
    %323 = vector.multi_reduction <add>, %320, %cst_164 [1] : vector<8x32xf32> to vector<8xf32>
    %324 = vector.shape_cast %323 : vector<8xf32> to vector<8x1xf32>
    %cst_165 = arith.constant 3.200000e+01 : f32
    %325 = vector.broadcast %cst_165 : f32 to vector<8x1xf32>
    %326 = arith.divf %324, %325 : vector<8x1xf32>
    %327 = vector.broadcast %326 : vector<8x1xf32> to vector<8x32xf32>
    %328 = arith.subf %320, %327 : vector<8x32xf32>
    %329 = arith.mulf %328, %328 : vector<8x32xf32>
    %cst_166 = arith.constant dense<0.000000e+00> : vector<8xf32>
    %330 = vector.multi_reduction <add>, %329, %cst_166 [1] : vector<8x32xf32> to vector<8xf32>
    %331 = vector.shape_cast %330 : vector<8xf32> to vector<8x1xf32>
    %cst_167 = arith.constant 3.200000e+01 : f32
    %332 = vector.broadcast %cst_167 : f32 to vector<8x1xf32>
    %333 = arith.divf %331, %332 : vector<8x1xf32>
    %334 = vector.broadcast %326 : vector<8x1xf32> to vector<8x32xf32>
    %335 = arith.subf %320, %334 : vector<8x32xf32>
    %cst_168 = arith.constant 9.99999974E-6 : f32
    %336 = vector.broadcast %cst_168 : f32 to vector<8x1xf32>
    %337 = arith.addf %333, %336 : vector<8x1xf32>
    %338 = math.rsqrt %337 : vector<8x1xf32>
    %339 = vector.broadcast %338 : vector<8x1xf32> to vector<8x32xf32>
    %340 = arith.mulf %335, %339 : vector<8x32xf32>
    %341 = vector.broadcast %321 : vector<1x32xf32> to vector<8x32xf32>
    %342 = arith.mulf %340, %341 : vector<8x32xf32>
    %343 = vector.broadcast %322 : vector<1x32xf32> to vector<8x32xf32>
    %344 = arith.addf %342, %343 : vector<8x32xf32>
    %345 = vector.broadcast %5 : vector<8x1xf32> to vector<8x32xf32>
    %346 = arith.mulf %344, %345 : vector<8x32xf32>
    %c0_169 = arith.constant 0 : index
    %c0_170 = arith.constant 0 : index
    %c0_171 = arith.constant 0 : index
    %347 = vector.load %arg31[%c0_169, %c0_170, %c0_171] : memref<1x8x32xf32, #tpu.memory_space<vmem>>, vector<1x8x32xf32>
    %348 = vector.shape_cast %347 : vector<1x8x32xf32> to vector<8x32xf32>
    %349 = vector.shape_cast %346 : vector<8x32xf32> to vector<1x8x32xf32>
    tpu.vector_store %arg31[%c0_169, %c0_170, %c0_171], %349 {strides = array<i32>} : memref<1x8x32xf32, #tpu.memory_space<vmem>>, vector<1x8x32xf32>,
    return
  }
  func.func @transform_0(%arg0: i32) -> (i32, i32, i32) {
    %c0_i32 = arith.constant 0 : i32
    %c0_i32_0 = arith.constant 0 : i32
    %c0_i32_1 = arith.constant 0 : i32
    return %arg0, %c0_i32, %c0_i32_0 : i32, i32, i32
  }
  func.func @transform_1(%arg0: i32) -> (i32, i32, i32) {
    %c0_i32 = arith.constant 0 : i32
    %c0_i32_0 = arith.constant 0 : i32
    %c0_i32_1 = arith.constant 0 : i32
    return %arg0, %c0_i32, %c0_i32_0 : i32, i32, i32
  }
  func.func @transform_2(%arg0: i32) -> (i32, i32, i32) {
    %c0_i32 = arith.constant 0 : i32
    %c0_i32_0 = arith.constant 0 : i32
    %c0_i32_1 = arith.constant 0 : i32
    return %arg0, %c0_i32, %c0_i32_0 : i32, i32, i32
  }
  func.func @transform_3(%arg0: i32) -> (i32, i32, i32) {
    %c0_i32 = arith.constant 0 : i32
    %c0_i32_0 = arith.constant 0 : i32
    %c0_i32_1 = arith.constant 0 : i32
    return %arg0, %c0_i32, %c0_i32_0 : i32, i32, i32
  }
  func.func @transform_4(%arg0: i32) -> (i32, i32) {
    %c0_i32 = arith.constant 0 : i32
    %c0_i32_0 = arith.constant 0 : i32
    %c0_i32_1 = arith.constant 0 : i32
    return %c0_i32, %c0_i32_0 : i32, i32
  }
  func.func @transform_5(%arg0: i32) -> (i32, i32) {
    %c0_i32 = arith.constant 0 : i32
    %c0_i32_0 = arith.constant 0 : i32
    %c0_i32_1 = arith.constant 0 : i32
    return %c0_i32, %c0_i32_0 : i32, i32
  }
  func.func @transform_6(%arg0: i32) -> (i32, i32) {
    %c0_i32 = arith.constant 0 : i32
    %c0_i32_0 = arith.constant 0 : i32
    %c0_i32_1 = arith.constant 0 : i32
    return %c0_i32, %c0_i32_0 : i32, i32
  }
  func.func @transform_7(%arg0: i32) -> (i32, i32) {
    %c0_i32 = arith.constant 0 : i32
    %c0_i32_0 = arith.constant 0 : i32
    %c0_i32_1 = arith.constant 0 : i32
    return %c0_i32, %c0_i32_0 : i32, i32
  }
  func.func @transform_8(%arg0: i32) -> (i32, i32) {
    %c0_i32 = arith.constant 0 : i32
    %c0_i32_0 = arith.constant 0 : i32
    %c0_i32_1 = arith.constant 0 : i32
    return %c0_i32, %c0_i32_0 : i32, i32
  }
  func.func @transform_9(%arg0: i32) -> (i32, i32) {
    %c0_i32 = arith.constant 0 : i32
    %c0_i32_0 = arith.constant 0 : i32
    %c0_i32_1 = arith.constant 0 : i32
    return %c0_i32, %c0_i32_0 : i32, i32
  }
  func.func @transform_10(%arg0: i32) -> (i32, i32) {
    %c0_i32 = arith.constant 0 : i32
    %c0_i32_0 = arith.constant 0 : i32
    %c0_i32_1 = arith.constant 0 : i32
    return %c0_i32, %c0_i32_0 : i32, i32
  }
  func.func @transform_11(%arg0: i32) -> (i32, i32) {
    %c0_i32 = arith.constant 0 : i32
    %c0_i32_0 = arith.constant 0 : i32
    %c0_i32_1 = arith.constant 0 : i32
    return %c0_i32, %c0_i32_0 : i32, i32
  }
  func.func @transform_12(%arg0: i32) -> (i32, i32) {
    %c0_i32 = arith.constant 0 : i32
    %c0_i32_0 = arith.constant 0 : i32
    %c0_i32_1 = arith.constant 0 : i32
    return %c0_i32, %c0_i32_0 : i32, i32
  }
  func.func @transform_13(%arg0: i32) -> (i32, i32) {
    %c0_i32 = arith.constant 0 : i32
    %c0_i32_0 = arith.constant 0 : i32
    %c0_i32_1 = arith.constant 0 : i32
    return %c0_i32, %c0_i32_0 : i32, i32
  }
  func.func @transform_14(%arg0: i32) -> (i32, i32) {
    %c0_i32 = arith.constant 0 : i32
    %c0_i32_0 = arith.constant 0 : i32
    %c0_i32_1 = arith.constant 0 : i32
    return %c0_i32, %c0_i32_0 : i32, i32
  }
  func.func @transform_15(%arg0: i32) -> (i32, i32) {
    %c0_i32 = arith.constant 0 : i32
    %c0_i32_0 = arith.constant 0 : i32
    %c0_i32_1 = arith.constant 0 : i32
    return %c0_i32, %c0_i32_0 : i32, i32
  }
  func.func @transform_16(%arg0: i32) -> (i32, i32) {
    %c0_i32 = arith.constant 0 : i32
    %c0_i32_0 = arith.constant 0 : i32
    %c0_i32_1 = arith.constant 0 : i32
    return %c0_i32, %c0_i32_0 : i32, i32
  }
  func.func @transform_17(%arg0: i32) -> (i32, i32) {
    %c0_i32 = arith.constant 0 : i32
    %c0_i32_0 = arith.constant 0 : i32
    %c0_i32_1 = arith.constant 0 : i32
    return %c0_i32, %c0_i32_0 : i32, i32
  }
  func.func @transform_18(%arg0: i32) -> (i32, i32) {
    %c0_i32 = arith.constant 0 : i32
    %c0_i32_0 = arith.constant 0 : i32
    %c0_i32_1 = arith.constant 0 : i32
    return %c0_i32, %c0_i32_0 : i32, i32
  }
  func.func @transform_19(%arg0: i32) -> (i32, i32) {
    %c0_i32 = arith.constant 0 : i32
    %c0_i32_0 = arith.constant 0 : i32
    %c0_i32_1 = arith.constant 0 : i32
    return %c0_i32, %c0_i32_0 : i32, i32
  }
  func.func @transform_20(%arg0: i32) -> (i32, i32) {
    %c0_i32 = arith.constant 0 : i32
    %c0_i32_0 = arith.constant 0 : i32
    %c0_i32_1 = arith.constant 0 : i32
    return %c0_i32, %c0_i32_0 : i32, i32
  }
  func.func @transform_21(%arg0: i32) -> (i32, i32) {
    %c0_i32 = arith.constant 0 : i32
    %c0_i32_0 = arith.constant 0 : i32
    %c0_i32_1 = arith.constant 0 : i32
    return %c0_i32, %c0_i32_0 : i32, i32
  }
  func.func @transform_22(%arg0: i32) -> (i32, i32) {
    %c0_i32 = arith.constant 0 : i32
    %c0_i32_0 = arith.constant 0 : i32
    %c0_i32_1 = arith.constant 0 : i32
    return %c0_i32, %c0_i32_0 : i32, i32
  }
  func.func @transform_23(%arg0: i32) -> (i32, i32) {
    %c0_i32 = arith.constant 0 : i32
    %c0_i32_0 = arith.constant 0 : i32
    %c0_i32_1 = arith.constant 0 : i32
    return %c0_i32, %c0_i32_0 : i32, i32
  }
  func.func @transform_24(%arg0: i32) -> (i32, i32) {
    %c0_i32 = arith.constant 0 : i32
    %c0_i32_0 = arith.constant 0 : i32
    %c0_i32_1 = arith.constant 0 : i32
    return %c0_i32, %c0_i32_0 : i32, i32
  }
  func.func @transform_25(%arg0: i32) -> (i32, i32) {
    %c0_i32 = arith.constant 0 : i32
    %c0_i32_0 = arith.constant 0 : i32
    %c0_i32_1 = arith.constant 0 : i32
    return %c0_i32, %c0_i32_0 : i32, i32
  }
  func.func @transform_26(%arg0: i32) -> (i32, i32) {
    %c0_i32 = arith.constant 0 : i32
    %c0_i32_0 = arith.constant 0 : i32
    %c0_i32_1 = arith.constant 0 : i32
    return %c0_i32, %c0_i32_0 : i32, i32
  }
  func.func @transform_27(%arg0: i32) -> (i32, i32) {
    %c0_i32 = arith.constant 0 : i32
    %c0_i32_0 = arith.constant 0 : i32
    %c0_i32_1 = arith.constant 0 : i32
    return %c0_i32, %c0_i32_0 : i32, i32
  }
  func.func @transform_28(%arg0: i32) -> (i32, i32) {
    %c0_i32 = arith.constant 0 : i32
    %c0_i32_0 = arith.constant 0 : i32
    %c0_i32_1 = arith.constant 0 : i32
    return %c0_i32, %c0_i32_0 : i32, i32
  }
  func.func @transform_29(%arg0: i32) -> (i32, i32) {
    %c0_i32 = arith.constant 0 : i32
    %c0_i32_0 = arith.constant 0 : i32
    %c0_i32_1 = arith.constant 0 : i32
    return %c0_i32, %c0_i32_0 : i32, i32
  }
  func.func @transform_30(%arg0: i32) -> (i32, i32, i32) {
    %c0_i32 = arith.constant 0 : i32
    %c0_i32_0 = arith.constant 0 : i32
    %c0_i32_1 = arith.constant 0 : i32
    return %arg0, %c0_i32, %c0_i32_0 : i32, i32, i32
  }
  func.func @transform_31(%arg0: i32) -> (i32, i32, i32, i32) {
    %c0_i32 = arith.constant 0 : i32
    %c0_i32_0 = arith.constant 0 : i32
    %c0_i32_1 = arith.constant 0 : i32
    %c0_i32_2 = arith.constant 0 : i32
    return %arg0, %c0_i32, %c0_i32_0, %c0_i32_1 : i32, i32, i32, i32
  }
  func.func @transform_32(%arg0: i32) -> (i32, i32, i32, i32) {
    %c0_i32 = arith.constant 0 : i32
    %c0_i32_0 = arith.constant 0 : i32
    %c0_i32_1 = arith.constant 0 : i32
    %c0_i32_2 = arith.constant 0 : i32
    return %arg0, %c0_i32, %c0_i32_0, %c0_i32_1 : i32, i32, i32, i32
  }
}

</mosaic_0001>

<llo_original>
// kernel: tpu_custom_call.1
$region0: #{tpu_custom_call.1}
  #allocation0 [shape = 'u32[]', space=smem, size = 0x4, offset = 0x4, fixed_abs, tag = 'smem constant byte address 0x4 - core index']
  #allocation1 [shape = 'u32[144,128]{1,0:T(1,128)}', space=vmem, size = 0x12000, scoped, tag = 'internal scratch']
  #allocation2 [shape = 'bf16[8,32]{1,0:T(8,128)(2,1)}', space=vmem, size = 0x800, scoped, tag = 'scratch operand']
  %s0 = inlined_call_operand.smem [shape: u32[33], index: -1, kind: input, shape index: {}]
  %s1 = sld [smem:[%s0]]
  %s2 = scalar_lea.smem %s0, 1
  %s3 = sld [smem:[%s2]]
  %s4 = scalar_lea.smem %s0, 2
  %s5 = sld [smem:[%s4]]
  %s6 = scalar_lea.smem %s0, 3
  %s7 = sld [smem:[%s6]]
  %s8 = scalar_lea.smem %s0, 4
  %s9 = sld [smem:[%s8]]
  %s10 = scalar_lea.smem %s0, 5
  %s11 = sld [smem:[%s10]]
  %s12 = scalar_lea.smem %s0, 6
  %s13 = sld [smem:[%s12]]
  %s14 = scalar_lea.smem %s0, 7
  %s15 = sld [smem:[%s14]]
  %s16 = scalar_lea.smem %s0, 8
  %s17 = sld [smem:[%s16]]
  %s18 = scalar_lea.smem %s0, 9
  %s19 = sld [smem:[%s18]]
  %s20 = scalar_lea.smem %s0, 10
  %s21 = sld [smem:[%s20]]
  %s22 = scalar_lea.smem %s0, 11
  %s23 = sld [smem:[%s22]]
  %s24 = scalar_lea.smem %s0, 12
  %s25 = sld [smem:[%s24]]
  %s26 = scalar_lea.smem %s0, 13
  %s27 = sld [smem:[%s26]]
  %s28 = scalar_lea.smem %s0, 14
  %s29 = sld [smem:[%s28]]
  %s30 = scalar_lea.smem %s0, 15
  %s31 = sld [smem:[%s30]]
  %s32 = scalar_lea.smem %s0, 16
  %s33 = sld [smem:[%s32]]
  %s34 = scalar_lea.smem %s0, 17
  %s35 = sld [smem:[%s34]]
  %s36 = scalar_lea.smem %s0, 18
  %s37 = sld [smem:[%s36]]
  %s38 = scalar_lea.smem %s0, 19
  %s39 = sld [smem:[%s38]]
  %s40 = scalar_lea.smem %s0, 20
  %s41 = sld [smem:[%s40]]
  %s42 = scalar_lea.smem %s0, 21
  %s43 = sld [smem:[%s42]]
  %s44 = scalar_lea.smem %s0, 22
  %s45 = sld [smem:[%s44]]
  %s46 = scalar_lea.smem %s0, 23
  %s47 = sld [smem:[%s46]]
  %s48 = scalar_lea.smem %s0, 24
  %s49 = sld [smem:[%s48]]
  %s50 = scalar_lea.smem %s0, 25
  %s51 = sld [smem:[%s50]]
  %s52 = scalar_lea.smem %s0, 26
  %s53 = sld [smem:[%s52]]
  %s54 = scalar_lea.smem %s0, 27
  %s55 = sld [smem:[%s54]]
  %s56 = scalar_lea.smem %s0, 28
  %s57 = sld [smem:[%s56]]
  %s58 = scalar_lea.smem %s0, 29
  %s59 = sld [smem:[%s58]]
  %s60 = scalar_lea.smem %s0, 30
  %s61 = sld [smem:[%s60]]
  %s62 = scalar_lea.smem %s0, 31
  %s63 = sld [smem:[%s62]]
  %s64 = scalar_lea.smem %s0, 32
  %s65 = sld [smem:[%s64]]
  %66 = xla_tuple %s61, %s63, %s65
  %s67 = sld [smem:[#allocation0]]
  $region221: #{tpu_custom_call.1} parent=0
    _
  %s69 = ssub.s32 1, %s67
  %s70 = scalar_select 0, %s69, %s67
  $region1: #{tpu_custom_call.1} parent=0
    #allocation3 [shape = 'u8[2048]{0}', space=vmem, size = 0x800, scoped, tag = 'input window, operand 3']
    #allocation4 [shape = 's32[2]{0}', space=sflag, size = 0x8, scoped, tag = 'scoped memory for tpu_custom_call.1']
    #allocation5 [shape = 's32[2]{0}', space=sflag, size = 0x8, scoped, tag = 'scoped memory for tpu_custom_call.1']
    #allocation6 [shape = 'u8[512]{0}', space=vmem, size = 0x400, scoped, tag = 'input window, operand 5, single buffered']
    #allocation7 [shape = 's32[1]{0}', space=sflag, size = 0x4, scoped, tag = 'scoped memory for tpu_custom_call.1']
    #allocation8 [shape = 'u8[512]{0}', space=vmem, size = 0x400, scoped, tag = 'input window, operand 7, single buffered']
    #allocation9 [shape = 'u8[8192]{0}', space=vmem, size = 0x2000, scoped, tag = 'input window, operand 10, single buffered']
    #allocation10 [shape = 's32[1]{0}', space=sflag, size = 0x4, scoped, tag = 'scoped memory for tpu_custom_call.1']
    #allocation11 [shape = 'u8[512]{0}', space=vmem, size = 0x400, scoped, tag = 'input window, operand 11, single buffered']
    #allocation12 [shape = 'u8[512]{0}', space=vmem, size = 0x400, scoped, tag = 'input window, operand 12, single buffered']
    #allocation13 [shape = 's32[1]{0}', space=sflag, size = 0x4, scoped, tag = 'scoped memory for tpu_custom_call.1']
    #allocation14 [shape = 'u8[512]{0}', space=vmem, size = 0x400, scoped, tag = 'input window, operand 13, single buffered']
    #allocation15 [shape = 'u8[512]{0}', space=vmem, size = 0x400, scoped, tag = 'input window, operand 15, single buffered']
    #allocation16 [shape = 's32[1]{0}', space=sflag, size = 0x4, scoped, tag = 'scoped memory for tpu_custom_call.1']
    #allocation17 [shape = 'u8[8192]{0}', space=vmem, size = 0x2000, scoped, tag = 'input window, operand 16, single buffered']
    #allocation18 [shape = 'u8[512]{0}', space=vmem, size = 0x400, scoped, tag = 'input window, operand 17, single buffered']
    #allocation19 [shape = 's32[1]{0}', space=sflag, size = 0x4, scoped, tag = 'scoped memory for tpu_custom_call.1']
    #allocation20 [shape = 'u8[512]{0}', space=vmem, size = 0x400, scoped, tag = 'input window, operand 19, single buffered']
    #allocation21 [shape = 'u8[8192]{0}', space=vmem, size = 0x2000, scoped, tag = 'input window, operand 20, single buffered']
    #allocation22 [shape = 's32[1]{0}', space=sflag, size = 0x4, scoped, tag = 'scoped memory for tpu_custom_call.1']
    #allocation23 [shape = 'u8[512]{0}', space=vmem, size = 0x400, scoped, tag = 'input window, operand 21, single buffered']
    #allocation24 [shape = 'u8[8192]{0}', space=vmem, size = 0x2000, scoped, tag = 'output window, operand 0']
    #allocation25 [shape = 'u8[16384]{0}', space=vmem, size = 0x4000, scoped, tag = 'output window, operand 1']
    #allocation26 [shape = 's32[2]{0}', space=sflag, size = 0x8, scoped, tag = 'scoped memory for tpu_custom_call.1']
    #allocation27 [shape = 'u8[16384]{0}', space=vmem, size = 0x4000, scoped, tag = 'output window, operand 2']
    %71 = vsyncpa [#allocation4], 0
    %s72 = scalar_lea.sflag [#allocation4], 1
    %73 = vsyncpa %s72, 0
    %74 = vsyncpa [#allocation7], 0
    %75 = vsyncpa [#allocation10], 0
    %76 = vsyncpa [#allocation13], 0
    %77 = vsyncpa [#allocation16], 0
    %78 = vsyncpa [#allocation19], 0
    %79 = vsyncpa [#allocation22], 0
    %80 = vsyncpa [#allocation5], 0
    %s81 = scalar_lea.sflag [#allocation5], 1
    %82 = vsyncpa %s81, 0
    %83 = vsyncpa [#allocation26], 0
    %s84 = scalar_lea.sflag [#allocation26], 1
    %85 = vsyncpa %s84, 0
    loop: start=0, step=1, limit=4
    $region2: #{tpu_custom_call.1} parent=1 // loop_pre_header
      _
    $region3: #{tpu_custom_call.1} parent=1 // loop_header
      %s87 = sphi 0, %s91
      %p88 = scmp.ge.s32.totalorder %s87, 4
      %s97 = sphi 0, %s99
      %s100 = sphi 0, %s97
      %s101 = sphi 0, %s100
      %s117 = sphi 0, %s101
      %s123 = sphi 0, %s125
      %s126 = sphi 0, %s123
      %s127 = sphi 0, %s126
      %s143 = sphi 0, %s127
      %s149 = sphi 0, %s151
      %s152 = sphi 0, %s149
      %s153 = sphi 0, %s152
      %s169 = sphi 0, %s153
      %s175 = sphi 0, %s177
      %s178 = sphi 0, %s175
      %s179 = sphi 0, %s178
      %s195 = sphi 0, %s179
      %s199 = sphi 0, %s199
      %s201 = sphi 0, %s199
      %s202 = sphi 0, %s201
      %s216 = sphi 0, %s202
      %s220 = sphi 0, %s220
      %s222 = sphi 0, %s220
      %s223 = sphi 0, %s222
      %s237 = sphi 0, %s223
      %s241 = sphi 0, %s241
      %s243 = sphi 0, %s241
      %s244 = sphi 0, %s243
      %s258 = sphi 0, %s244
      %s262 = sphi 0, %s262
      %s264 = sphi 0, %s262
      %s265 = sphi 0, %s264
      %s279 = sphi 0, %s265
      %s283 = sphi 0, %s283
      %s285 = sphi 0, %s283
      %s286 = sphi 0, %s285
      %s300 = sphi 0, %s286
      %s304 = sphi 0, %s304
      %s306 = sphi 0, %s304
      %s307 = sphi 0, %s306
      %s321 = sphi 0, %s307
      %s325 = sphi 0, %s325
      %s327 = sphi 0, %s325
      %s328 = sphi 0, %s327
      %s342 = sphi 0, %s328
      %s346 = sphi 0, %s346
      %s348 = sphi 0, %s346
      %s349 = sphi 0, %s348
      %s363 = sphi 0, %s349
      %s367 = sphi 0, %s367
      %s369 = sphi 0, %s367
      %s370 = sphi 0, %s369
      %s384 = sphi 0, %s370
      %s388 = sphi 0, %s388
      %s390 = sphi 0, %s388
      %s391 = sphi 0, %s390
      %s405 = sphi 0, %s391
      %s409 = sphi 0, %s409
      %s411 = sphi 0, %s409
      %s412 = sphi 0, %s411
      %s426 = sphi 0, %s412
      %s430 = sphi 0, %s430
      %s432 = sphi 0, %s430
      %s433 = sphi 0, %s432
      %s447 = sphi 0, %s433
      %s451 = sphi 0, %s451
      %s453 = sphi 0, %s451
      %s454 = sphi 0, %s453
      %s468 = sphi 0, %s454
      %s472 = sphi 0, %s472
      %s474 = sphi 0, %s472
      %s475 = sphi 0, %s474
      %s489 = sphi 0, %s475
      %s493 = sphi 0, %s493
      %s495 = sphi 0, %s493
      %s496 = sphi 0, %s495
      %s510 = sphi 0, %s496
      %s514 = sphi 0, %s514
      %s516 = sphi 0, %s514
      %s517 = sphi 0, %s516
      %s531 = sphi 0, %s517
      %s535 = sphi 0, %s535
      %s537 = sphi 0, %s535
      %s538 = sphi 0, %s537
      %s552 = sphi 0, %s538
      %s556 = sphi 0, %s556
      %s558 = sphi 0, %s556
      %s559 = sphi 0, %s558
      %s573 = sphi 0, %s559
      %s577 = sphi 0, %s577
      %s579 = sphi 0, %s577
      %s580 = sphi 0, %s579
      %s594 = sphi 0, %s580
      %s598 = sphi 0, %s598
      %s600 = sphi 0, %s598
      %s601 = sphi 0, %s600
      %s615 = sphi 0, %s601
      %s619 = sphi 0, %s619
      %s621 = sphi 0, %s619
      %s622 = sphi 0, %s621
      %s636 = sphi 0, %s622
      %s640 = sphi 0, %s640
      %s642 = sphi 0, %s640
      %s643 = sphi 0, %s642
      %s657 = sphi 0, %s643
      %s661 = sphi 0, %s661
      %s663 = sphi 0, %s661
      %s664 = sphi 0, %s663
      %s678 = sphi 0, %s664
      %s682 = sphi 0, %s682
      %s684 = sphi 0, %s682
      %s685 = sphi 0, %s684
      %s699 = sphi 0, %s685
      %s703 = sphi 0, %s703
      %s705 = sphi 0, %s703
      %s706 = sphi 0, %s705
      %s720 = sphi 0, %s706
      %s724 = sphi 0, %s724
      %s726 = sphi 0, %s724
      %s727 = sphi 0, %s726
      %s741 = sphi 0, %s727
      %s747 = sphi 0, %s749
      %s750 = sphi 0, %s747
      %s751 = sphi 0, %s750
      %s767 = sphi 0, %s751
      %s773 = sphi 0, %s775
      %s776 = sphi 0, %s773
      %s777 = sphi 0, %s776
      %s793 = sphi 0, %s777
      %s799 = sphi 0, %s801
      %s802 = sphi 0, %s799
      %s803 = sphi 0, %s802
      %s819 = sphi 0, %s803
    $region4: #{tpu_custom_call.1} parent=1 // loop_header_branch
      %90 = sbr.rel (%p88) target = $region8
    $region5: #{tpu_custom_call.1} parent=1 // loop_body
      %s92 = ssub.s32 %s87, 1
      %s93 = ssub.s32 %s87, 2
      %s94 = sadd.s32 %s87, 1
      %s95 = ssub.s32 %s87, %s94
      %p96 = scmp.eq.s32.totalorder %s95, 0
      %s98 = sadd.s32 %s97, 1
      %s99 = scalar_select %p96, %s97, %s98
      %p102 = pneg %p96
      %p103 = scmp.eq.s32.totalorder %s87, 1
      %p104 = por %p102, %p103
      %p105 = scmp.ne.s32.totalorder %s97, %s100
      %p106 = scmp.eq.s32.totalorder %s87, 0
      %p107 = por %p105, %p106
      %p108 = scmp.ne.s32.totalorder %s97, %s100
      %p109 = scmp.eq.s32.totalorder %s92, 1
      %p110 = por %p108, %p109
      %p111 = scmp.ne.s32.totalorder %s100, %s101
      %p112 = scmp.eq.s32.totalorder %s92, 0
      %p113 = por %p111, %p112
      %p114 = scmp.ne.s32.totalorder %s100, %s101
      %p115 = scmp.eq.s32.totalorder %s93, 1
      %p116 = por %p114, %p115
      %p118 = scmp.ne.s32.totalorder %s101, %s117
      %p119 = scmp.eq.s32.totalorder %s93, 0
      %p120 = por %p118, %p119
      %s121 = ssub.s32 %s87, %s94
      %p122 = scmp.eq.s32.totalorder %s121, 0
      %s124 = sadd.s32 %s123, 1
      %s125 = scalar_select %p122, %s123, %s124
      %p128 = pneg %p122
      %p129 = scmp.eq.s32.totalorder %s87, 1
      %p130 = por %p128, %p129
      %p131 = scmp.ne.s32.totalorder %s123, %s126
      %p132 = scmp.eq.s32.totalorder %s87, 0
      %p133 = por %p131, %p132
      %p134 = scmp.ne.s32.totalorder %s123, %s126
      %p135 = scmp.eq.s32.totalorder %s92, 1
      %p136 = por %p134, %p135
      %p137 = scmp.ne.s32.totalorder %s126, %s127
      %p138 = scmp.eq.s32.totalorder %s92, 0
      %p139 = por %p137, %p138
      %p140 = scmp.ne.s32.totalorder %s126, %s127
      %p141 = scmp.eq.s32.totalorder %s93, 1
      %p142 = por %p140, %p141
      %p144 = scmp.ne.s32.totalorder %s127, %s143
      %p145 = scmp.eq.s32.totalorder %s93, 0
      %p146 = por %p144, %p145
      %s147 = ssub.s32 %s87, %s94
      %p148 = scmp.eq.s32.totalorder %s147, 0
      %s150 = sadd.s32 %s149, 1
      %s151 = scalar_select %p148, %s149, %s150
      %p154 = pneg %p148
      %p155 = scmp.eq.s32.totalorder %s87, 1
      %p156 = por %p154, %p155
      %p157 = scmp.ne.s32.totalorder %s149, %s152
      %p158 = scmp.eq.s32.totalorder %s87, 0
      %p159 = por %p157, %p158
      %p160 = scmp.ne.s32.totalorder %s149, %s152
      %p161 = scmp.eq.s32.totalorder %s92, 1
      %p162 = por %p160, %p161
      %p163 = scmp.ne.s32.totalorder %s152, %s153
      %p164 = scmp.eq.s32.totalorder %s92, 0
      %p165 = por %p163, %p164
      %p166 = scmp.ne.s32.totalorder %s152, %s153
      %p167 = scmp.eq.s32.totalorder %s93, 1
      %p168 = por %p166, %p167
      %p170 = scmp.ne.s32.totalorder %s153, %s169
      %p171 = scmp.eq.s32.totalorder %s93, 0
      %p172 = por %p170, %p171
      %s173 = ssub.s32 %s87, %s94
      %p174 = scmp.eq.s32.totalorder %s173, 0
      %s176 = sadd.s32 %s175, 1
      %s177 = scalar_select %p174, %s175, %s176
      %p180 = pneg %p174
      %p181 = scmp.eq.s32.totalorder %s87, 1
      %p182 = por %p180, %p181
      %p183 = scmp.ne.s32.totalorder %s175, %s178
      %p184 = scmp.eq.s32.totalorder %s87, 0
      %p185 = por %p183, %p184
      %p186 = scmp.ne.s32.totalorder %s175, %s178
      %p187 = scmp.eq.s32.totalorder %s92, 1
      %p188 = por %p186, %p187
      %p189 = scmp.ne.s32.totalorder %s178, %s179
      %p190 = scmp.eq.s32.totalorder %s92, 0
      %p191 = por %p189, %p190
      %p192 = scmp.ne.s32.totalorder %s178, %s179
      %p193 = scmp.eq.s32.totalorder %s93, 1
      %p194 = por %p192, %p193
      %p196 = scmp.ne.s32.totalorder %s179, %s195
      %p197 = scmp.eq.s32.totalorder %s93, 0
      %p198 = por %p196, %p197
      %s200 = sadd.s32 %s199, 1
      %p203 = scmp.eq.s32.totalorder %s87, 1
      %p204 = scmp.ne.s32.totalorder %s199, %s201
      %p205 = scmp.eq.s32.totalorder %s87, 0
      %p206 = por %p204, %p205
      %p207 = scmp.ne.s32.totalorder %s199, %s201
      %p208 = scmp.eq.s32.totalorder %s92, 1
      %p209 = por %p207, %p208
      %p210 = scmp.ne.s32.totalorder %s201, %s202
      %p211 = scmp.eq.s32.totalorder %s92, 0
      %p212 = por %p210, %p211
      %p213 = scmp.ne.s32.totalorder %s201, %s202
      %p214 = scmp.eq.s32.totalorder %s93, 1
      %p215 = por %p213, %p214
      %p217 = scmp.ne.s32.totalorder %s202, %s216
      %p218 = scmp.eq.s32.totalorder %s93, 0
      %p219 = por %p217, %p218
      %s221 = sadd.s32 %s220, 1
      %p224 = scmp.eq.s32.totalorder %s87, 1
      %p225 = scmp.ne.s32.totalorder %s220, %s222
      %p226 = scmp.eq.s32.totalorder %s87, 0
      %p227 = por %p225, %p226
      %p228 = scmp.ne.s32.totalorder %s220, %s222
      %p229 = scmp.eq.s32.totalorder %s92, 1
      %p230 = por %p228, %p229
      %p231 = scmp.ne.s32.totalorder %s222, %s223
      %p232 = scmp.eq.s32.totalorder %s92, 0
      %p233 = por %p231, %p232
      %p234 = scmp.ne.s32.totalorder %s222, %s223
      %p235 = scmp.eq.s32.totalorder %s93, 1
      %p236 = por %p234, %p235
      %p238 = scmp.ne.s32.totalorder %s223, %s237
      %p239 = scmp.eq.s32.totalorder %s93, 0
      %p240 = por %p238, %p239
      %s242 = sadd.s32 %s241, 1
      %p245 = scmp.eq.s32.totalorder %s87, 1
      %p246 = scmp.ne.s32.totalorder %s241, %s243
      %p247 = scmp.eq.s32.totalorder %s87, 0
      %p248 = por %p246, %p247
      %p249 = scmp.ne.s32.totalorder %s241, %s243
      %p250 = scmp.eq.s32.totalorder %s92, 1
      %p251 = por %p249, %p250
      %p252 = scmp.ne.s32.totalorder %s243, %s244
      %p253 = scmp.eq.s32.totalorder %s92, 0
      %p254 = por %p252, %p253
      %p255 = scmp.ne.s32.totalorder %s243, %s244
      %p256 = scmp.eq.s32.totalorder %s93, 1
      %p257 = por %p255, %p256
      %p259 = scmp.ne.s32.totalorder %s244, %s258
      %p260 = scmp.eq.s32.totalorder %s93, 0
      %p261 = por %p259, %p260
      %s263 = sadd.s32 %s262, 1
      %p266 = scmp.eq.s32.totalorder %s87, 1
      %p267 = scmp.ne.s32.totalorder %s262, %s264
      %p268 = scmp.eq.s32.totalorder %s87, 0
      %p269 = por %p267, %p268
      %p270 = scmp.ne.s32.totalorder %s262, %s264
      %p271 = scmp.eq.s32.totalorder %s92, 1
      %p272 = por %p270, %p271
      %p273 = scmp.ne.s32.totalorder %s264, %s265
      %p274 = scmp.eq.s32.totalorder %s92, 0
      %p275 = por %p273, %p274
      %p276 = scmp.ne.s32.totalorder %s264, %s265
      %p277 = scmp.eq.s32.totalorder %s93, 1
      %p278 = por %p276, %p277
      %p280 = scmp.ne.s32.totalorder %s265, %s279
      %p281 = scmp.eq.s32.totalorder %s93, 0
      %p282 = por %p280, %p281
      %s284 = sadd.s32 %s283, 1
      %p287 = scmp.eq.s32.totalorder %s87, 1
      %p288 = scmp.ne.s32.totalorder %s283, %s285
      %p289 = scmp.eq.s32.totalorder %s87, 0
      %p290 = por %p288, %p289
      %p291 = scmp.ne.s32.totalorder %s283, %s285
      %p292 = scmp.eq.s32.totalorder %s92, 1
      %p293 = por %p291, %p292
      %p294 = scmp.ne.s32.totalorder %s285, %s286
      %p295 = scmp.eq.s32.totalorder %s92, 0
      %p296 = por %p294, %p295
      %p297 = scmp.ne.s32.totalorder %s285, %s286
      %p298 = scmp.eq.s32.totalorder %s93, 1
      %p299 = por %p297, %p298
      %p301 = scmp.ne.s32.totalorder %s286, %s300
      %p302 = scmp.eq.s32.totalorder %s93, 0
      %p303 = por %p301, %p302
      %s305 = sadd.s32 %s304, 1
      %p308 = scmp.eq.s32.totalorder %s87, 1
      %p309 = scmp.ne.s32.totalorder %s304, %s306
      %p310 = scmp.eq.s32.totalorder %s87, 0
      %p311 = por %p309, %p310
      %p312 = scmp.ne.s32.totalorder %s304, %s306
      %p313 = scmp.eq.s32.totalorder %s92, 1
      %p314 = por %p312, %p313
      %p315 = scmp.ne.s32.totalorder %s306, %s307
      %p316 = scmp.eq.s32.totalorder %s92, 0
      %p317 = por %p315, %p316
      %p318 = scmp.ne.s32.totalorder %s306, %s307
      %p319 = scmp.eq.s32.totalorder %s93, 1
      %p320 = por %p318, %p319
      %p322 = scmp.ne.s32.totalorder %s307, %s321
      %p323 = scmp.eq.s32.totalorder %s93, 0
      %p324 = por %p322, %p323
      %s326 = sadd.s32 %s325, 1
      %p329 = scmp.eq.s32.totalorder %s87, 1
      %p330 = scmp.ne.s32.totalorder %s325, %s327
      %p331 = scmp.eq.s32.totalorder %s87, 0
      %p332 = por %p330, %p331
      %p333 = scmp.ne.s32.totalorder %s325, %s327
      %p334 = scmp.eq.s32.totalorder %s92, 1
      %p335 = por %p333, %p334
      %p336 = scmp.ne.s32.totalorder %s327, %s328
      %p337 = scmp.eq.s32.totalorder %s92, 0
      %p338 = por %p336, %p337
      %p339 = scmp.ne.s32.totalorder %s327, %s328
      %p340 = scmp.eq.s32.totalorder %s93, 1
      %p341 = por %p339, %p340
      %p343 = scmp.ne.s32.totalorder %s328, %s342
      %p344 = scmp.eq.s32.totalorder %s93, 0
      %p345 = por %p343, %p344
      %s347 = sadd.s32 %s346, 1
      %p350 = scmp.eq.s32.totalorder %s87, 1
      %p351 = scmp.ne.s32.totalorder %s346, %s348
      %p352 = scmp.eq.s32.totalorder %s87, 0
      %p353 = por %p351, %p352
      %p354 = scmp.ne.s32.totalorder %s346, %s348
      %p355 = scmp.eq.s32.totalorder %s92, 1
      %p356 = por %p354, %p355
      %p357 = scmp.ne.s32.totalorder %s348, %s349
      %p358 = scmp.eq.s32.totalorder %s92, 0
      %p359 = por %p357, %p358
      %p360 = scmp.ne.s32.totalorder %s348, %s349
      %p361 = scmp.eq.s32.totalorder %s93, 1
      %p362 = por %p360, %p361
      %p364 = scmp.ne.s32.totalorder %s349, %s363
      %p365 = scmp.eq.s32.totalorder %s93, 0
      %p366 = por %p364, %p365
      %s368 = sadd.s32 %s367, 1
      %p371 = scmp.eq.s32.totalorder %s87, 1
      %p372 = scmp.ne.s32.totalorder %s367, %s369
      %p373 = scmp.eq.s32.totalorder %s87, 0
      %p374 = por %p372, %p373
      %p375 = scmp.ne.s32.totalorder %s367, %s369
      %p376 = scmp.eq.s32.totalorder %s92, 1
      %p377 = por %p375, %p376
      %p378 = scmp.ne.s32.totalorder %s369, %s370
      %p379 = scmp.eq.s32.totalorder %s92, 0
      %p380 = por %p378, %p379
      %p381 = scmp.ne.s32.totalorder %s369, %s370
      %p382 = scmp.eq.s32.totalorder %s93, 1
      %p383 = por %p381, %p382
      %p385 = scmp.ne.s32.totalorder %s370, %s384
      %p386 = scmp.eq.s32.totalorder %s93, 0
      %p387 = por %p385, %p386
      %s389 = sadd.s32 %s388, 1
      %p392 = scmp.eq.s32.totalorder %s87, 1
      %p393 = scmp.ne.s32.totalorder %s388, %s390
      %p394 = scmp.eq.s32.totalorder %s87, 0
      %p395 = por %p393, %p394
      %p396 = scmp.ne.s32.totalorder %s388, %s390
      %p397 = scmp.eq.s32.totalorder %s92, 1
      %p398 = por %p396, %p397
      %p399 = scmp.ne.s32.totalorder %s390, %s391
      %p400 = scmp.eq.s32.totalorder %s92, 0
      %p401 = por %p399, %p400
      %p402 = scmp.ne.s32.totalorder %s390, %s391
      %p403 = scmp.eq.s32.totalorder %s93, 1
      %p404 = por %p402, %p403
      %p406 = scmp.ne.s32.totalorder %s391, %s405
      %p407 = scmp.eq.s32.totalorder %s93, 0
      %p408 = por %p406, %p407
      %s410 = sadd.s32 %s409, 1
      %p413 = scmp.eq.s32.totalorder %s87, 1
      %p414 = scmp.ne.s32.totalorder %s409, %s411
      %p415 = scmp.eq.s32.totalorder %s87, 0
      %p416 = por %p414, %p415
      %p417 = scmp.ne.s32.totalorder %s409, %s411
      %p418 = scmp.eq.s32.totalorder %s92, 1
      %p419 = por %p417, %p418
      %p420 = scmp.ne.s32.totalorder %s411, %s412
      %p421 = scmp.eq.s32.totalorder %s92, 0
      %p422 = por %p420, %p421
      %p423 = scmp.ne.s32.totalorder %s411, %s412
      %p424 = scmp.eq.s32.totalorder %s93, 1
      %p425 = por %p423, %p424
      %p427 = scmp.ne.s32.totalorder %s412, %s426
      %p428 = scmp.eq.s32.totalorder %s93, 0
      %p429 = por %p427, %p428
      %s431 = sadd.s32 %s430, 1
      %p434 = scmp.eq.s32.totalorder %s87, 1
      %p435 = scmp.ne.s32.totalorder %s430, %s432
      %p436 = scmp.eq.s32.totalorder %s87, 0
      %p437 = por %p435, %p436
      %p438 = scmp.ne.s32.totalorder %s430, %s432
      %p439 = scmp.eq.s32.totalorder %s92, 1
      %p440 = por %p438, %p439
      %p441 = scmp.ne.s32.totalorder %s432, %s433
      %p442 = scmp.eq.s32.totalorder %s92, 0
      %p443 = por %p441, %p442
      %p444 = scmp.ne.s32.totalorder %s432, %s433
      %p445 = scmp.eq.s32.totalorder %s93, 1
      %p446 = por %p444, %p445
      %p448 = scmp.ne.s32.totalorder %s433, %s447
      %p449 = scmp.eq.s32.totalorder %s93, 0
      %p450 = por %p448, %p449
      %s452 = sadd.s32 %s451, 1
      %p455 = scmp.eq.s32.totalorder %s87, 1
      %p456 = scmp.ne.s32.totalorder %s451, %s453
      %p457 = scmp.eq.s32.totalorder %s87, 0
      %p458 = por %p456, %p457
      %p459 = scmp.ne.s32.totalorder %s451, %s453
      %p460 = scmp.eq.s32.totalorder %s92, 1
      %p461 = por %p459, %p460
      %p462 = scmp.ne.s32.totalorder %s453, %s454
      %p463 = scmp.eq.s32.totalorder %s92, 0
      %p464 = por %p462, %p463
      %p465 = scmp.ne.s32.totalorder %s453, %s454
      %p466 = scmp.eq.s32.totalorder %s93, 1
      %p467 = por %p465, %p466
      %p469 = scmp.ne.s32.totalorder %s454, %s468
      %p470 = scmp.eq.s32.totalorder %s93, 0
      %p471 = por %p469, %p470
      %s473 = sadd.s32 %s472, 1
      %p476 = scmp.eq.s32.totalorder %s87, 1
      %p477 = scmp.ne.s32.totalorder %s472, %s474
      %p478 = scmp.eq.s32.totalorder %s87, 0
      %p479 = por %p477, %p478
      %p480 = scmp.ne.s32.totalorder %s472, %s474
      %p481 = scmp.eq.s32.totalorder %s92, 1
      %p482 = por %p480, %p481
      %p483 = scmp.ne.s32.totalorder %s474, %s475
      %p484 = scmp.eq.s32.totalorder %s92, 0
      %p485 = por %p483, %p484
      %p486 = scmp.ne.s32.totalorder %s474, %s475
      %p487 = scmp.eq.s32.totalorder %s93, 1
      %p488 = por %p486, %p487
      %p490 = scmp.ne.s32.totalorder %s475, %s489
      %p491 = scmp.eq.s32.totalorder %s93, 0
      %p492 = por %p490, %p491
      %s494 = sadd.s32 %s493, 1
      %p497 = scmp.eq.s32.totalorder %s87, 1
      %p498 = scmp.ne.s32.totalorder %s493, %s495
      %p499 = scmp.eq.s32.totalorder %s87, 0
      %p500 = por %p498, %p499
      %p501 = scmp.ne.s32.totalorder %s493, %s495
      %p502 = scmp.eq.s32.totalorder %s92, 1
      %p503 = por %p501, %p502
      %p504 = scmp.ne.s32.totalorder %s495, %s496
      %p505 = scmp.eq.s32.totalorder %s92, 0
      %p506 = por %p504, %p505
      %p507 = scmp.ne.s32.totalorder %s495, %s496
      %p508 = scmp.eq.s32.totalorder %s93, 1
      %p509 = por %p507, %p508
      %p511 = scmp.ne.s32.totalorder %s496, %s510
      %p512 = scmp.eq.s32.totalorder %s93, 0
      %p513 = por %p511, %p512
      %s515 = sadd.s32 %s514, 1
      %p518 = scmp.eq.s32.totalorder %s87, 1
      %p519 = scmp.ne.s32.totalorder %s514, %s516
      %p520 = scmp.eq.s32.totalorder %s87, 0
      %p521 = por %p519, %p520
      %p522 = scmp.ne.s32.totalorder %s514, %s516
      %p523 = scmp.eq.s32.totalorder %s92, 1
      %p524 = por %p522, %p523
      %p525 = scmp.ne.s32.totalorder %s516, %s517
      %p526 = scmp.eq.s32.totalorder %s92, 0
      %p527 = por %p525, %p526
      %p528 = scmp.ne.s32.totalorder %s516, %s517
      %p529 = scmp.eq.s32.totalorder %s93, 1
      %p530 = por %p528, %p529
      %p532 = scmp.ne.s32.totalorder %s517, %s531
      %p533 = scmp.eq.s32.totalorder %s93, 0
      %p534 = por %p532, %p533
      %s536 = sadd.s32 %s535, 1
      %p539 = scmp.eq.s32.totalorder %s87, 1
      %p540 = scmp.ne.s32.totalorder %s535, %s537
      %p541 = scmp.eq.s32.totalorder %s87, 0
      %p542 = por %p540, %p541
      %p543 = scmp.ne.s32.totalorder %s535, %s537
      %p544 = scmp.eq.s32.totalorder %s92, 1
      %p545 = por %p543, %p544
      %p546 = scmp.ne.s32.totalorder %s537, %s538
      %p547 = scmp.eq.s32.totalorder %s92, 0
      %p548 = por %p546, %p547
      %p549 = scmp.ne.s32.totalorder %s537, %s538
      %p550 = scmp.eq.s32.totalorder %s93, 1
      %p551 = por %p549, %p550
      %p553 = scmp.ne.s32.totalorder %s538, %s552
      %p554 = scmp.eq.s32.totalorder %s93, 0
      %p555 = por %p553, %p554
      %s557 = sadd.s32 %s556, 1
      %p560 = scmp.eq.s32.totalorder %s87, 1
      %p561 = scmp.ne.s32.totalorder %s556, %s558
      %p562 = scmp.eq.s32.totalorder %s87, 0
      %p563 = por %p561, %p562
      %p564 = scmp.ne.s32.totalorder %s556, %s558
      %p565 = scmp.eq.s32.totalorder %s92, 1
      %p566 = por %p564, %p565
      %p567 = scmp.ne.s32.totalorder %s558, %s559
      %p568 = scmp.eq.s32.totalorder %s92, 0
      %p569 = por %p567, %p568
      %p570 = scmp.ne.s32.totalorder %s558, %s559
      %p571 = scmp.eq.s32.totalorder %s93, 1
      %p572 = por %p570, %p571
      %p574 = scmp.ne.s32.totalorder %s559, %s573
      %p575 = scmp.eq.s32.totalorder %s93, 0
      %p576 = por %p574, %p575
      %s578 = sadd.s32 %s577, 1
      %p581 = scmp.eq.s32.totalorder %s87, 1
      %p582 = scmp.ne.s32.totalorder %s577, %s579
      %p583 = scmp.eq.s32.totalorder %s87, 0
      %p584 = por %p582, %p583
      %p585 = scmp.ne.s32.totalorder %s577, %s579
      %p586 = scmp.eq.s32.totalorder %s92, 1
      %p587 = por %p585, %p586
      %p588 = scmp.ne.s32.totalorder %s579, %s580
      %p589 = scmp.eq.s32.totalorder %s92, 0
      %p590 = por %p588, %p589
      %p591 = scmp.ne.s32.totalorder %s579, %s580
      %p592 = scmp.eq.s32.totalorder %s93, 1
      %p593 = por %p591, %p592
      %p595 = scmp.ne.s32.totalorder %s580, %s594
      %p596 = scmp.eq.s32.totalorder %s93, 0
      %p597 = por %p595, %p596
      %s599 = sadd.s32 %s598, 1
      %p602 = scmp.eq.s32.totalorder %s87, 1
      %p603 = scmp.ne.s32.totalorder %s598, %s600
      %p604 = scmp.eq.s32.totalorder %s87, 0
      %p605 = por %p603, %p604
      %p606 = scmp.ne.s32.totalorder %s598, %s600
      %p607 = scmp.eq.s32.totalorder %s92, 1
      %p608 = por %p606, %p607
      %p609 = scmp.ne.s32.totalorder %s600, %s601
      %p610 = scmp.eq.s32.totalorder %s92, 0
      %p611 = por %p609, %p610
      %p612 = scmp.ne.s32.totalorder %s600, %s601
      %p613 = scmp.eq.s32.totalorder %s93, 1
      %p614 = por %p612, %p613
      %p616 = scmp.ne.s32.totalorder %s601, %s615
      %p617 = scmp.eq.s32.totalorder %s93, 0
      %p618 = por %p616, %p617
      %s620 = sadd.s32 %s619, 1
      %p623 = scmp.eq.s32.totalorder %s87, 1
      %p624 = scmp.ne.s32.totalorder %s619, %s621
      %p625 = scmp.eq.s32.totalorder %s87, 0
      %p626 = por %p624, %p625
      %p627 = scmp.ne.s32.totalorder %s619, %s621
      %p628 = scmp.eq.s32.totalorder %s92, 1
      %p629 = por %p627, %p628
      %p630 = scmp.ne.s32.totalorder %s621, %s622
      %p631 = scmp.eq.s32.totalorder %s92, 0
      %p632 = por %p630, %p631
      %p633 = scmp.ne.s32.totalorder %s621, %s622
      %p634 = scmp.eq.s32.totalorder %s93, 1
      %p635 = por %p633, %p634
      %p637 = scmp.ne.s32.totalorder %s622, %s636
      %p638 = scmp.eq.s32.totalorder %s93, 0
      %p639 = por %p637, %p638
      %s641 = sadd.s32 %s640, 1
      %p644 = scmp.eq.s32.totalorder %s87, 1
      %p645 = scmp.ne.s32.totalorder %s640, %s642
      %p646 = scmp.eq.s32.totalorder %s87, 0
      %p647 = por %p645, %p646
      %p648 = scmp.ne.s32.totalorder %s640, %s642
      %p649 = scmp.eq.s32.totalorder %s92, 1
      %p650 = por %p648, %p649
      %p651 = scmp.ne.s32.totalorder %s642, %s643
      %p652 = scmp.eq.s32.totalorder %s92, 0
      %p653 = por %p651, %p652
      %p654 = scmp.ne.s32.totalorder %s642, %s643
      %p655 = scmp.eq.s32.totalorder %s93, 1
      %p656 = por %p654, %p655
      %p658 = scmp.ne.s32.totalorder %s643, %s657
      %p659 = scmp.eq.s32.totalorder %s93, 0
      %p660 = por %p658, %p659
      %s662 = sadd.s32 %s661, 1
      %p665 = scmp.eq.s32.totalorder %s87, 1
      %p666 = scmp.ne.s32.totalorder %s661, %s663
      %p667 = scmp.eq.s32.totalorder %s87, 0
      %p668 = por %p666, %p667
      %p669 = scmp.ne.s32.totalorder %s661, %s663
      %p670 = scmp.eq.s32.totalorder %s92, 1
      %p671 = por %p669, %p670
      %p672 = scmp.ne.s32.totalorder %s663, %s664
      %p673 = scmp.eq.s32.totalorder %s92, 0
      %p674 = por %p672, %p673
      %p675 = scmp.ne.s32.totalorder %s663, %s664
      %p676 = scmp.eq.s32.totalorder %s93, 1
      %p677 = por %p675, %p676
      %p679 = scmp.ne.s32.totalorder %s664, %s678
      %p680 = scmp.eq.s32.totalorder %s93, 0
      %p681 = por %p679, %p680
      %s683 = sadd.s32 %s682, 1
      %p686 = scmp.eq.s32.totalorder %s87, 1
      %p687 = scmp.ne.s32.totalorder %s682, %s684
      %p688 = scmp.eq.s32.totalorder %s87, 0
      %p689 = por %p687, %p688
      %p690 = scmp.ne.s32.totalorder %s682, %s684
      %p691 = scmp.eq.s32.totalorder %s92, 1
      %p692 = por %p690, %p691
      %p693 = scmp.ne.s32.totalorder %s684, %s685
      %p694 = scmp.eq.s32.totalorder %s92, 0
      %p695 = por %p693, %p694
      %p696 = scmp.ne.s32.totalorder %s684, %s685
      %p697 = scmp.eq.s32.totalorder %s93, 1
      %p698 = por %p696, %p697
      %p700 = scmp.ne.s32.totalorder %s685, %s699
      %p701 = scmp.eq.s32.totalorder %s93, 0
      %p702 = por %p700, %p701
      %s704 = sadd.s32 %s703, 1
      %p707 = scmp.eq.s32.totalorder %s87, 1
      %p708 = scmp.ne.s32.totalorder %s703, %s705
      %p709 = scmp.eq.s32.totalorder %s87, 0
      %p710 = por %p708, %p709
      %p711 = scmp.ne.s32.totalorder %s703, %s705
      %p712 = scmp.eq.s32.totalorder %s92, 1
      %p713 = por %p711, %p712
      %p714 = scmp.ne.s32.totalorder %s705, %s706
      %p715 = scmp.eq.s32.totalorder %s92, 0
      %p716 = por %p714, %p715
      %p717 = scmp.ne.s32.totalorder %s705, %s706
      %p718 = scmp.eq.s32.totalorder %s93, 1
      %p719 = por %p717, %p718
      %p721 = scmp.ne.s32.totalorder %s706, %s720
      %p722 = scmp.eq.s32.totalorder %s93, 0
      %p723 = por %p721, %p722
      %s725 = sadd.s32 %s724, 1
      %p728 = scmp.eq.s32.totalorder %s87, 1
      %p729 = scmp.ne.s32.totalorder %s724, %s726
      %p730 = scmp.eq.s32.totalorder %s87, 0
      %p731 = por %p729, %p730
      %p732 = scmp.ne.s32.totalorder %s724, %s726
      %p733 = scmp.eq.s32.totalorder %s92, 1
      %p734 = por %p732, %p733
      %p735 = scmp.ne.s32.totalorder %s726, %s727
      %p736 = scmp.eq.s32.totalorder %s92, 0
      %p737 = por %p735, %p736
      %p738 = scmp.ne.s32.totalorder %s726, %s727
      %p739 = scmp.eq.s32.totalorder %s93, 1
      %p740 = por %p738, %p739
      %p742 = scmp.ne.s32.totalorder %s727, %s741
      %p743 = scmp.eq.s32.totalorder %s93, 0
      %p744 = por %p742, %p743
      %s745 = ssub.s32 %s87, %s94
      %p746 = scmp.eq.s32.totalorder %s745, 0
      %s748 = sadd.s32 %s747, 1
      %s749 = scalar_select %p746, %s747, %s748
      %p752 = pneg %p746
      %p753 = scmp.eq.s32.totalorder %s87, 1
      %p754 = por %p752, %p753
      %p755 = scmp.ne.s32.totalorder %s747, %s750
      %p756 = scmp.eq.s32.totalorder %s87, 0
      %p757 = por %p755, %p756
      %p758 = scmp.ne.s32.totalorder %s747, %s750
      %p759 = scmp.eq.s32.totalorder %s92, 1
      %p760 = por %p758, %p759
      %p761 = scmp.ne.s32.totalorder %s750, %s751
      %p762 = scmp.eq.s32.totalorder %s92, 0
      %p763 = por %p761, %p762
      %p764 = scmp.ne.s32.totalorder %s750, %s751
      %p765 = scmp.eq.s32.totalorder %s93, 1
      %p766 = por %p764, %p765
      %p768 = scmp.ne.s32.totalorder %s751, %s767
      %p769 = scmp.eq.s32.totalorder %s93, 0
      %p770 = por %p768, %p769
      %s771 = ssub.s32 %s87, %s94
      %p772 = scmp.eq.s32.totalorder %s771, 0
      %s774 = sadd.s32 %s773, 1
      %s775 = scalar_select %p772, %s773, %s774
      %p778 = pneg %p772
      %p779 = scmp.eq.s32.totalorder %s87, 1
      %p780 = por %p778, %p779
      %p781 = scmp.ne.s32.totalorder %s773, %s776
      %p782 = scmp.eq.s32.totalorder %s87, 0
      %p783 = por %p781, %p782
      %p784 = scmp.ne.s32.totalorder %s773, %s776
      %p785 = scmp.eq.s32.totalorder %s92, 1
      %p786 = por %p784, %p785
      %p787 = scmp.ne.s32.totalorder %s776, %s777
      %p788 = scmp.eq.s32.totalorder %s92, 0
      %p789 = por %p787, %p788
      %p790 = scmp.ne.s32.totalorder %s776, %s777
      %p791 = scmp.eq.s32.totalorder %s93, 1
      %p792 = por %p790, %p791
      %p794 = scmp.ne.s32.totalorder %s777, %s793
      %p795 = scmp.eq.s32.totalorder %s93, 0
      %p796 = por %p794, %p795
      %s797 = ssub.s32 %s87, %s94
      %p798 = scmp.eq.s32.totalorder %s797, 0
      %s800 = sadd.s32 %s799, 1
      %s801 = scalar_select %p798, %s799, %s800
      %p804 = pneg %p798
      %p805 = scmp.eq.s32.totalorder %s87, 1
      %p806 = por %p804, %p805
      %p807 = scmp.ne.s32.totalorder %s799, %s802
      %p808 = scmp.eq.s32.totalorder %s87, 0
      %p809 = por %p807, %p808
      %p810 = scmp.ne.s32.totalorder %s799, %s802
      %p811 = scmp.eq.s32.totalorder %s92, 1
      %p812 = por %p810, %p811
      %p813 = scmp.ne.s32.totalorder %s802, %s803
      %p814 = scmp.eq.s32.totalorder %s92, 0
      %p815 = por %p813, %p814
      %p816 = scmp.ne.s32.totalorder %s802, %s803
      %p817 = scmp.eq.s32.totalorder %s93, 1
      %p818 = por %p816, %p817
      %p820 = scmp.ne.s32.totalorder %s803, %s819
      %p821 = scmp.eq.s32.totalorder %s93, 0
      %p822 = por %p820, %p821
      %p823 = scmp.le.s32.totalorder 1, %s87
      %p824 = scmp.lt.s32.totalorder %s87, 3
      %p825 = pnand %p823, %p824
      %p826 = pneg %p825
      // Predicated region
      $region9: #{tpu_custom_call.1} parent=5 // pred_check
        _
      $region10: #{tpu_custom_call.1} parent=5 // pred_check_branch
        %828 = sbr.rel (%p825) target = $region12
      $region11: #{tpu_custom_call.1} parent=5 // pred_region
        %s829 = ssub.s32 %s87, 1
        // Predicated region
        $region13: #{tpu_custom_call.1} parent=11 // pred_check
          %p830 = pneg %p212
        $region14: #{tpu_custom_call.1} parent=11 // pred_check_branch
          %832 = sbr.rel (%p830) target = $region16
        $region15: #{tpu_custom_call.1} parent=11 // pred_region
          _
        $region16: #{tpu_custom_call.1} parent=11 // pred_fallthru
          _
        // Predicated region
        $region17: #{tpu_custom_call.1} parent=11 // pred_check
          %p833 = pneg %p233
        $region18: #{tpu_custom_call.1} parent=11 // pred_check_branch
          %835 = sbr.rel (%p833) target = $region20
        $region19: #{tpu_custom_call.1} parent=11 // pred_region
          %s837 = ssub.s32 16, 16
          %838 = vsyncadd [#allocation7], %s837
          %s840 = sshll.u32 [#allocation6], 4
          %s841 = int_to_ptr.vmem [resolvable:$true] %s840
          %843 = dma.hbm_to_vmem [thread:$0]  %s11, 16, %s841, [#allocation7]
        $region20: #{tpu_custom_call.1} parent=11 // pred_fallthru
          _
        // Predicated region
        $region21: #{tpu_custom_call.1} parent=11 // pred_check
          %p844 = pneg %p254
        $region22: #{tpu_custom_call.1} parent=11 // pred_check_branch
          %846 = sbr.rel (%p844) target = $region24
        $region23: #{tpu_custom_call.1} parent=11 // pred_region
          _
        $region24: #{tpu_custom_call.1} parent=11 // pred_fallthru
          _
        // Predicated region
        $region25: #{tpu_custom_call.1} parent=11 // pred_check
          %p847 = pneg %p275
        $region26: #{tpu_custom_call.1} parent=11 // pred_check_branch
          %849 = sbr.rel (%p847) target = $region28
        $region27: #{tpu_custom_call.1} parent=11 // pred_region
          %s851 = ssub.s32 16, 16
          %852 = vsyncadd [#allocation7], %s851
          %s854 = sshll.u32 [#allocation8], 4
          %s855 = int_to_ptr.vmem [resolvable:$true] %s854
          %857 = dma.hbm_to_vmem [thread:$0]  %s15, 16, %s855, [#allocation7]
        $region28: #{tpu_custom_call.1} parent=11 // pred_fallthru
          _
        // Predicated region
        $region29: #{tpu_custom_call.1} parent=11 // pred_check
          %p858 = pneg %p296
        $region30: #{tpu_custom_call.1} parent=11 // pred_check_branch
          %860 = sbr.rel (%p858) target = $region32
        $region31: #{tpu_custom_call.1} parent=11 // pred_region
          _
        $region32: #{tpu_custom_call.1} parent=11 // pred_fallthru
          _
        // Predicated region
        $region33: #{tpu_custom_call.1} parent=11 // pred_check
          %p861 = pneg %p317
        $region34: #{tpu_custom_call.1} parent=11 // pred_check_branch
          %863 = sbr.rel (%p861) target = $region36
        $region35: #{tpu_custom_call.1} parent=11 // pred_region
          _
        $region36: #{tpu_custom_call.1} parent=11 // pred_fallthru
          _
        // Predicated region
        $region37: #{tpu_custom_call.1} parent=11 // pred_check
          %p864 = pneg %p338
        $region38: #{tpu_custom_call.1} parent=11 // pred_check_branch
          %866 = sbr.rel (%p864) target = $region40
        $region39: #{tpu_custom_call.1} parent=11 // pred_region
          %s868 = ssub.s32 256, 256
          %869 = vsyncadd [#allocation10], %s868
          %s870 = sshll.u32 [#allocation9], 4
          %s871 = int_to_ptr.vmem [resolvable:$true] %s870
          %876 = dma.hbm_to_vmem [thread:$0]  %s21, 256, %s871, [#allocation10], 64, 64, 4
        $region40: #{tpu_custom_call.1} parent=11 // pred_fallthru
          _
        // Predicated region
        $region41: #{tpu_custom_call.1} parent=11 // pred_check
          %p877 = pneg %p359
        $region42: #{tpu_custom_call.1} parent=11 // pred_check_branch
          %879 = sbr.rel (%p877) target = $region44
        $region43: #{tpu_custom_call.1} parent=11 // pred_region
          %s881 = ssub.s32 16, 16
          %882 = vsyncadd [#allocation10], %s881
          %s884 = sshll.u32 [#allocation11], 4
          %s885 = int_to_ptr.vmem [resolvable:$true] %s884
          %887 = dma.hbm_to_vmem [thread:$0]  %s23, 16, %s885, [#allocation10]
        $region44: #{tpu_custom_call.1} parent=11 // pred_fallthru
          _
        // Predicated region
        $region45: #{tpu_custom_call.1} parent=11 // pred_check
          %p888 = pneg %p380
        $region46: #{tpu_custom_call.1} parent=11 // pred_check_branch
          %890 = sbr.rel (%p888) target = $region48
        $region47: #{tpu_custom_call.1} parent=11 // pred_region
          %s892 = ssub.s32 16, 16
          %893 = vsyncadd [#allocation13], %s892
          %s895 = sshll.u32 [#allocation12], 4
          %s896 = int_to_ptr.vmem [resolvable:$true] %s895
          %898 = dma.hbm_to_vmem [thread:$0]  %s25, 16, %s896, [#allocation13]
        $region48: #{tpu_custom_call.1} parent=11 // pred_fallthru
          _
        // Predicated region
        $region49: #{tpu_custom_call.1} parent=11 // pred_check
          %p899 = pneg %p401
        $region50: #{tpu_custom_call.1} parent=11 // pred_check_branch
          %901 = sbr.rel (%p899) target = $region52
        $region51: #{tpu_custom_call.1} parent=11 // pred_region
          %s903 = ssub.s32 16, 16
          %904 = vsyncadd [#allocation13], %s903
          %s906 = sshll.u32 [#allocation14], 4
          %s907 = int_to_ptr.vmem [resolvable:$true] %s906
          %909 = dma.hbm_to_vmem [thread:$0]  %s27, 16, %s907, [#allocation13]
        $region52: #{tpu_custom_call.1} parent=11 // pred_fallthru
          _
        // Predicated region
        $region53: #{tpu_custom_call.1} parent=11 // pred_check
          %p910 = pneg %p422
        $region54: #{tpu_custom_call.1} parent=11 // pred_check_branch
          %912 = sbr.rel (%p910) target = $region56
        $region55: #{tpu_custom_call.1} parent=11 // pred_region
          _
        $region56: #{tpu_custom_call.1} parent=11 // pred_fallthru
          _
        // Predicated region
        $region57: #{tpu_custom_call.1} parent=11 // pred_check
          %p913 = pneg %p443
        $region58: #{tpu_custom_call.1} parent=11 // pred_check_branch
          %915 = sbr.rel (%p913) target = $region60
        $region59: #{tpu_custom_call.1} parent=11 // pred_region
          %s917 = ssub.s32 16, 16
          %918 = vsyncadd [#allocation16], %s917
          %s920 = sshll.u32 [#allocation15], 4
          %s921 = int_to_ptr.vmem [resolvable:$true] %s920
          %923 = dma.hbm_to_vmem [thread:$0]  %s31, 16, %s921, [#allocation16]
        $region60: #{tpu_custom_call.1} parent=11 // pred_fallthru
          _
        // Predicated region
        $region61: #{tpu_custom_call.1} parent=11 // pred_check
          %p924 = pneg %p464
        $region62: #{tpu_custom_call.1} parent=11 // pred_check_branch
          %926 = sbr.rel (%p924) target = $region64
        $region63: #{tpu_custom_call.1} parent=11 // pred_region
          %s928 = ssub.s32 256, 256
          %929 = vsyncadd [#allocation16], %s928
          %s930 = sshll.u32 [#allocation17], 4
          %s931 = int_to_ptr.vmem [resolvable:$true] %s930
          %936 = dma.hbm_to_vmem [thread:$0]  %s33, 256, %s931, [#allocation16], 64, 64, 4
        $region64: #{tpu_custom_call.1} parent=11 // pred_fallthru
          _
        // Predicated region
        $region65: #{tpu_custom_call.1} parent=11 // pred_check
          %p937 = pneg %p485
        $region66: #{tpu_custom_call.1} parent=11 // pred_check_branch
          %939 = sbr.rel (%p937) target = $region68
        $region67: #{tpu_custom_call.1} parent=11 // pred_region
          %s941 = ssub.s32 16, 16
          %942 = vsyncadd [#allocation19], %s941
          %s944 = sshll.u32 [#allocation18], 4
          %s945 = int_to_ptr.vmem [resolvable:$true] %s944
          %947 = dma.hbm_to_vmem [thread:$0]  %s35, 16, %s945, [#allocation19]
        $region68: #{tpu_custom_call.1} parent=11 // pred_fallthru
          _
        // Predicated region
        $region69: #{tpu_custom_call.1} parent=11 // pred_check
          %p948 = pneg %p506
        $region70: #{tpu_custom_call.1} parent=11 // pred_check_branch
          %950 = sbr.rel (%p948) target = $region72
        $region71: #{tpu_custom_call.1} parent=11 // pred_region
          _
        $region72: #{tpu_custom_call.1} parent=11 // pred_fallthru
          _
        // Predicated region
        $region73: #{tpu_custom_call.1} parent=11 // pred_check
          %p951 = pneg %p527
        $region74: #{tpu_custom_call.1} parent=11 // pred_check_branch
          %953 = sbr.rel (%p951) target = $region76
        $region75: #{tpu_custom_call.1} parent=11 // pred_region
          %s955 = ssub.s32 16, 16
          %956 = vsyncadd [#allocation19], %s955
          %s958 = sshll.u32 [#allocation20], 4
          %s959 = int_to_ptr.vmem [resolvable:$true] %s958
          %961 = dma.hbm_to_vmem [thread:$0]  %s39, 16, %s959, [#allocation19]
        $region76: #{tpu_custom_call.1} parent=11 // pred_fallthru
          _
        // Predicated region
        $region77: #{tpu_custom_call.1} parent=11 // pred_check
          %p962 = pneg %p548
        $region78: #{tpu_custom_call.1} parent=11 // pred_check_branch
          %964 = sbr.rel (%p962) target = $region80
        $region79: #{tpu_custom_call.1} parent=11 // pred_region
          %s966 = ssub.s32 256, 256
          %967 = vsyncadd [#allocation22], %s966
          %s968 = sshll.u32 [#allocation21], 4
          %s969 = int_to_ptr.vmem [resolvable:$true] %s968
          %974 = dma.hbm_to_vmem [thread:$0]  %s41, 256, %s969, [#allocation22], 64, 64, 4
        $region80: #{tpu_custom_call.1} parent=11 // pred_fallthru
          _
        // Predicated region
        $region81: #{tpu_custom_call.1} parent=11 // pred_check
          %p975 = pneg %p569
        $region82: #{tpu_custom_call.1} parent=11 // pred_check_branch
          %977 = sbr.rel (%p975) target = $region84
        $region83: #{tpu_custom_call.1} parent=11 // pred_region
          %s979 = ssub.s32 16, 16
          %980 = vsyncadd [#allocation22], %s979
          %s982 = sshll.u32 [#allocation23], 4
          %s983 = int_to_ptr.vmem [resolvable:$true] %s982
          %985 = dma.hbm_to_vmem [thread:$0]  %s43, 16, %s983, [#allocation22]
        $region84: #{tpu_custom_call.1} parent=11 // pred_fallthru
          _
        // Predicated region
        $region85: #{tpu_custom_call.1} parent=11 // pred_check
          %p986 = pneg %p590
        $region86: #{tpu_custom_call.1} parent=11 // pred_check_branch
          %988 = sbr.rel (%p986) target = $region88
        $region87: #{tpu_custom_call.1} parent=11 // pred_region
          _
        $region88: #{tpu_custom_call.1} parent=11 // pred_fallthru
          _
        // Predicated region
        $region89: #{tpu_custom_call.1} parent=11 // pred_check
          %p989 = pneg %p611
        $region90: #{tpu_custom_call.1} parent=11 // pred_check_branch
          %991 = sbr.rel (%p989) target = $region92
        $region91: #{tpu_custom_call.1} parent=11 // pred_region
          _
        $region92: #{tpu_custom_call.1} parent=11 // pred_fallthru
          _
        // Predicated region
        $region93: #{tpu_custom_call.1} parent=11 // pred_check
          %p992 = pneg %p632
        $region94: #{tpu_custom_call.1} parent=11 // pred_check_branch
          %994 = sbr.rel (%p992) target = $region96
        $region95: #{tpu_custom_call.1} parent=11 // pred_region
          _
        $region96: #{tpu_custom_call.1} parent=11 // pred_fallthru
          _
        // Predicated region
        $region97: #{tpu_custom_call.1} parent=11 // pred_check
          %p995 = pneg %p653
        $region98: #{tpu_custom_call.1} parent=11 // pred_check_branch
          %997 = sbr.rel (%p995) target = $region100
        $region99: #{tpu_custom_call.1} parent=11 // pred_region
          _
        $region100: #{tpu_custom_call.1} parent=11 // pred_fallthru
          _
        // Predicated region
        $region101: #{tpu_custom_call.1} parent=11 // pred_check
          %p998 = pneg %p674
        $region102: #{tpu_custom_call.1} parent=11 // pred_check_branch
          %1000 = sbr.rel (%p998) target = $region104
        $region103: #{tpu_custom_call.1} parent=11 // pred_region
          _
        $region104: #{tpu_custom_call.1} parent=11 // pred_fallthru
          _
        // Predicated region
        $region105: #{tpu_custom_call.1} parent=11 // pred_check
          %p1001 = pneg %p695
        $region106: #{tpu_custom_call.1} parent=11 // pred_check_branch
          %1003 = sbr.rel (%p1001) target = $region108
        $region107: #{tpu_custom_call.1} parent=11 // pred_region
          _
        $region108: #{tpu_custom_call.1} parent=11 // pred_fallthru
          _
        // Predicated region
        $region109: #{tpu_custom_call.1} parent=11 // pred_check
          %p1004 = pneg %p716
        $region110: #{tpu_custom_call.1} parent=11 // pred_check_branch
          %1006 = sbr.rel (%p1004) target = $region112
        $region111: #{tpu_custom_call.1} parent=11 // pred_region
          _
        $region112: #{tpu_custom_call.1} parent=11 // pred_fallthru
          _
        // Predicated region
        $region113: #{tpu_custom_call.1} parent=11 // pred_check
          %p1007 = pneg %p737
        $region114: #{tpu_custom_call.1} parent=11 // pred_check_branch
          %1009 = sbr.rel (%p1007) target = $region116
        $region115: #{tpu_custom_call.1} parent=11 // pred_region
          _
        $region116: #{tpu_custom_call.1} parent=11 // pred_fallthru
          _
      $region12: #{tpu_custom_call.1} parent=5 // pred_fallthru
        _
      %p1010 = scmp.lt.s32.totalorder %s87, 2
      // Predicated region
      $region117: #{tpu_custom_call.1} parent=5 // pred_check
        %p1011 = pneg %p1010
      $region118: #{tpu_custom_call.1} parent=5 // pred_check_branch
        %1013 = sbr.rel (%p1011) target = $region120
      $region119: #{tpu_custom_call.1} parent=5 // pred_region
        // Predicated region
        $region121: #{tpu_custom_call.1} parent=119 // pred_check
          %p1014 = pneg %p107
        $region122: #{tpu_custom_call.1} parent=119 // pred_check_branch
          %1016 = sbr.rel (%p1014) target = $region124
        $region123: #{tpu_custom_call.1} parent=119 // pred_region
          %p1017 = scmp.lt.s32.totalorder %s87, 1
          %s1018 = scalar_select %p1017, %s87, 1
          %s1019 = smul.addr %s1018, 8
          %s1020 = scalar_lea.vmem %s1, %s1019
        $region124: #{tpu_custom_call.1} parent=119 // pred_fallthru
          _
        // Predicated region
        $region125: #{tpu_custom_call.1} parent=119 // pred_check
          %p1021 = pneg %p133
        $region126: #{tpu_custom_call.1} parent=119 // pred_check_branch
          %1023 = sbr.rel (%p1021) target = $region128
        $region127: #{tpu_custom_call.1} parent=119 // pred_region
          %p1024 = scmp.lt.s32.totalorder %s87, 1
          %s1025 = scalar_select %p1024, %s87, 1
          %s1026 = smul.addr %s1025, 8
          %s1027 = scalar_lea.vmem %s3, %s1026
        $region128: #{tpu_custom_call.1} parent=119 // pred_fallthru
          _
        // Predicated region
        $region129: #{tpu_custom_call.1} parent=119 // pred_check
          %p1028 = pneg %p159
        $region130: #{tpu_custom_call.1} parent=119 // pred_check_branch
          %1030 = sbr.rel (%p1028) target = $region132
        $region131: #{tpu_custom_call.1} parent=119 // pred_region
          %p1031 = scmp.lt.s32.totalorder %s87, 1
          %s1032 = scalar_select %p1031, %s87, 1
          %s1033 = smul.addr %s1032, 8
          %s1034 = scalar_lea.vmem %s5, %s1033
        $region132: #{tpu_custom_call.1} parent=119 // pred_fallthru
          _
        // Predicated region
        $region133: #{tpu_custom_call.1} parent=119 // pred_check
          %p1035 = pneg %p185
        $region134: #{tpu_custom_call.1} parent=119 // pred_check_branch
          %1037 = sbr.rel (%p1035) target = $region136
        $region135: #{tpu_custom_call.1} parent=119 // pred_region
          %s1038 = sand.u32 %s175, 1
          %s1039 = scalar_lea.sflag [#allocation4], %s1038
          %s1040 = sand.u32 %s175, 1
          %s1041 = smul.addr %s1040, 2
          %s1042 = scalar_lea.vmem [#allocation3], %s1041
          %s1044 = ssub.s32 32, 32
          %1045 = vsyncadd %s1039, %s1044
          %s1046 = smul.addr %s87, 32
          %s1047 = scalar_lea.hbm %s7, %s1046
          %s1049 = sshll.u32 %s1042, 4
          %s1050 = int_to_ptr.vmem [resolvable:$true] %s1049
          %1052 = dma.hbm_to_vmem [thread:$0]  %s1047, 32, %s1050, %s1039
        $region136: #{tpu_custom_call.1} parent=119 // pred_fallthru
          _
      $region120: #{tpu_custom_call.1} parent=5 // pred_fallthru
        _
      %p1053 = scmp.le.s32.totalorder 1, %s87
      %p1054 = scmp.lt.s32.totalorder %s87, 3
      %p1055 = pnand %p1053, %p1054
      %p1056 = pneg %p1055
      // Predicated region
      $region137: #{tpu_custom_call.1} parent=5 // pred_check
        _
      $region138: #{tpu_custom_call.1} parent=5 // pred_check_branch
        %1058 = sbr.rel (%p1055) target = $region140
      $region139: #{tpu_custom_call.1} parent=5 // pred_region
        %s1059 = ssub.s32 %s87, 1
        %s1060 = sand.u32 %s178, 1
        %s1061 = scalar_lea.sflag [#allocation4], %s1060
        %s1062 = sand.u32 %s178, 1
        %s1063 = smul.addr %s1062, 2
        %s1064 = scalar_lea.vmem [#allocation3], %s1063
        // Predicated region
        $region141: #{tpu_custom_call.1} parent=139 // pred_check
          %p1065 = pneg %p191
        $region142: #{tpu_custom_call.1} parent=139 // pred_check_branch
          %1067 = sbr.rel (%p1065) target = $region144
        $region143: #{tpu_custom_call.1} parent=139 // pred_region
          %1068 = dma.done %s1061, 32
        $region144: #{tpu_custom_call.1} parent=139 // pred_fallthru
          _
        // Predicated region
        $region145: #{tpu_custom_call.1} parent=139 // pred_check
          %p1069 = pneg %p233
        $region146: #{tpu_custom_call.1} parent=139 // pred_check_branch
          %1071 = sbr.rel (%p1069) target = $region148
        $region147: #{tpu_custom_call.1} parent=139 // pred_region
          %1072 = dma.done [#allocation7], 16
        $region148: #{tpu_custom_call.1} parent=139 // pred_fallthru
          _
        // Predicated region
        $region149: #{tpu_custom_call.1} parent=139 // pred_check
          %p1073 = pneg %p275
        $region150: #{tpu_custom_call.1} parent=139 // pred_check_branch
          %1075 = sbr.rel (%p1073) target = $region152
        $region151: #{tpu_custom_call.1} parent=139 // pred_region
          %1076 = dma.done [#allocation7], 16
        $region152: #{tpu_custom_call.1} parent=139 // pred_fallthru
          _
        // Predicated region
        $region153: #{tpu_custom_call.1} parent=139 // pred_check
          %p1077 = pneg %p338
        $region154: #{tpu_custom_call.1} parent=139 // pred_check_branch
          %1079 = sbr.rel (%p1077) target = $region156
        $region155: #{tpu_custom_call.1} parent=139 // pred_region
          %1080 = dma.done [#allocation10], 256
        $region156: #{tpu_custom_call.1} parent=139 // pred_fallthru
          _
        // Predicated region
        $region157: #{tpu_custom_call.1} parent=139 // pred_check
          %p1081 = pneg %p359
        $region158: #{tpu_custom_call.1} parent=139 // pred_check_branch
          %1083 = sbr.rel (%p1081) target = $region160
        $region159: #{tpu_custom_call.1} parent=139 // pred_region
          %1084 = dma.done [#allocation10], 16
        $region160: #{tpu_custom_call.1} parent=139 // pred_fallthru
          _
        // Predicated region
        $region161: #{tpu_custom_call.1} parent=139 // pred_check
          %p1085 = pneg %p380
        $region162: #{tpu_custom_call.1} parent=139 // pred_check_branch
          %1087 = sbr.rel (%p1085) target = $region164
        $region163: #{tpu_custom_call.1} parent=139 // pred_region
          %1088 = dma.done [#allocation13], 16
        $region164: #{tpu_custom_call.1} parent=139 // pred_fallthru
          _
        // Predicated region
        $region165: #{tpu_custom_call.1} parent=139 // pred_check
          %p1089 = pneg %p401
        $region166: #{tpu_custom_call.1} parent=139 // pred_check_branch
          %1091 = sbr.rel (%p1089) target = $region168
        $region167: #{tpu_custom_call.1} parent=139 // pred_region
          %1092 = dma.done [#allocation13], 16
        $region168: #{tpu_custom_call.1} parent=139 // pred_fallthru
          _
        // Predicated region
        $region169: #{tpu_custom_call.1} parent=139 // pred_check
          %p1093 = pneg %p443
        $region170: #{tpu_custom_call.1} parent=139 // pred_check_branch
          %1095 = sbr.rel (%p1093) target = $region172
        $region171: #{tpu_custom_call.1} parent=139 // pred_region
          %1096 = dma.done [#allocation16], 16
        $region172: #{tpu_custom_call.1} parent=139 // pred_fallthru
          _
        // Predicated region
        $region173: #{tpu_custom_call.1} parent=139 // pred_check
          %p1097 = pneg %p464
        $region174: #{tpu_custom_call.1} parent=139 // pred_check_branch
          %1099 = sbr.rel (%p1097) target = $region176
        $region175: #{tpu_custom_call.1} parent=139 // pred_region
          %1100 = dma.done [#allocation16], 256
        $region176: #{tpu_custom_call.1} parent=139 // pred_fallthru
          _
        // Predicated region
        $region177: #{tpu_custom_call.1} parent=139 // pred_check
          %p1101 = pneg %p485
        $region178: #{tpu_custom_call.1} parent=139 // pred_check_branch
          %1103 = sbr.rel (%p1101) target = $region180
        $region179: #{tpu_custom_call.1} parent=139 // pred_region
          %1104 = dma.done [#allocation19], 16
        $region180: #{tpu_custom_call.1} parent=139 // pred_fallthru
          _
        // Predicated region
        $region181: #{tpu_custom_call.1} parent=139 // pred_check
          %p1105 = pneg %p527
        $region182: #{tpu_custom_call.1} parent=139 // pred_check_branch
          %1107 = sbr.rel (%p1105) target = $region184
        $region183: #{tpu_custom_call.1} parent=139 // pred_region
          %1108 = dma.done [#allocation19], 16
        $region184: #{tpu_custom_call.1} parent=139 // pred_fallthru
          _
        // Predicated region
        $region185: #{tpu_custom_call.1} parent=139 // pred_check
          %p1109 = pneg %p548
        $region186: #{tpu_custom_call.1} parent=139 // pred_check_branch
          %1111 = sbr.rel (%p1109) target = $region188
        $region187: #{tpu_custom_call.1} parent=139 // pred_region
          %1112 = dma.done [#allocation22], 256
        $region188: #{tpu_custom_call.1} parent=139 // pred_fallthru
          _
        // Predicated region
        $region189: #{tpu_custom_call.1} parent=139 // pred_check
          %p1113 = pneg %p569
        $region190: #{tpu_custom_call.1} parent=139 // pred_check_branch
          %1115 = sbr.rel (%p1113) target = $region192
        $region191: #{tpu_custom_call.1} parent=139 // pred_region
          %1116 = dma.done [#allocation22], 16
        $region192: #{tpu_custom_call.1} parent=139 // pred_fallthru
          _
        %p1117 = scmp.lt.s32.totalorder %s92, 1
        %s1118 = scalar_select %p1117, %s92, 1
        %s1119 = smul.addr %s1118, 8
        %s1120 = scalar_lea.vmem %s1, %s1119
        %p1121 = pneg %p113
        %p1122 = pneg %p110
        %p1123 = scmp.lt.s32.totalorder %s92, 1
        %s1124 = scalar_select %p1123, %s92, 1
        %s1125 = smul.addr %s1124, 8
        %s1126 = scalar_lea.vmem %s3, %s1125
        %p1127 = pneg %p139
        %p1128 = pneg %p136
        %p1129 = scmp.lt.s32.totalorder %s92, 1
        %s1130 = scalar_select %p1129, %s92, 1
        %s1131 = smul.addr %s1130, 8
        %s1132 = scalar_lea.vmem %s5, %s1131
        %p1133 = pneg %p165
        %p1134 = pneg %p162
        %s1135 = sand.u32 %s178, 1
        %s1136 = scalar_lea.sflag [#allocation4], %s1135
        %s1137 = sand.u32 %s178, 1
        %s1138 = smul.addr %s1137, 2
        %s1139 = scalar_lea.vmem [#allocation3], %s1138
        %p1140 = pneg %p191
        %p1141 = pneg %p188
        %p1142 = pneg %p212
        %p1143 = pneg %p209
        %p1144 = pneg %p233
        %p1145 = pneg %p230
        %p1146 = pneg %p254
        %p1147 = pneg %p251
        %p1148 = pneg %p275
        %p1149 = pneg %p272
        %p1150 = pneg %p296
        %p1151 = pneg %p293
        %p1152 = pneg %p317
        %p1153 = pneg %p314
        %p1154 = pneg %p338
        %p1155 = pneg %p335
        %p1156 = pneg %p359
        %p1157 = pneg %p356
        %p1158 = pneg %p380
        %p1159 = pneg %p377
        %p1160 = pneg %p401
        %p1161 = pneg %p398
        %p1162 = pneg %p422
        %p1163 = pneg %p419
        %p1164 = pneg %p443
        %p1165 = pneg %p440
        %p1166 = pneg %p464
        %p1167 = pneg %p461
        %p1168 = pneg %p485
        %p1169 = pneg %p482
        %p1170 = pneg %p506
        %p1171 = pneg %p503
        %p1172 = pneg %p527
        %p1173 = pneg %p524
        %p1174 = pneg %p548
        %p1175 = pneg %p545
        %p1176 = pneg %p569
        %p1177 = pneg %p566
        %p1178 = pneg %p590
        %p1179 = pneg %p587
        %p1180 = pneg %p611
        %p1181 = pneg %p608
        %p1182 = pneg %p632
        %p1183 = pneg %p629
        %p1184 = pneg %p653
        %p1185 = pneg %p650
        %p1186 = pneg %p674
        %p1187 = pneg %p671
        %p1188 = pneg %p695
        %p1189 = pneg %p692
        %p1190 = pneg %p716
        %p1191 = pneg %p713
        %p1192 = pneg %p737
        %p1193 = pneg %p734
        %p1194 = pneg %p763
        %p1195 = pneg %p760
        %s1196 = sand.u32 %s750, 1
        %s1197 = scalar_lea.sflag [#allocation5], %s1196
        %s1198 = sand.u32 %s750, 1
        %s1199 = smul.addr %s1198, 8
        %s1200 = scalar_lea.vmem [#allocation24], %s1199
        %p1201 = pneg %p789
        %p1202 = pneg %p786
        %s1203 = sand.u32 %s92, 1
        %s1204 = scalar_lea.sflag [#allocation26], %s1203
        %s1205 = sand.u32 %s776, 1
        %s1206 = smul.addr %s1205, 16
        %s1207 = scalar_lea.vmem [#allocation25], %s1206
        %p1208 = pneg %p815
        %p1209 = pneg %p812
        %s1210 = sand.u32 %s92, 1
        %s1211 = scalar_lea.sflag [#allocation26], %s1210
        %s1212 = sand.u32 %s802, 1
        %s1213 = smul.addr %s1212, 16
        %s1214 = scalar_lea.vmem [#allocation27], %s1213
        %p1215 = scmp.lt.s32.totalorder %s92, 1
        %s1216 = scalar_select %p1215, %s92, 1
        %s1217 = smul.addr %s1216, 8
        %s1218 = scalar_lea.vmem %s1, %s1217
        %p1219 = scmp.lt.s32.totalorder %s92, 1
        %s1220 = scalar_select %p1219, %s92, 1
        %s1221 = smul.addr %s1220, 8
        %s1222 = scalar_lea.vmem %s3, %s1221
        %p1223 = scmp.lt.s32.totalorder %s92, 1
        %s1224 = scalar_select %p1223, %s92, 1
        %s1225 = smul.addr %s1224, 8
        %s1226 = scalar_lea.vmem %s5, %s1225
        %v1228 = vld [vmem:[%s1218] sm:$0xff]
        %v1229 = vld [vmem:[%s1222] sm:$0xff]
        %v1230 = vld [vmem:[%s1226] sm:$0xff]
        %v1231 = vlaneseq
        %v1232 = vshrl.u32 %v1231, 7
        %v1233 = vlaneseq
        %v1234 = vand.u32 %v1233, 127
        %vm1235 = vcmp.gt.s32.totalorder %v1234, %v1232
        %v1236 = vsel %vm1235, 1e+09, 0.0
        %v1237 = vld [vmem:[%s1064] sm:$0x3]
        %v1238 = vunpack.c.0.s8 %v1237
        %v1239 = vcvt.s32.f32 %v1238
        %v1240 = vmul.f32 %v1239, 1e+09
        %v1241 = vpack.c.bf16 %v1228, %v1228
        %v1242 = vld [vmem:[%s9] sm:$0xf]
        %v1243 = vld [vmem:[%s9 + $0x4] sm:$0xf]
        %v1244 = vld [vmem:[%s9 + $0x8] sm:$0xf]
        %v1245 = vld [vmem:[%s9 + $0xc] sm:$0xf]
        %v1246 = vld [vmem:[#allocation6] sm:$0x1]
        %v1248 = vlaneseq
        %v1249 = vshrl.u32 %v1248, 7
        %v1250 = vsub.s32 0, %v1249
        %v1251 = vrot.slane %v1246, %v1250
        %v1257 = vunpack.c.l.b16 %v1242
        %v1258 = vunpack.c.l.b16 %v1243
        %v1259 = vunpack.c.l.b16 %v1244
        %v1260 = vunpack.c.l.b16 %v1245
        %v1261 = vpack.c.b16 %v1258, %v1257
        %v1262 = vpack.c.b16 %v1260, %v1259
        %vm1265 = vcmask 261120
        %v1267 = vsel %vm1265, %v1241, 0
        %1269 = vmatprep.subr.bf16.mxu0 0
        %1270 = vmatpush1.bf16.msra.mxu0 %v1261
        %1271 = vmatprep.subr.bf16.mxu0 0
        %1272 = vmatpush1.bf16.msra.mxu0 %v1262
        %1273 = vmatprep.subr.bf16.mxu0 0
        %1274 = vmatpush1.bf16.msra.mxu0 0
        %1275 = vmatprep.subr.bf16.mxu0 0
        %1276 = vmatpush1.bf16.msra.mxu0 0
        %1277 = vmatprep.subr.bf16.mxu0 0
        %1278 = vmatpush1.bf16.msra.mxu0 0
        %1279 = vmatprep.subr.bf16.mxu0 0
        %1280 = vmatpush1.bf16.msra.mxu0 0
        %1281 = vmatprep.subr.bf16.mxu0 0
        %1282 = vmatpush1.bf16.msra.mxu0 0
        %1283 = vmatprep.subr.bf16.mxu0 0
        %1284 = vmatpush1.bf16.msra.mxu0 0
        %1285 = vmatprep.subr.bf16.mxu0 0
        %1286 = vmatpush1.bf16.msra.mxu0 0
        %1287 = vmatprep.subr.bf16.mxu0 0
        %1288 = vmatpush1.bf16.msra.mxu0 0
        %1289 = vmatprep.subr.bf16.mxu0 0
        %1290 = vmatpush1.bf16.msra.mxu0 0
        %1291 = vmatprep.subr.bf16.mxu0 0
        %1292 = vmatpush1.bf16.msra.mxu0 0
        %1293 = vmatprep.subr.bf16.mxu0 0
        %1294 = vmatpush1.bf16.msra.mxu0 0
        %1295 = vmatprep.subr.bf16.mxu0 0
        %1296 = vmatpush1.bf16.msra.mxu0 0
        %1297 = vmatprep.subr.bf16.mxu0 0
        %1298 = vmatpush1.bf16.msra.mxu0 0
        %1299 = vmatprep.subr.bf16.mxu0 0
        %1300 = vmatpush1.bf16.msra.mxu0 0
        %1301 = vmatprep.mubr.bf16.mxu0 0
        %1302 = vmatmul.mubr.bf16.gmra.mrb[0].mxu0 %v1267
        %v1303 = vpop.f32.mrb[0].mxu0
        %v1304 = vadd.f32 %v1251, %v1303
        %v1305 = vpop.f32.mrb[0].mxu0
        %v1306 = vpop.f32.mrb[0].mxu0
        %v1307 = vpop.f32.mrb[0].mxu0
        %1308 = vdwg.mxu0
        %v1309 = vld [vmem:[%s13] sm:$0xf]
        %v1310 = vld [vmem:[%s13 + $0x4] sm:$0xf]
        %v1311 = vld [vmem:[%s13 + $0x8] sm:$0xf]
        %v1312 = vld [vmem:[%s13 + $0xc] sm:$0xf]
        %v1313 = vld [vmem:[#allocation8] sm:$0x1]
        %v1315 = vlaneseq
        %v1316 = vshrl.u32 %v1315, 7
        %v1317 = vsub.s32 0, %v1316
        %v1318 = vrot.slane %v1313, %v1317
        %v1324 = vunpack.c.l.b16 %v1309
        %v1325 = vunpack.c.l.b16 %v1310
        %v1326 = vunpack.c.l.b16 %v1311
        %v1327 = vunpack.c.l.b16 %v1312
        %v1328 = vpack.c.b16 %v1325, %v1324
        %v1329 = vpack.c.b16 %v1327, %v1326
        %1332 = vmatprep.subr.bf16.mxu0 0
        %1333 = vmatpush1.bf16.msra.mxu0 %v1328
        %1334 = vmatprep.subr.bf16.mxu0 0
        %1335 = vmatpush1.bf16.msra.mxu0 %v1329
        %1336 = vmatprep.subr.bf16.mxu0 0
        %1337 = vmatpush1.bf16.msra.mxu0 0
        %1338 = vmatprep.subr.bf16.mxu0 0
        %1339 = vmatpush1.bf16.msra.mxu0 0
        %1340 = vmatprep.subr.bf16.mxu0 0
        %1341 = vmatpush1.bf16.msra.mxu0 0
        %1342 = vmatprep.subr.bf16.mxu0 0
        %1343 = vmatpush1.bf16.msra.mxu0 0
        %1344 = vmatprep.subr.bf16.mxu0 0
        %1345 = vmatpush1.bf16.msra.mxu0 0
        %1346 = vmatprep.subr.bf16.mxu0 0
        %1347 = vmatpush1.bf16.msra.mxu0 0
        %1348 = vmatprep.subr.bf16.mxu0 0
        %1349 = vmatpush1.bf16.msra.mxu0 0
        %1350 = vmatprep.subr.bf16.mxu0 0
        %1351 = vmatpush1.bf16.msra.mxu0 0
        %1352 = vmatprep.subr.bf16.mxu0 0
        %1353 = vmatpush1.bf16.msra.mxu0 0
        %1354 = vmatprep.subr.bf16.mxu0 0
        %1355 = vmatpush1.bf16.msra.mxu0 0
        %1356 = vmatprep.subr.bf16.mxu0 0
        %1357 = vmatpush1.bf16.msra.mxu0 0
        %1358 = vmatprep.subr.bf16.mxu0 0
        %1359 = vmatpush1.bf16.msra.mxu0 0
        %1360 = vmatprep.subr.bf16.mxu0 0
        %1361 = vmatpush1.bf16.msra.mxu0 0
        %1362 = vmatprep.subr.bf16.mxu0 0
        %1363 = vmatpush1.bf16.msra.mxu0 0
        %1364 = vmatprep.mubr.bf16.mxu0 0
        %1365 = vmatmul.mubr.bf16.gmra.mrb[0].mxu0 %v1267
        %v1366 = vpop.f32.mrb[0].mxu0
        %v1367 = vadd.f32 %v1318, %v1366
        %v1368 = vpop.f32.mrb[0].mxu0
        %v1369 = vpop.f32.mrb[0].mxu0
        %v1370 = vpop.f32.mrb[0].mxu0
        %1371 = vdwg.mxu0
        %v1372 = vld [vmem:[%s17] sm:$0xf]
        %v1373 = vld [vmem:[%s17 + $0x4] sm:$0xf]
        %v1374 = vld [vmem:[%s17 + $0x8] sm:$0xf]
        %v1375 = vld [vmem:[%s17 + $0xc] sm:$0xf]
        %v1376 = vld [vmem:[%s19] sm:$0x1]
        %v1378 = vlaneseq
        %v1379 = vshrl.u32 %v1378, 7
        %v1380 = vsub.s32 0, %v1379
        %v1381 = vrot.slane %v1376, %v1380
        %v1387 = vunpack.c.l.b16 %v1372
        %v1388 = vunpack.c.l.b16 %v1373
        %v1389 = vunpack.c.l.b16 %v1374
        %v1390 = vunpack.c.l.b16 %v1375
        %v1391 = vpack.c.b16 %v1388, %v1387
        %v1392 = vpack.c.b16 %v1390, %v1389
        %1395 = vmatprep.subr.bf16.mxu0 0
        %1396 = vmatpush1.bf16.msra.mxu0 %v1391
        %1397 = vmatprep.subr.bf16.mxu0 0
        %1398 = vmatpush1.bf16.msra.mxu0 %v1392
        %1399 = vmatprep.subr.bf16.mxu0 0
        %1400 = vmatpush1.bf16.msra.mxu0 0
        %1401 = vmatprep.subr.bf16.mxu0 0
        %1402 = vmatpush1.bf16.msra.mxu0 0
        %1403 = vmatprep.subr.bf16.mxu0 0
        %1404 = vmatpush1.bf16.msra.mxu0 0
        %1405 = vmatprep.subr.bf16.mxu0 0
        %1406 = vmatpush1.bf16.msra.mxu0 0
        %1407 = vmatprep.subr.bf16.mxu0 0
        %1408 = vmatpush1.bf16.msra.mxu0 0
        %1409 = vmatprep.subr.bf16.mxu0 0
        %1410 = vmatpush1.bf16.msra.mxu0 0
        %1411 = vmatprep.subr.bf16.mxu0 0
        %1412 = vmatpush1.bf16.msra.mxu0 0
        %1413 = vmatprep.subr.bf16.mxu0 0
        %1414 = vmatpush1.bf16.msra.mxu0 0
        %1415 = vmatprep.subr.bf16.mxu0 0
        %1416 = vmatpush1.bf16.msra.mxu0 0
        %1417 = vmatprep.subr.bf16.mxu0 0
        %1418 = vmatpush1.bf16.msra.mxu0 0
        %1419 = vmatprep.subr.bf16.mxu0 0
        %1420 = vmatpush1.bf16.msra.mxu0 0
        %1421 = vmatprep.subr.bf16.mxu0 0
        %1422 = vmatpush1.bf16.msra.mxu0 0
        %1423 = vmatprep.subr.bf16.mxu0 0
        %1424 = vmatpush1.bf16.msra.mxu0 0
        %1425 = vmatprep.subr.bf16.mxu0 0
        %1426 = vmatpush1.bf16.msra.mxu0 0
        %1427 = vmatprep.mubr.bf16.mxu0 0
        %1428 = vmatmul.mubr.bf16.gmra.mrb[0].mxu0 %v1267
        %v1429 = vpop.f32.mrb[0].mxu0
        %v1430 = vadd.f32 %v1381, %v1429
        %v1431 = vpop.f32.mrb[0].mxu0
        %v1432 = vpop.f32.mrb[0].mxu0
        %v1433 = vpop.f32.mrb[0].mxu0
        %1434 = vdwg.mxu0
        %v1435 = vpack.c.bf16 %v1304, %v1304
        %v1436 = vpack.c.bf16 %v1367, %v1367
        %v1437 = vpack.c.bf16 %v1430, %v1430
        %vm1438 = vcmask 64512
        %v1440 = vsel %vm1438, %v1435, 0
        %v1443 = vsel %vm1438, %v1436, 0
        %1445 = vmatprep.subr.bf16.mxu0 0
        %1446 = vmatpush1.bf16.xpose.msra.mxu0 %v1443
        %1447 = vmatprep.subr.bf16.mxu0 0
        %1448 = vmatpush1.bf16.xpose.msra.mxu0 0
        %1449 = vmatprep.subr.bf16.mxu0 0
        %1450 = vmatpush1.bf16.xpose.msra.mxu0 0
        %1451 = vmatprep.subr.bf16.mxu0 0
        %1452 = vmatpush1.bf16.xpose.msra.mxu0 0
        %1453 = vmatprep.subr.bf16.mxu0 0
        %1454 = vmatpush1.bf16.xpose.msra.mxu0 0
        %1455 = vmatprep.subr.bf16.mxu0 0
        %1456 = vmatpush1.bf16.xpose.msra.mxu0 0
        %1457 = vmatprep.subr.bf16.mxu0 0
        %1458 = vmatpush1.bf16.xpose.msra.mxu0 0
        %1459 = vmatprep.subr.bf16.mxu0 0
        %1460 = vmatpush1.bf16.xpose.msra.mxu0 0
        %1461 = vmatprep.subr.bf16.mxu0 0
        %1462 = vmatpush1.bf16.xpose.msra.mxu0 0
        %1463 = vmatprep.subr.bf16.mxu0 0
        %1464 = vmatpush1.bf16.xpose.msra.mxu0 0
        %1465 = vmatprep.subr.bf16.mxu0 0
        %1466 = vmatpush1.bf16.xpose.msra.mxu0 0
        %1467 = vmatprep.subr.bf16.mxu0 0
        %1468 = vmatpush1.bf16.xpose.msra.mxu0 0
        %1469 = vmatprep.subr.bf16.mxu0 0
        %1470 = vmatpush1.bf16.xpose.msra.mxu0 0
        %1471 = vmatprep.subr.bf16.mxu0 0
        %1472 = vmatpush1.bf16.xpose.msra.mxu0 0
        %1473 = vmatprep.subr.bf16.mxu0 0
        %1474 = vmatpush1.bf16.xpose.msra.mxu0 0
        %1475 = vmatprep.subr.bf16.mxu0 0
        %1476 = vmatpush1.bf16.xpose.msra.mxu0 0
        %1477 = vmatprep.mubr.bf16.mxu0 0
        %1478 = vmatmul.mubr.bf16.gmra.mrb[0].mxu0 %v1440
        %v1479 = vpop.f32.mrb[0].mxu0
        %v1480 = vadd.f32 0.0, %v1479
        %v1481 = vpop.f32.mrb[0].mxu0
        %v1482 = vpop.f32.mrb[0].mxu0
        %v1483 = vpop.f32.mrb[0].mxu0
        %1484 = vdwg.mxu0
        %v1485 = vsub.f32 %v1480, %v1236
        %v1486 = vsel %vm1438, %v1485, -inf
        %1487 = vmax.xlane.f32.xlu0 %v1486
        %v1488 = vpop.xlane.xlu0 %1487
        %v1489 = vsub.f32 %v1485, %v1488
        %v1490 = vmul.f32 %v1489, 1.442695
        %v1491 = vpow.pop %v1490
        %v1492 = vsel %vm1438, %v1491, 0.0
        %1493 = vadd.xlane.f32.xlu0 %v1492
        %v1494 = vpop.xlane.xlu0 %1493
        %v1495 = vrcp.pop %v1494
        %v1496 = vmul.f32 %v1491, %v1495
        %v1497 = vpack.c.bf16 %v1496, %v1496
        %vm1498 = vcmask 60416
        %1499 = vst.msk [vmem:[%s1207] sm:$0xf] %vm1498, %v1497
        %v1501 = vsel %vm1438, %v1497, 0
        %vm1503 = vcmask 1043456
        %v1505 = vsel %vm1503, %v1437, 0
        %1507 = vmatprep.subr.bf16.mxu0 0
        %1508 = vmatpush1.bf16.msra.mxu0 %v1505
        %1509 = vmatprep.subr.bf16.mxu0 0
        %1510 = vmatpush1.bf16.msra.mxu0 0
        %1511 = vmatprep.subr.bf16.mxu0 0
        %1512 = vmatpush1.bf16.msra.mxu0 0
        %1513 = vmatprep.subr.bf16.mxu0 0
        %1514 = vmatpush1.bf16.msra.mxu0 0
        %1515 = vmatprep.subr.bf16.mxu0 0
        %1516 = vmatpush1.bf16.msra.mxu0 0
        %1517 = vmatprep.subr.bf16.mxu0 0
        %1518 = vmatpush1.bf16.msra.mxu0 0
        %1519 = vmatprep.subr.bf16.mxu0 0
        %1520 = vmatpush1.bf16.msra.mxu0 0
        %1521 = vmatprep.subr.bf16.mxu0 0
        %1522 = vmatpush1.bf16.msra.mxu0 0
        %1523 = vmatprep.subr.bf16.mxu0 0
        %1524 = vmatpush1.bf16.msra.mxu0 0
        %1525 = vmatprep.subr.bf16.mxu0 0
        %1526 = vmatpush1.bf16.msra.mxu0 0
        %1527 = vmatprep.subr.bf16.mxu0 0
        %1528 = vmatpush1.bf16.msra.mxu0 0
        %1529 = vmatprep.subr.bf16.mxu0 0
        %1530 = vmatpush1.bf16.msra.mxu0 0
        %1531 = vmatprep.subr.bf16.mxu0 0
        %1532 = vmatpush1.bf16.msra.mxu0 0
        %1533 = vmatprep.subr.bf16.mxu0 0
        %1534 = vmatpush1.bf16.msra.mxu0 0
        %1535 = vmatprep.subr.bf16.mxu0 0
        %1536 = vmatpush1.bf16.msra.mxu0 0
        %1537 = vmatprep.subr.bf16.mxu0 0
        %1538 = vmatpush1.bf16.msra.mxu0 0
        %1539 = vmatprep.mubr.bf16.mxu0 0
        %1540 = vmatmul.mubr.bf16.gmra.mrb[0].mxu0 %v1501
        %v1541 = vpop.f32.mrb[0].mxu0
        %v1542 = vadd.f32 0.0, %v1541
        %v1543 = vpop.f32.mrb[0].mxu0
        %v1544 = vpop.f32.mrb[0].mxu0
        %v1545 = vpop.f32.mrb[0].mxu0
        %1546 = vdwg.mxu0
        %v1547 = vpack.c.bf16 %v1542, %v1542
        %1548 = vst.msk [vmem:[#allocation2] sm:$0xf] %vm1498, %v1547
        %1550 = vrot.lane.b32.xlu0 %v1435, 120
        %v1551 = vpop.permute.xlu0 %1550
        %1553 = vrot.lane.b32.xlu0 %v1436, 120
        %v1554 = vpop.permute.xlu0 %1553
        %v1556 = vsel %vm1438, %v1551, 0
        %v1559 = vsel %vm1438, %v1554, 0
        %1561 = vmatprep.subr.bf16.mxu0 0
        %1562 = vmatpush1.bf16.xpose.msra.mxu0 %v1559
        %1563 = vmatprep.subr.bf16.mxu0 0
        %1564 = vmatpush1.bf16.xpose.msra.mxu0 0
        %1565 = vmatprep.subr.bf16.mxu0 0
        %1566 = vmatpush1.bf16.xpose.msra.mxu0 0
        %1567 = vmatprep.subr.bf16.mxu0 0
        %1568 = vmatpush1.bf16.xpose.msra.mxu0 0
        %1569 = vmatprep.subr.bf16.mxu0 0
        %1570 = vmatpush1.bf16.xpose.msra.mxu0 0
        %1571 = vmatprep.subr.bf16.mxu0 0
        %1572 = vmatpush1.bf16.xpose.msra.mxu0 0
        %1573 = vmatprep.subr.bf16.mxu0 0
        %1574 = vmatpush1.bf16.xpose.msra.mxu0 0
        %1575 = vmatprep.subr.bf16.mxu0 0
        %1576 = vmatpush1.bf16.xpose.msra.mxu0 0
        %1577 = vmatprep.subr.bf16.mxu0 0
        %1578 = vmatpush1.bf16.xpose.msra.mxu0 0
        %1579 = vmatprep.subr.bf16.mxu0 0
        %1580 = vmatpush1.bf16.xpose.msra.mxu0 0
        %1581 = vmatprep.subr.bf16.mxu0 0
        %1582 = vmatpush1.bf16.xpose.msra.mxu0 0
        %1583 = vmatprep.subr.bf16.mxu0 0
        %1584 = vmatpush1.bf16.xpose.msra.mxu0 0
        %1585 = vmatprep.subr.bf16.mxu0 0
        %1586 = vmatpush1.bf16.xpose.msra.mxu0 0
        %1587 = vmatprep.subr.bf16.mxu0 0
        %1588 = vmatpush1.bf16.xpose.msra.mxu0 0
        %1589 = vmatprep.subr.bf16.mxu0 0
        %1590 = vmatpush1.bf16.xpose.msra.mxu0 0
        %1591 = vmatprep.subr.bf16.mxu0 0
        %1592 = vmatpush1.bf16.xpose.msra.mxu0 0
        %1593 = vmatprep.mubr.bf16.mxu0 0
        %1594 = vmatmul.mubr.bf16.gmra.mrb[0].mxu0 %v1556
        %v1595 = vpop.f32.mrb[0].mxu0
        %v1596 = vadd.f32 0.0, %v1595
        %v1597 = vpop.f32.mrb[0].mxu0
        %v1598 = vpop.f32.mrb[0].mxu0
        %v1599 = vpop.f32.mrb[0].mxu0
        %1600 = vdwg.mxu0
        %v1601 = vsub.f32 %v1596, %v1236
        %v1602 = vsel %vm1438, %v1601, -inf
        %1603 = vmax.xlane.f32.xlu0 %v1602
        %v1604 = vpop.xlane.xlu0 %1603
        %v1605 = vsub.f32 %v1601, %v1604
        %v1606 = vmul.f32 %v1605, 1.442695
        %v1607 = vpow.pop %v1606
        %v1608 = vsel %vm1438, %v1607, 0.0
        %1609 = vadd.xlane.f32.xlu0 %v1608
        %v1610 = vpop.xlane.xlu0 %1609
        %v1611 = vrcp.pop %v1610
        %v1612 = vmul.f32 %v1607, %v1611
        %v1613 = vpack.c.bf16 %v1612, %v1612
        %s1614 = scalar_lea.vmem %s1207, 4 [#allocation25]
        %1615 = vst.msk [vmem:[%s1614] sm:$0xf] %vm1498, %v1613
        %1617 = vrot.lane.b32.xlu0 %v1437, 120
        %v1618 = vpop.permute.xlu0 %1617
        %v1620 = vsel %vm1438, %v1613, 0
        %v1623 = vsel %vm1503, %v1618, 0
        %1625 = vmatprep.subr.bf16.mxu0 0
        %1626 = vmatpush1.bf16.msra.mxu0 %v1623
        %1627 = vmatprep.subr.bf16.mxu0 0
        %1628 = vmatpush1.bf16.msra.mxu0 0
        %1629 = vmatprep.subr.bf16.mxu0 0
        %1630 = vmatpush1.bf16.msra.mxu0 0
        %1631 = vmatprep.subr.bf16.mxu0 0
        %1632 = vmatpush1.bf16.msra.mxu0 0
        %1633 = vmatprep.subr.bf16.mxu0 0
        %1634 = vmatpush1.bf16.msra.mxu0 0
        %1635 = vmatprep.subr.bf16.mxu0 0
        %1636 = vmatpush1.bf16.msra.mxu0 0
        %1637 = vmatprep.subr.bf16.mxu0 0
        %1638 = vmatpush1.bf16.msra.mxu0 0
        %1639 = vmatprep.subr.bf16.mxu0 0
        %1640 = vmatpush1.bf16.msra.mxu0 0
        %1641 = vmatprep.subr.bf16.mxu0 0
        %1642 = vmatpush1.bf16.msra.mxu0 0
        %1643 = vmatprep.subr.bf16.mxu0 0
        %1644 = vmatpush1.bf16.msra.mxu0 0
        %1645 = vmatprep.subr.bf16.mxu0 0
        %1646 = vmatpush1.bf16.msra.mxu0 0
        %1647 = vmatprep.subr.bf16.mxu0 0
        %1648 = vmatpush1.bf16.msra.mxu0 0
        %1649 = vmatprep.subr.bf16.mxu0 0
        %1650 = vmatpush1.bf16.msra.mxu0 0
        %1651 = vmatprep.subr.bf16.mxu0 0
        %1652 = vmatpush1.bf16.msra.mxu0 0
        %1653 = vmatprep.subr.bf16.mxu0 0
        %1654 = vmatpush1.bf16.msra.mxu0 0
        %1655 = vmatprep.subr.bf16.mxu0 0
        %1656 = vmatpush1.bf16.msra.mxu0 0
        %1657 = vmatprep.mubr.bf16.mxu0 0
        %1658 = vmatmul.mubr.bf16.gmra.mrb[0].mxu0 %v1620
        %v1659 = vpop.f32.mrb[0].mxu0
        %v1660 = vadd.f32 0.0, %v1659
        %v1661 = vpop.f32.mrb[0].mxu0
        %v1662 = vpop.f32.mrb[0].mxu0
        %v1663 = vpop.f32.mrb[0].mxu0
        %1664 = vdwg.mxu0
        %v1665 = vpack.c.bf16 %v1660, %v1660
        %v1667 = vunpack.c.l.b16 %v1665
        %v1668 = vpack.c.b16 %v1667, %v1667
        %1669 = vrot.lane.b32.xlu0 %v1668, 8
        %v1670 = vpop.permute.xlu0 %1669
        %vm1672 = vcmask 126016
        %1673 = vst.msk [vmem:[#allocation2] sm:$0xf] %vm1672, %v1670
        %1674 = vrot.lane.b32.xlu0 %v1435, 112
        %v1675 = vpop.permute.xlu0 %1674
        %1676 = vrot.lane.b32.xlu0 %v1436, 112
        %v1677 = vpop.permute.xlu0 %1676
        %v1679 = vsel %vm1438, %v1675, 0
        %v1682 = vsel %vm1438, %v1677, 0
        %1684 = vmatprep.subr.bf16.mxu0 0
        %1685 = vmatpush1.bf16.xpose.msra.mxu0 %v1682
        %1686 = vmatprep.subr.bf16.mxu0 0
        %1687 = vmatpush1.bf16.xpose.msra.mxu0 0
        %1688 = vmatprep.subr.bf16.mxu0 0
        %1689 = vmatpush1.bf16.xpose.msra.mxu0 0
        %1690 = vmatprep.subr.bf16.mxu0 0
        %1691 = vmatpush1.bf16.xpose.msra.mxu0 0
        %1692 = vmatprep.subr.bf16.mxu0 0
        %1693 = vmatpush1.bf16.xpose.msra.mxu0 0
        %1694 = vmatprep.subr.bf16.mxu0 0
        %1695 = vmatpush1.bf16.xpose.msra.mxu0 0
        %1696 = vmatprep.subr.bf16.mxu0 0
        %1697 = vmatpush1.bf16.xpose.msra.mxu0 0
        %1698 = vmatprep.subr.bf16.mxu0 0
        %1699 = vmatpush1.bf16.xpose.msra.mxu0 0
        %1700 = vmatprep.subr.bf16.mxu0 0
        %1701 = vmatpush1.bf16.xpose.msra.mxu0 0
        %1702 = vmatprep.subr.bf16.mxu0 0
        %1703 = vmatpush1.bf16.xpose.msra.mxu0 0
        %1704 = vmatprep.subr.bf16.mxu0 0
        %1705 = vmatpush1.bf16.xpose.msra.mxu0 0
        %1706 = vmatprep.subr.bf16.mxu0 0
        %1707 = vmatpush1.bf16.xpose.msra.mxu0 0
        %1708 = vmatprep.subr.bf16.mxu0 0
        %1709 = vmatpush1.bf16.xpose.msra.mxu0 0
        %1710 = vmatprep.subr.bf16.mxu0 0
        %1711 = vmatpush1.bf16.xpose.msra.mxu0 0
        %1712 = vmatprep.subr.bf16.mxu0 0
        %1713 = vmatpush1.bf16.xpose.msra.mxu0 0
        %1714 = vmatprep.subr.bf16.mxu0 0
        %1715 = vmatpush1.bf16.xpose.msra.mxu0 0
        %1716 = vmatprep.mubr.bf16.mxu0 0
        %1717 = vmatmul.mubr.bf16.gmra.mrb[0].mxu0 %v1679
        %v1718 = vpop.f32.mrb[0].mxu0
        %v1719 = vadd.f32 0.0, %v1718
        %v1720 = vpop.f32.mrb[0].mxu0
        %v1721 = vpop.f32.mrb[0].mxu0
        %v1722 = vpop.f32.mrb[0].mxu0
        %1723 = vdwg.mxu0
        %v1724 = vsub.f32 %v1719, %v1236
        %v1725 = vsel %vm1438, %v1724, -inf
        %1726 = vmax.xlane.f32.xlu0 %v1725
        %v1727 = vpop.xlane.xlu0 %1726
        %v1728 = vsub.f32 %v1724, %v1727
        %v1729 = vmul.f32 %v1728, 1.442695
        %v1730 = vpow.pop %v1729
        %v1731 = vsel %vm1438, %v1730, 0.0
        %1732 = vadd.xlane.f32.xlu0 %v1731
        %v1733 = vpop.xlane.xlu0 %1732
        %v1734 = vrcp.pop %v1733
        %v1735 = vmul.f32 %v1730, %v1734
        %v1736 = vpack.c.bf16 %v1735, %v1735
        %s1737 = scalar_lea.vmem %s1207, 8 [#allocation25]
        %1738 = vst.msk [vmem:[%s1737] sm:$0xf] %vm1498, %v1736
        %1739 = vrot.lane.b32.xlu0 %v1437, 112
        %v1740 = vpop.permute.xlu0 %1739
        %v1742 = vsel %vm1438, %v1736, 0
        %v1745 = vsel %vm1503, %v1740, 0
        %1747 = vmatprep.subr.bf16.mxu0 0
        %1748 = vmatpush1.bf16.msra.mxu0 %v1745
        %1749 = vmatprep.subr.bf16.mxu0 0
        %1750 = vmatpush1.bf16.msra.mxu0 0
        %1751 = vmatprep.subr.bf16.mxu0 0
        %1752 = vmatpush1.bf16.msra.mxu0 0
        %1753 = vmatprep.subr.bf16.mxu0 0
        %1754 = vmatpush1.bf16.msra.mxu0 0
        %1755 = vmatprep.subr.bf16.mxu0 0
        %1756 = vmatpush1.bf16.msra.mxu0 0
        %1757 = vmatprep.subr.bf16.mxu0 0
        %1758 = vmatpush1.bf16.msra.mxu0 0
        %1759 = vmatprep.subr.bf16.mxu0 0
        %1760 = vmatpush1.bf16.msra.mxu0 0
        %1761 = vmatprep.subr.bf16.mxu0 0
        %1762 = vmatpush1.bf16.msra.mxu0 0
        %1763 = vmatprep.subr.bf16.mxu0 0
        %1764 = vmatpush1.bf16.msra.mxu0 0
        %1765 = vmatprep.subr.bf16.mxu0 0
        %1766 = vmatpush1.bf16.msra.mxu0 0
        %1767 = vmatprep.subr.bf16.mxu0 0
        %1768 = vmatpush1.bf16.msra.mxu0 0
        %1769 = vmatprep.subr.bf16.mxu0 0
        %1770 = vmatpush1.bf16.msra.mxu0 0
        %1771 = vmatprep.subr.bf16.mxu0 0
        %1772 = vmatpush1.bf16.msra.mxu0 0
        %1773 = vmatprep.subr.bf16.mxu0 0
        %1774 = vmatpush1.bf16.msra.mxu0 0
        %1775 = vmatprep.subr.bf16.mxu0 0
        %1776 = vmatpush1.bf16.msra.mxu0 0
        %1777 = vmatprep.subr.bf16.mxu0 0
        %1778 = vmatpush1.bf16.msra.mxu0 0
        %1779 = vmatprep.mubr.bf16.mxu0 0
        %1780 = vmatmul.mubr.bf16.gmra.mrb[0].mxu0 %v1742
        %v1781 = vpop.f32.mrb[0].mxu0
        %v1782 = vadd.f32 0.0, %v1781
        %v1783 = vpop.f32.mrb[0].mxu0
        %v1784 = vpop.f32.mrb[0].mxu0
        %v1785 = vpop.f32.mrb[0].mxu0
        %1786 = vdwg.mxu0
        %v1787 = vpack.c.bf16 %v1782, %v1782
        %v1789 = vunpack.c.l.b16 %v1787
        %v1790 = vpack.c.b16 %v1789, %v1789
        %1791 = vrot.lane.b32.xlu0 %v1790, 16
        %v1792 = vpop.permute.xlu0 %1791
        %vm1794 = vcmask 191616
        %1795 = vst.msk [vmem:[#allocation2] sm:$0xf] %vm1794, %v1792
        %1796 = vrot.lane.b32.xlu0 %v1435, 104
        %v1797 = vpop.permute.xlu0 %1796
        %1798 = vrot.lane.b32.xlu0 %v1436, 104
        %v1799 = vpop.permute.xlu0 %1798
        %v1801 = vsel %vm1438, %v1797, 0
        %v1804 = vsel %vm1438, %v1799, 0
        %1806 = vmatprep.subr.bf16.mxu0 0
        %1807 = vmatpush1.bf16.xpose.msra.mxu0 %v1804
        %1808 = vmatprep.subr.bf16.mxu0 0
        %1809 = vmatpush1.bf16.xpose.msra.mxu0 0
        %1810 = vmatprep.subr.bf16.mxu0 0
        %1811 = vmatpush1.bf16.xpose.msra.mxu0 0
        %1812 = vmatprep.subr.bf16.mxu0 0
        %1813 = vmatpush1.bf16.xpose.msra.mxu0 0
        %1814 = vmatprep.subr.bf16.mxu0 0
        %1815 = vmatpush1.bf16.xpose.msra.mxu0 0
        %1816 = vmatprep.subr.bf16.mxu0 0
        %1817 = vmatpush1.bf16.xpose.msra.mxu0 0
        %1818 = vmatprep.subr.bf16.mxu0 0
        %1819 = vmatpush1.bf16.xpose.msra.mxu0 0
        %1820 = vmatprep.subr.bf16.mxu0 0
        %1821 = vmatpush1.bf16.xpose.msra.mxu0 0
        %1822 = vmatprep.subr.bf16.mxu0 0
        %1823 = vmatpush1.bf16.xpose.msra.mxu0 0
        %1824 = vmatprep.subr.bf16.mxu0 0
        %1825 = vmatpush1.bf16.xpose.msra.mxu0 0
        %1826 = vmatprep.subr.bf16.mxu0 0
        %1827 = vmatpush1.bf16.xpose.msra.mxu0 0
        %1828 = vmatprep.subr.bf16.mxu0 0
        %1829 = vmatpush1.bf16.xpose.msra.mxu0 0
        %1830 = vmatprep.subr.bf16.mxu0 0
        %1831 = vmatpush1.bf16.xpose.msra.mxu0 0
        %1832 = vmatprep.subr.bf16.mxu0 0
        %1833 = vmatpush1.bf16.xpose.msra.mxu0 0
        %1834 = vmatprep.subr.bf16.mxu0 0
        %1835 = vmatpush1.bf16.xpose.msra.mxu0 0
        %1836 = vmatprep.subr.bf16.mxu0 0
        %1837 = vmatpush1.bf16.xpose.msra.mxu0 0
        %1838 = vmatprep.mubr.bf16.mxu0 0
        %1839 = vmatmul.mubr.bf16.gmra.mrb[0].mxu0 %v1801
        %v1840 = vpop.f32.mrb[0].mxu0
        %v1841 = vadd.f32 0.0, %v1840
        %v1842 = vpop.f32.mrb[0].mxu0
        %v1843 = vpop.f32.mrb[0].mxu0
        %v1844 = vpop.f32.mrb[0].mxu0
        %1845 = vdwg.mxu0
        %v1846 = vsub.f32 %v1841, %v1236
        %v1847 = vsel %vm1438, %v1846, -inf
        %1848 = vmax.xlane.f32.xlu0 %v1847
        %v1849 = vpop.xlane.xlu0 %1848
        %v1850 = vsub.f32 %v1846, %v1849
        %v1851 = vmul.f32 %v1850, 1.442695
        %v1852 = vpow.pop %v1851
        %v1853 = vsel %vm1438, %v1852, 0.0
        %1854 = vadd.xlane.f32.xlu0 %v1853
        %v1855 = vpop.xlane.xlu0 %1854
        %v1856 = vrcp.pop %v1855
        %v1857 = vmul.f32 %v1852, %v1856
        %v1858 = vpack.c.bf16 %v1857, %v1857
        %s1859 = scalar_lea.vmem %s1207, 12 [#allocation25]
        %1860 = vst.msk [vmem:[%s1859] sm:$0xf] %vm1498, %v1858
        %1861 = vrot.lane.b32.xlu0 %v1437, 104
        %v1862 = vpop.permute.xlu0 %1861
        %v1864 = vsel %vm1438, %v1858, 0
        %v1867 = vsel %vm1503, %v1862, 0
        %1869 = vmatprep.subr.bf16.mxu0 0
        %1870 = vmatpush1.bf16.msra.mxu0 %v1867
        %1871 = vmatprep.subr.bf16.mxu0 0
        %1872 = vmatpush1.bf16.msra.mxu0 0
        %1873 = vmatprep.subr.bf16.mxu0 0
        %1874 = vmatpush1.bf16.msra.mxu0 0
        %1875 = vmatprep.subr.bf16.mxu0 0
        %1876 = vmatpush1.bf16.msra.mxu0 0
        %1877 = vmatprep.subr.bf16.mxu0 0
        %1878 = vmatpush1.bf16.msra.mxu0 0
        %1879 = vmatprep.subr.bf16.mxu0 0
        %1880 = vmatpush1.bf16.msra.mxu0 0
        %1881 = vmatprep.subr.bf16.mxu0 0
        %1882 = vmatpush1.bf16.msra.mxu0 0
        %1883 = vmatprep.subr.bf16.mxu0 0
        %1884 = vmatpush1.bf16.msra.mxu0 0
        %1885 = vmatprep.subr.bf16.mxu0 0
        %1886 = vmatpush1.bf16.msra.mxu0 0
        %1887 = vmatprep.subr.bf16.mxu0 0
        %1888 = vmatpush1.bf16.msra.mxu0 0
        %1889 = vmatprep.subr.bf16.mxu0 0
        %1890 = vmatpush1.bf16.msra.mxu0 0
        %1891 = vmatprep.subr.bf16.mxu0 0
        %1892 = vmatpush1.bf16.msra.mxu0 0
        %1893 = vmatprep.subr.bf16.mxu0 0
        %1894 = vmatpush1.bf16.msra.mxu0 0
        %1895 = vmatprep.subr.bf16.mxu0 0
        %1896 = vmatpush1.bf16.msra.mxu0 0
        %1897 = vmatprep.subr.bf16.mxu0 0
        %1898 = vmatpush1.bf16.msra.mxu0 0
        %1899 = vmatprep.subr.bf16.mxu0 0
        %1900 = vmatpush1.bf16.msra.mxu0 0
        %1901 = vmatprep.mubr.bf16.mxu0 0
        %1902 = vmatmul.mubr.bf16.gmra.mrb[0].mxu0 %v1864
        %v1903 = vpop.f32.mrb[0].mxu0
        %v1904 = vadd.f32 0.0, %v1903
        %v1905 = vpop.f32.mrb[0].mxu0
        %v1906 = vpop.f32.mrb[0].mxu0
        %v1907 = vpop.f32.mrb[0].mxu0
        %1908 = vdwg.mxu0
        %v1909 = vpack.c.bf16 %v1904, %v1904
        %v1911 = vunpack.c.l.b16 %v1909
        %v1912 = vpack.c.b16 %v1911, %v1911
        %1913 = vrot.lane.b32.xlu0 %v1912, 24
        %v1914 = vpop.permute.xlu0 %1913
        %vm1916 = vcmask 257216
        %1917 = vst.msk [vmem:[#allocation2] sm:$0xf] %vm1916, %v1914
        %v1918 = vld [vmem:[#allocation2] sm:$0xf]
        %v1919 = vld [vmem:[#allocation9] sm:$0xf]
        %v1920 = vld [vmem:[#allocation9 + $0x4] sm:$0xf]
        %v1921 = vld [vmem:[#allocation9 + $0x8] sm:$0xf]
        %v1922 = vld [vmem:[#allocation9 + $0xc] sm:$0xf]
        %v1923 = vld [vmem:[#allocation11] sm:$0x1]
        %v1925 = vlaneseq
        %v1926 = vshrl.u32 %v1925, 7
        %v1927 = vsub.s32 0, %v1926
        %v1928 = vrot.slane %v1923, %v1927
        %v1934 = vunpack.c.l.b16 %v1919
        %v1935 = vunpack.c.l.b16 %v1920
        %v1936 = vunpack.c.l.b16 %v1921
        %v1937 = vunpack.c.l.b16 %v1922
        %v1938 = vpack.c.b16 %v1935, %v1934
        %v1939 = vpack.c.b16 %v1937, %v1936
        %v1943 = vsel %vm1265, %v1918, 0
        %1945 = vmatprep.subr.bf16.mxu0 0
        %1946 = vmatpush1.bf16.msra.mxu0 %v1938
        %1947 = vmatprep.subr.bf16.mxu0 0
        %1948 = vmatpush1.bf16.msra.mxu0 %v1939
        %1949 = vmatprep.subr.bf16.mxu0 0
        %1950 = vmatpush1.bf16.msra.mxu0 0
        %1951 = vmatprep.subr.bf16.mxu0 0
        %1952 = vmatpush1.bf16.msra.mxu0 0
        %1953 = vmatprep.subr.bf16.mxu0 0
        %1954 = vmatpush1.bf16.msra.mxu0 0
        %1955 = vmatprep.subr.bf16.mxu0 0
        %1956 = vmatpush1.bf16.msra.mxu0 0
        %1957 = vmatprep.subr.bf16.mxu0 0
        %1958 = vmatpush1.bf16.msra.mxu0 0
        %1959 = vmatprep.subr.bf16.mxu0 0
        %1960 = vmatpush1.bf16.msra.mxu0 0
        %1961 = vmatprep.subr.bf16.mxu0 0
        %1962 = vmatpush1.bf16.msra.mxu0 0
        %1963 = vmatprep.subr.bf16.mxu0 0
        %1964 = vmatpush1.bf16.msra.mxu0 0
        %1965 = vmatprep.subr.bf16.mxu0 0
        %1966 = vmatpush1.bf16.msra.mxu0 0
        %1967 = vmatprep.subr.bf16.mxu0 0
        %1968 = vmatpush1.bf16.msra.mxu0 0
        %1969 = vmatprep.subr.bf16.mxu0 0
        %1970 = vmatpush1.bf16.msra.mxu0 0
        %1971 = vmatprep.subr.bf16.mxu0 0
        %1972 = vmatpush1.bf16.msra.mxu0 0
        %1973 = vmatprep.subr.bf16.mxu0 0
        %1974 = vmatpush1.bf16.msra.mxu0 0
        %1975 = vmatprep.subr.bf16.mxu0 0
        %1976 = vmatpush1.bf16.msra.mxu0 0
        %1977 = vmatprep.mubr.bf16.mxu0 0
        %1978 = vmatmul.mubr.bf16.gmra.mrb[0].mxu0 %v1943
        %v1979 = vpop.f32.mrb[0].mxu0
        %v1980 = vadd.f32 %v1928, %v1979
        %v1981 = vpop.f32.mrb[0].mxu0
        %v1982 = vpop.f32.mrb[0].mxu0
        %v1983 = vpop.f32.mrb[0].mxu0
        %1984 = vdwg.mxu0
        %v1985 = vadd.f32 %v1980, %v1228
        %v1986 = vld [vmem:[#allocation12] sm:$0x1]
        %v1987 = vld [vmem:[#allocation14] sm:$0x1]
        %v1988 = vsel %vm1265, %v1985, 0.0
        %1989 = vadd.xlane.f32.xlu0 %v1988
        %v1990 = vpop.xlane.xlu0 %1989
        %v1991 = vrcp.pop 32.0
        %v1992 = vmul.f32 %v1990, %v1991
        %v1993 = vsub.f32 %v1985, %v1992
        %v1994 = vmul.f32 %v1993, %v1993
        %v1995 = vsel %vm1265, %v1994, 0.0
        %1996 = vadd.xlane.f32.xlu0 %v1995
        %v1997 = vpop.xlane.xlu0 %1996
        %v1998 = vmul.f32 %v1997, %v1991
        %v1999 = vadd.f32 %v1998, 1e-05
        %v2000 = vrsqrt.pop %v1999
        %v2001 = vmul.f32 %v1993, %v2000
        %v2003 = vlaneseq
        %v2004 = vshrl.u32 %v2003, 7
        %v2005 = vsub.s32 0, %v2004
        %v2006 = vrot.slane %v1986, %v2005
        %v2008 = vmul.f32 %v2001, %v2006
        %v2010 = vlaneseq
        %v2011 = vshrl.u32 %v2010, 7
        %v2012 = vsub.s32 0, %v2011
        %v2013 = vrot.slane %v1987, %v2012
        %v2015 = vadd.f32 %v2008, %v2013
        %2017 = vset.pattern.permute.xlu0 0
        %2018 = vperm.xlu0 %2017, %v1230
        %v2019 = vpop.permute.xlu0 %2018
        %v2021 = vmul.f32 %v2015, %v2019
        %v2022 = vpack.c.bf16 %v2021, %v2021
        %v2023 = vpack.c.bf16 %v1229, %v1229
        %v2024 = vld [vmem:[%s29] sm:$0xf]
        %v2025 = vld [vmem:[%s29 + $0x4] sm:$0xf]
        %v2026 = vld [vmem:[%s29 + $0x8] sm:$0xf]
        %v2027 = vld [vmem:[%s29 + $0xc] sm:$0xf]
        %v2028 = vld [vmem:[#allocation15] sm:$0x1]
        %v2030 = vlaneseq
        %v2031 = vshrl.u32 %v2030, 7
        %v2032 = vsub.s32 0, %v2031
        %v2033 = vrot.slane %v2028, %v2032
        %v2039 = vunpack.c.l.b16 %v2024
        %v2040 = vunpack.c.l.b16 %v2025
        %v2041 = vunpack.c.l.b16 %v2026
        %v2042 = vunpack.c.l.b16 %v2027
        %v2043 = vpack.c.b16 %v2040, %v2039
        %v2044 = vpack.c.b16 %v2042, %v2041
        %v2048 = vsel %vm1265, %v2022, 0
        %2050 = vmatprep.subr.bf16.mxu0 0
        %2051 = vmatpush1.bf16.msra.mxu0 %v2043
        %2052 = vmatprep.subr.bf16.mxu0 0
        %2053 = vmatpush1.bf16.msra.mxu0 %v2044
        %2054 = vmatprep.subr.bf16.mxu0 0
        %2055 = vmatpush1.bf16.msra.mxu0 0
        %2056 = vmatprep.subr.bf16.mxu0 0
        %2057 = vmatpush1.bf16.msra.mxu0 0
        %2058 = vmatprep.subr.bf16.mxu0 0
        %2059 = vmatpush1.bf16.msra.mxu0 0
        %2060 = vmatprep.subr.bf16.mxu0 0
        %2061 = vmatpush1.bf16.msra.mxu0 0
        %2062 = vmatprep.subr.bf16.mxu0 0
        %2063 = vmatpush1.bf16.msra.mxu0 0
        %2064 = vmatprep.subr.bf16.mxu0 0
        %2065 = vmatpush1.bf16.msra.mxu0 0
        %2066 = vmatprep.subr.bf16.mxu0 0
        %2067 = vmatpush1.bf16.msra.mxu0 0
        %2068 = vmatprep.subr.bf16.mxu0 0
        %2069 = vmatpush1.bf16.msra.mxu0 0
        %2070 = vmatprep.subr.bf16.mxu0 0
        %2071 = vmatpush1.bf16.msra.mxu0 0
        %2072 = vmatprep.subr.bf16.mxu0 0
        %2073 = vmatpush1.bf16.msra.mxu0 0
        %2074 = vmatprep.subr.bf16.mxu0 0
        %2075 = vmatpush1.bf16.msra.mxu0 0
        %2076 = vmatprep.subr.bf16.mxu0 0
        %2077 = vmatpush1.bf16.msra.mxu0 0
        %2078 = vmatprep.subr.bf16.mxu0 0
        %2079 = vmatpush1.bf16.msra.mxu0 0
        %2080 = vmatprep.subr.bf16.mxu0 0
        %2081 = vmatpush1.bf16.msra.mxu0 0
        %2082 = vmatprep.mubr.bf16.mxu0 0
        %2083 = vmatmul.mubr.bf16.gmra.mrb[0].mxu0 %v2048
        %v2084 = vpop.f32.mrb[0].mxu0
        %v2085 = vadd.f32 %v2033, %v2084
        %v2086 = vpop.f32.mrb[0].mxu0
        %v2087 = vpop.f32.mrb[0].mxu0
        %v2088 = vpop.f32.mrb[0].mxu0
        %2089 = vdwg.mxu0
        %v2090 = vld [vmem:[#allocation17] sm:$0xf]
        %v2091 = vld [vmem:[#allocation17 + $0x4] sm:$0xf]
        %v2092 = vld [vmem:[#allocation17 + $0x8] sm:$0xf]
        %v2093 = vld [vmem:[#allocation17 + $0xc] sm:$0xf]
        %v2094 = vld [vmem:[#allocation18] sm:$0x1]
        %v2096 = vlaneseq
        %v2097 = vshrl.u32 %v2096, 7
        %v2098 = vsub.s32 0, %v2097
        %v2099 = vrot.slane %v2094, %v2098
        %v2105 = vunpack.c.l.b16 %v2090
        %v2106 = vunpack.c.l.b16 %v2091
        %v2107 = vunpack.c.l.b16 %v2092
        %v2108 = vunpack.c.l.b16 %v2093
        %v2109 = vpack.c.b16 %v2106, %v2105
        %v2110 = vpack.c.b16 %v2108, %v2107
        %v2114 = vsel %vm1265, %v2023, 0
        %2116 = vmatprep.subr.bf16.mxu0 0
        %2117 = vmatpush1.bf16.msra.mxu0 %v2109
        %2118 = vmatprep.subr.bf16.mxu0 0
        %2119 = vmatpush1.bf16.msra.mxu0 %v2110
        %2120 = vmatprep.subr.bf16.mxu0 0
        %2121 = vmatpush1.bf16.msra.mxu0 0
        %2122 = vmatprep.subr.bf16.mxu0 0
        %2123 = vmatpush1.bf16.msra.mxu0 0
        %2124 = vmatprep.subr.bf16.mxu0 0
        %2125 = vmatpush1.bf16.msra.mxu0 0
        %2126 = vmatprep.subr.bf16.mxu0 0
        %2127 = vmatpush1.bf16.msra.mxu0 0
        %2128 = vmatprep.subr.bf16.mxu0 0
        %2129 = vmatpush1.bf16.msra.mxu0 0
        %2130 = vmatprep.subr.bf16.mxu0 0
        %2131 = vmatpush1.bf16.msra.mxu0 0
        %2132 = vmatprep.subr.bf16.mxu0 0
        %2133 = vmatpush1.bf16.msra.mxu0 0
        %2134 = vmatprep.subr.bf16.mxu0 0
        %2135 = vmatpush1.bf16.msra.mxu0 0
        %2136 = vmatprep.subr.bf16.mxu0 0
        %2137 = vmatpush1.bf16.msra.mxu0 0
        %2138 = vmatprep.subr.bf16.mxu0 0
        %2139 = vmatpush1.bf16.msra.mxu0 0
        %2140 = vmatprep.subr.bf16.mxu0 0
        %2141 = vmatpush1.bf16.msra.mxu0 0
        %2142 = vmatprep.subr.bf16.mxu0 0
        %2143 = vmatpush1.bf16.msra.mxu0 0
        %2144 = vmatprep.subr.bf16.mxu0 0
        %2145 = vmatpush1.bf16.msra.mxu0 0
        %2146 = vmatprep.subr.bf16.mxu0 0
        %2147 = vmatpush1.bf16.msra.mxu0 0
        %2148 = vmatprep.mubr.bf16.mxu0 0
        %2149 = vmatmul.mubr.bf16.gmra.mrb[0].mxu0 %v2114
        %v2150 = vpop.f32.mrb[0].mxu0
        %v2151 = vadd.f32 %v2099, %v2150
        %v2152 = vpop.f32.mrb[0].mxu0
        %v2153 = vpop.f32.mrb[0].mxu0
        %v2154 = vpop.f32.mrb[0].mxu0
        %2155 = vdwg.mxu0
        %v2156 = vld [vmem:[%s37] sm:$0xf]
        %v2157 = vld [vmem:[%s37 + $0x4] sm:$0xf]
        %v2158 = vld [vmem:[%s37 + $0x8] sm:$0xf]
        %v2159 = vld [vmem:[%s37 + $0xc] sm:$0xf]
        %v2160 = vld [vmem:[#allocation20] sm:$0x1]
        %v2162 = vlaneseq
        %v2163 = vshrl.u32 %v2162, 7
        %v2164 = vsub.s32 0, %v2163
        %v2165 = vrot.slane %v2160, %v2164
        %v2171 = vunpack.c.l.b16 %v2156
        %v2172 = vunpack.c.l.b16 %v2157
        %v2173 = vunpack.c.l.b16 %v2158
        %v2174 = vunpack.c.l.b16 %v2159
        %v2175 = vpack.c.b16 %v2172, %v2171
        %v2176 = vpack.c.b16 %v2174, %v2173
        %2179 = vmatprep.subr.bf16.mxu0 0
        %2180 = vmatpush1.bf16.msra.mxu0 %v2175
        %2181 = vmatprep.subr.bf16.mxu0 0
        %2182 = vmatpush1.bf16.msra.mxu0 %v2176
        %2183 = vmatprep.subr.bf16.mxu0 0
        %2184 = vmatpush1.bf16.msra.mxu0 0
        %2185 = vmatprep.subr.bf16.mxu0 0
        %2186 = vmatpush1.bf16.msra.mxu0 0
        %2187 = vmatprep.subr.bf16.mxu0 0
        %2188 = vmatpush1.bf16.msra.mxu0 0
        %2189 = vmatprep.subr.bf16.mxu0 0
        %2190 = vmatpush1.bf16.msra.mxu0 0
        %2191 = vmatprep.subr.bf16.mxu0 0
        %2192 = vmatpush1.bf16.msra.mxu0 0
        %2193 = vmatprep.subr.bf16.mxu0 0
        %2194 = vmatpush1.bf16.msra.mxu0 0
        %2195 = vmatprep.subr.bf16.mxu0 0
        %2196 = vmatpush1.bf16.msra.mxu0 0
        %2197 = vmatprep.subr.bf16.mxu0 0
        %2198 = vmatpush1.bf16.msra.mxu0 0
        %2199 = vmatprep.subr.bf16.mxu0 0
        %2200 = vmatpush1.bf16.msra.mxu0 0
        %2201 = vmatprep.subr.bf16.mxu0 0
        %2202 = vmatpush1.bf16.msra.mxu0 0
        %2203 = vmatprep.subr.bf16.mxu0 0
        %2204 = vmatpush1.bf16.msra.mxu0 0
        %2205 = vmatprep.subr.bf16.mxu0 0
        %2206 = vmatpush1.bf16.msra.mxu0 0
        %2207 = vmatprep.subr.bf16.mxu0 0
        %2208 = vmatpush1.bf16.msra.mxu0 0
        %2209 = vmatprep.subr.bf16.mxu0 0
        %2210 = vmatpush1.bf16.msra.mxu0 0
        %2211 = vmatprep.mubr.bf16.mxu0 0
        %2212 = vmatmul.mubr.bf16.gmra.mrb[0].mxu0 %v2114
        %v2213 = vpop.f32.mrb[0].mxu0
        %v2214 = vadd.f32 %v2165, %v2213
        %v2215 = vpop.f32.mrb[0].mxu0
        %v2216 = vpop.f32.mrb[0].mxu0
        %v2217 = vpop.f32.mrb[0].mxu0
        %2218 = vdwg.mxu0
        %v2219 = vpack.c.bf16 %v2085, %v2085
        %v2220 = vpack.c.bf16 %v2151, %v2151
        %v2221 = vpack.c.bf16 %v2214, %v2214
        %v2223 = vsel %vm1438, %v2219, 0
        %v2226 = vsel %vm1438, %v2220, 0
        %2228 = vmatprep.subr.bf16.mxu0 0
        %2229 = vmatpush1.bf16.xpose.msra.mxu0 %v2226
        %2230 = vmatprep.subr.bf16.mxu0 0
        %2231 = vmatpush1.bf16.xpose.msra.mxu0 0
        %2232 = vmatprep.subr.bf16.mxu0 0
        %2233 = vmatpush1.bf16.xpose.msra.mxu0 0
        %2234 = vmatprep.subr.bf16.mxu0 0
        %2235 = vmatpush1.bf16.xpose.msra.mxu0 0
        %2236 = vmatprep.subr.bf16.mxu0 0
        %2237 = vmatpush1.bf16.xpose.msra.mxu0 0
        %2238 = vmatprep.subr.bf16.mxu0 0
        %2239 = vmatpush1.bf16.xpose.msra.mxu0 0
        %2240 = vmatprep.subr.bf16.mxu0 0
        %2241 = vmatpush1.bf16.xpose.msra.mxu0 0
        %2242 = vmatprep.subr.bf16.mxu0 0
        %2243 = vmatpush1.bf16.xpose.msra.mxu0 0
        %2244 = vmatprep.subr.bf16.mxu0 0
        %2245 = vmatpush1.bf16.xpose.msra.mxu0 0
        %2246 = vmatprep.subr.bf16.mxu0 0
        %2247 = vmatpush1.bf16.xpose.msra.mxu0 0
        %2248 = vmatprep.subr.bf16.mxu0 0
        %2249 = vmatpush1.bf16.xpose.msra.mxu0 0
        %2250 = vmatprep.subr.bf16.mxu0 0
        %2251 = vmatpush1.bf16.xpose.msra.mxu0 0
        %2252 = vmatprep.subr.bf16.mxu0 0
        %2253 = vmatpush1.bf16.xpose.msra.mxu0 0
        %2254 = vmatprep.subr.bf16.mxu0 0
        %2255 = vmatpush1.bf16.xpose.msra.mxu0 0
        %2256 = vmatprep.subr.bf16.mxu0 0
        %2257 = vmatpush1.bf16.xpose.msra.mxu0 0
        %2258 = vmatprep.subr.bf16.mxu0 0
        %2259 = vmatpush1.bf16.xpose.msra.mxu0 0
        %2260 = vmatprep.mubr.bf16.mxu0 0
        %2261 = vmatmul.mubr.bf16.gmra.mrb[0].mxu0 %v2223
        %v2262 = vpop.f32.mrb[0].mxu0
        %v2263 = vadd.f32 0.0, %v2262
        %v2264 = vpop.f32.mrb[0].mxu0
        %v2265 = vpop.f32.mrb[0].mxu0
        %v2266 = vpop.f32.mrb[0].mxu0
        %2267 = vdwg.mxu0
        %v2268 = vsub.f32 %v2263, %v1240
        %v2269 = vsel %vm1438, %v2268, -inf
        %2270 = vmax.xlane.f32.xlu0 %v2269
        %v2271 = vpop.xlane.xlu0 %2270
        %v2272 = vsub.f32 %v2268, %v2271
        %v2273 = vmul.f32 %v2272, 1.442695
        %v2274 = vpow.pop %v2273
        %v2275 = vsel %vm1438, %v2274, 0.0
        %2276 = vadd.xlane.f32.xlu0 %v2275
        %v2277 = vpop.xlane.xlu0 %2276
        %v2278 = vrcp.pop %v2277
        %v2279 = vmul.f32 %v2274, %v2278
        %v2280 = vpack.c.bf16 %v2279, %v2279
        %2281 = vst.msk [vmem:[%s1214] sm:$0xf] %vm1498, %v2280
        %v2283 = vsel %vm1438, %v2280, 0
        %v2286 = vsel %vm1503, %v2221, 0
        %2288 = vmatprep.subr.bf16.mxu0 0
        %2289 = vmatpush1.bf16.msra.mxu0 %v2286
        %2290 = vmatprep.subr.bf16.mxu0 0
        %2291 = vmatpush1.bf16.msra.mxu0 0
        %2292 = vmatprep.subr.bf16.mxu0 0
        %2293 = vmatpush1.bf16.msra.mxu0 0
        %2294 = vmatprep.subr.bf16.mxu0 0
        %2295 = vmatpush1.bf16.msra.mxu0 0
        %2296 = vmatprep.subr.bf16.mxu0 0
        %2297 = vmatpush1.bf16.msra.mxu0 0
        %2298 = vmatprep.subr.bf16.mxu0 0
        %2299 = vmatpush1.bf16.msra.mxu0 0
        %2300 = vmatprep.subr.bf16.mxu0 0
        %2301 = vmatpush1.bf16.msra.mxu0 0
        %2302 = vmatprep.subr.bf16.mxu0 0
        %2303 = vmatpush1.bf16.msra.mxu0 0
        %2304 = vmatprep.subr.bf16.mxu0 0
        %2305 = vmatpush1.bf16.msra.mxu0 0
        %2306 = vmatprep.subr.bf16.mxu0 0
        %2307 = vmatpush1.bf16.msra.mxu0 0
        %2308 = vmatprep.subr.bf16.mxu0 0
        %2309 = vmatpush1.bf16.msra.mxu0 0
        %2310 = vmatprep.subr.bf16.mxu0 0
        %2311 = vmatpush1.bf16.msra.mxu0 0
        %2312 = vmatprep.subr.bf16.mxu0 0
        %2313 = vmatpush1.bf16.msra.mxu0 0
        %2314 = vmatprep.subr.bf16.mxu0 0
        %2315 = vmatpush1.bf16.msra.mxu0 0
        %2316 = vmatprep.subr.bf16.mxu0 0
        %2317 = vmatpush1.bf16.msra.mxu0 0
        %2318 = vmatprep.subr.bf16.mxu0 0
        %2319 = vmatpush1.bf16.msra.mxu0 0
        %2320 = vmatprep.mubr.bf16.mxu0 0
        %2321 = vmatmul.mubr.bf16.gmra.mrb[0].mxu0 %v2283
        %v2322 = vpop.f32.mrb[0].mxu0
        %v2323 = vadd.f32 0.0, %v2322
        %v2324 = vpop.f32.mrb[0].mxu0
        %v2325 = vpop.f32.mrb[0].mxu0
        %v2326 = vpop.f32.mrb[0].mxu0
        %2327 = vdwg.mxu0
        %v2328 = vpack.c.bf16 %v2323, %v2323
        %2329 = vst.msk [vmem:[#allocation2] sm:$0xf] %vm1498, %v2328
        %2331 = vrot.lane.b32.xlu0 %v2219, 120
        %v2332 = vpop.permute.xlu0 %2331
        %2334 = vrot.lane.b32.xlu0 %v2220, 120
        %v2335 = vpop.permute.xlu0 %2334
        %v2337 = vsel %vm1438, %v2332, 0
        %v2340 = vsel %vm1438, %v2335, 0
        %2342 = vmatprep.subr.bf16.mxu0 0
        %2343 = vmatpush1.bf16.xpose.msra.mxu0 %v2340
        %2344 = vmatprep.subr.bf16.mxu0 0
        %2345 = vmatpush1.bf16.xpose.msra.mxu0 0
        %2346 = vmatprep.subr.bf16.mxu0 0
        %2347 = vmatpush1.bf16.xpose.msra.mxu0 0
        %2348 = vmatprep.subr.bf16.mxu0 0
        %2349 = vmatpush1.bf16.xpose.msra.mxu0 0
        %2350 = vmatprep.subr.bf16.mxu0 0
        %2351 = vmatpush1.bf16.xpose.msra.mxu0 0
        %2352 = vmatprep.subr.bf16.mxu0 0
        %2353 = vmatpush1.bf16.xpose.msra.mxu0 0
        %2354 = vmatprep.subr.bf16.mxu0 0
        %2355 = vmatpush1.bf16.xpose.msra.mxu0 0
        %2356 = vmatprep.subr.bf16.mxu0 0
        %2357 = vmatpush1.bf16.xpose.msra.mxu0 0
        %2358 = vmatprep.subr.bf16.mxu0 0
        %2359 = vmatpush1.bf16.xpose.msra.mxu0 0
        %2360 = vmatprep.subr.bf16.mxu0 0
        %2361 = vmatpush1.bf16.xpose.msra.mxu0 0
        %2362 = vmatprep.subr.bf16.mxu0 0
        %2363 = vmatpush1.bf16.xpose.msra.mxu0 0
        %2364 = vmatprep.subr.bf16.mxu0 0
        %2365 = vmatpush1.bf16.xpose.msra.mxu0 0
        %2366 = vmatprep.subr.bf16.mxu0 0
        %2367 = vmatpush1.bf16.xpose.msra.mxu0 0
        %2368 = vmatprep.subr.bf16.mxu0 0
        %2369 = vmatpush1.bf16.xpose.msra.mxu0 0
        %2370 = vmatprep.subr.bf16.mxu0 0
        %2371 = vmatpush1.bf16.xpose.msra.mxu0 0
        %2372 = vmatprep.subr.bf16.mxu0 0
        %2373 = vmatpush1.bf16.xpose.msra.mxu0 0
        %2374 = vmatprep.mubr.bf16.mxu0 0
        %2375 = vmatmul.mubr.bf16.gmra.mrb[0].mxu0 %v2337
        %v2376 = vpop.f32.mrb[0].mxu0
        %v2377 = vadd.f32 0.0, %v2376
        %v2378 = vpop.f32.mrb[0].mxu0
        %v2379 = vpop.f32.mrb[0].mxu0
        %v2380 = vpop.f32.mrb[0].mxu0
        %2381 = vdwg.mxu0
        %v2382 = vsub.f32 %v2377, %v1240
        %v2383 = vsel %vm1438, %v2382, -inf
        %2384 = vmax.xlane.f32.xlu0 %v2383
        %v2385 = vpop.xlane.xlu0 %2384
        %v2386 = vsub.f32 %v2382, %v2385
        %v2387 = vmul.f32 %v2386, 1.442695
        %v2388 = vpow.pop %v2387
        %v2389 = vsel %vm1438, %v2388, 0.0
        %2390 = vadd.xlane.f32.xlu0 %v2389
        %v2391 = vpop.xlane.xlu0 %2390
        %v2392 = vrcp.pop %v2391
        %v2393 = vmul.f32 %v2388, %v2392
        %v2394 = vpack.c.bf16 %v2393, %v2393
        %s2395 = scalar_lea.vmem %s1214, 4 [#allocation27]
        %2396 = vst.msk [vmem:[%s2395] sm:$0xf] %vm1498, %v2394
        %2398 = vrot.lane.b32.xlu0 %v2221, 120
        %v2399 = vpop.permute.xlu0 %2398
        %v2401 = vsel %vm1438, %v2394, 0
        %v2404 = vsel %vm1503, %v2399, 0
        %2406 = vmatprep.subr.bf16.mxu0 0
        %2407 = vmatpush1.bf16.msra.mxu0 %v2404
        %2408 = vmatprep.subr.bf16.mxu0 0
        %2409 = vmatpush1.bf16.msra.mxu0 0
        %2410 = vmatprep.subr.bf16.mxu0 0
        %2411 = vmatpush1.bf16.msra.mxu0 0
        %2412 = vmatprep.subr.bf16.mxu0 0
        %2413 = vmatpush1.bf16.msra.mxu0 0
        %2414 = vmatprep.subr.bf16.mxu0 0
        %2415 = vmatpush1.bf16.msra.mxu0 0
        %2416 = vmatprep.subr.bf16.mxu0 0
        %2417 = vmatpush1.bf16.msra.mxu0 0
        %2418 = vmatprep.subr.bf16.mxu0 0
        %2419 = vmatpush1.bf16.msra.mxu0 0
        %2420 = vmatprep.subr.bf16.mxu0 0
        %2421 = vmatpush1.bf16.msra.mxu0 0
        %2422 = vmatprep.subr.bf16.mxu0 0
        %2423 = vmatpush1.bf16.msra.mxu0 0
        %2424 = vmatprep.subr.bf16.mxu0 0
        %2425 = vmatpush1.bf16.msra.mxu0 0
        %2426 = vmatprep.subr.bf16.mxu0 0
        %2427 = vmatpush1.bf16.msra.mxu0 0
        %2428 = vmatprep.subr.bf16.mxu0 0
        %2429 = vmatpush1.bf16.msra.mxu0 0
        %2430 = vmatprep.subr.bf16.mxu0 0
        %2431 = vmatpush1.bf16.msra.mxu0 0
        %2432 = vmatprep.subr.bf16.mxu0 0
        %2433 = vmatpush1.bf16.msra.mxu0 0
        %2434 = vmatprep.subr.bf16.mxu0 0
        %2435 = vmatpush1.bf16.msra.mxu0 0
        %2436 = vmatprep.subr.bf16.mxu0 0
        %2437 = vmatpush1.bf16.msra.mxu0 0
        %2438 = vmatprep.mubr.bf16.mxu0 0
        %2439 = vmatmul.mubr.bf16.gmra.mrb[0].mxu0 %v2401
        %v2440 = vpop.f32.mrb[0].mxu0
        %v2441 = vadd.f32 0.0, %v2440
        %v2442 = vpop.f32.mrb[0].mxu0
        %v2443 = vpop.f32.mrb[0].mxu0
        %v2444 = vpop.f32.mrb[0].mxu0
        %2445 = vdwg.mxu0
        %v2446 = vpack.c.bf16 %v2441, %v2441
        %v2448 = vunpack.c.l.b16 %v2446
        %v2449 = vpack.c.b16 %v2448, %v2448
        %2450 = vrot.lane.b32.xlu0 %v2449, 8
        %v2451 = vpop.permute.xlu0 %2450
        %2453 = vst.msk [vmem:[#allocation2] sm:$0xf] %vm1672, %v2451
        %2454 = vrot.lane.b32.xlu0 %v2219, 112
        %v2455 = vpop.permute.xlu0 %2454
        %2456 = vrot.lane.b32.xlu0 %v2220, 112
        %v2457 = vpop.permute.xlu0 %2456
        %v2459 = vsel %vm1438, %v2455, 0
        %v2462 = vsel %vm1438, %v2457, 0
        %2464 = vmatprep.subr.bf16.mxu0 0
        %2465 = vmatpush1.bf16.xpose.msra.mxu0 %v2462
        %2466 = vmatprep.subr.bf16.mxu0 0
        %2467 = vmatpush1.bf16.xpose.msra.mxu0 0
        %2468 = vmatprep.subr.bf16.mxu0 0
        %2469 = vmatpush1.bf16.xpose.msra.mxu0 0
        %2470 = vmatprep.subr.bf16.mxu0 0
        %2471 = vmatpush1.bf16.xpose.msra.mxu0 0
        %2472 = vmatprep.subr.bf16.mxu0 0
        %2473 = vmatpush1.bf16.xpose.msra.mxu0 0
        %2474 = vmatprep.subr.bf16.mxu0 0
        %2475 = vmatpush1.bf16.xpose.msra.mxu0 0
        %2476 = vmatprep.subr.bf16.mxu0 0
        %2477 = vmatpush1.bf16.xpose.msra.mxu0 0
        %2478 = vmatprep.subr.bf16.mxu0 0
        %2479 = vmatpush1.bf16.xpose.msra.mxu0 0
        %2480 = vmatprep.subr.bf16.mxu0 0
        %2481 = vmatpush1.bf16.xpose.msra.mxu0 0
        %2482 = vmatprep.subr.bf16.mxu0 0
        %2483 = vmatpush1.bf16.xpose.msra.mxu0 0
        %2484 = vmatprep.subr.bf16.mxu0 0
        %2485 = vmatpush1.bf16.xpose.msra.mxu0 0
        %2486 = vmatprep.subr.bf16.mxu0 0
        %2487 = vmatpush1.bf16.xpose.msra.mxu0 0
        %2488 = vmatprep.subr.bf16.mxu0 0
        %2489 = vmatpush1.bf16.xpose.msra.mxu0 0
        %2490 = vmatprep.subr.bf16.mxu0 0
        %2491 = vmatpush1.bf16.xpose.msra.mxu0 0
        %2492 = vmatprep.subr.bf16.mxu0 0
        %2493 = vmatpush1.bf16.xpose.msra.mxu0 0
        %2494 = vmatprep.subr.bf16.mxu0 0
        %2495 = vmatpush1.bf16.xpose.msra.mxu0 0
        %2496 = vmatprep.mubr.bf16.mxu0 0
        %2497 = vmatmul.mubr.bf16.gmra.mrb[0].mxu0 %v2459
        %v2498 = vpop.f32.mrb[0].mxu0
        %v2499 = vadd.f32 0.0, %v2498
        %v2500 = vpop.f32.mrb[0].mxu0
        %v2501 = vpop.f32.mrb[0].mxu0
        %v2502 = vpop.f32.mrb[0].mxu0
        %2503 = vdwg.mxu0
        %v2504 = vsub.f32 %v2499, %v1240
        %v2505 = vsel %vm1438, %v2504, -inf
        %2506 = vmax.xlane.f32.xlu0 %v2505
        %v2507 = vpop.xlane.xlu0 %2506
        %v2508 = vsub.f32 %v2504, %v2507
        %v2509 = vmul.f32 %v2508, 1.442695
        %v2510 = vpow.pop %v2509
        %v2511 = vsel %vm1438, %v2510, 0.0
        %2512 = vadd.xlane.f32.xlu0 %v2511
        %v2513 = vpop.xlane.xlu0 %2512
        %v2514 = vrcp.pop %v2513
        %v2515 = vmul.f32 %v2510, %v2514
        %v2516 = vpack.c.bf16 %v2515, %v2515
        %s2517 = scalar_lea.vmem %s1214, 8 [#allocation27]
        %2518 = vst.msk [vmem:[%s2517] sm:$0xf] %vm1498, %v2516
        %2519 = vrot.lane.b32.xlu0 %v2221, 112
        %v2520 = vpop.permute.xlu0 %2519
        %v2522 = vsel %vm1438, %v2516, 0
        %v2525 = vsel %vm1503, %v2520, 0
        %2527 = vmatprep.subr.bf16.mxu0 0
        %2528 = vmatpush1.bf16.msra.mxu0 %v2525
        %2529 = vmatprep.subr.bf16.mxu0 0
        %2530 = vmatpush1.bf16.msra.mxu0 0
        %2531 = vmatprep.subr.bf16.mxu0 0
        %2532 = vmatpush1.bf16.msra.mxu0 0
        %2533 = vmatprep.subr.bf16.mxu0 0
        %2534 = vmatpush1.bf16.msra.mxu0 0
        %2535 = vmatprep.subr.bf16.mxu0 0
        %2536 = vmatpush1.bf16.msra.mxu0 0
        %2537 = vmatprep.subr.bf16.mxu0 0
        %2538 = vmatpush1.bf16.msra.mxu0 0
        %2539 = vmatprep.subr.bf16.mxu0 0
        %2540 = vmatpush1.bf16.msra.mxu0 0
        %2541 = vmatprep.subr.bf16.mxu0 0
        %2542 = vmatpush1.bf16.msra.mxu0 0
        %2543 = vmatprep.subr.bf16.mxu0 0
        %2544 = vmatpush1.bf16.msra.mxu0 0
        %2545 = vmatprep.subr.bf16.mxu0 0
        %2546 = vmatpush1.bf16.msra.mxu0 0
        %2547 = vmatprep.subr.bf16.mxu0 0
        %2548 = vmatpush1.bf16.msra.mxu0 0
        %2549 = vmatprep.subr.bf16.mxu0 0
        %2550 = vmatpush1.bf16.msra.mxu0 0
        %2551 = vmatprep.subr.bf16.mxu0 0
        %2552 = vmatpush1.bf16.msra.mxu0 0
        %2553 = vmatprep.subr.bf16.mxu0 0
        %2554 = vmatpush1.bf16.msra.mxu0 0
        %2555 = vmatprep.subr.bf16.mxu0 0
        %2556 = vmatpush1.bf16.msra.mxu0 0
        %2557 = vmatprep.subr.bf16.mxu0 0
        %2558 = vmatpush1.bf16.msra.mxu0 0
        %2559 = vmatprep.mubr.bf16.mxu0 0
        %2560 = vmatmul.mubr.bf16.gmra.mrb[0].mxu0 %v2522
        %v2561 = vpop.f32.mrb[0].mxu0
        %v2562 = vadd.f32 0.0, %v2561
        %v2563 = vpop.f32.mrb[0].mxu0
        %v2564 = vpop.f32.mrb[0].mxu0
        %v2565 = vpop.f32.mrb[0].mxu0
        %2566 = vdwg.mxu0
        %v2567 = vpack.c.bf16 %v2562, %v2562
        %v2569 = vunpack.c.l.b16 %v2567
        %v2570 = vpack.c.b16 %v2569, %v2569
        %2571 = vrot.lane.b32.xlu0 %v2570, 16
        %v2572 = vpop.permute.xlu0 %2571
        %2574 = vst.msk [vmem:[#allocation2] sm:$0xf] %vm1794, %v2572
        %2575 = vrot.lane.b32.xlu0 %v2219, 104
        %v2576 = vpop.permute.xlu0 %2575
        %2577 = vrot.lane.b32.xlu0 %v2220, 104
        %v2578 = vpop.permute.xlu0 %2577
        %v2580 = vsel %vm1438, %v2576, 0
        %v2583 = vsel %vm1438, %v2578, 0
        %2585 = vmatprep.subr.bf16.mxu0 0
        %2586 = vmatpush1.bf16.xpose.msra.mxu0 %v2583
        %2587 = vmatprep.subr.bf16.mxu0 0
        %2588 = vmatpush1.bf16.xpose.msra.mxu0 0
        %2589 = vmatprep.subr.bf16.mxu0 0
        %2590 = vmatpush1.bf16.xpose.msra.mxu0 0
        %2591 = vmatprep.subr.bf16.mxu0 0
        %2592 = vmatpush1.bf16.xpose.msra.mxu0 0
        %2593 = vmatprep.subr.bf16.mxu0 0
        %2594 = vmatpush1.bf16.xpose.msra.mxu0 0
        %2595 = vmatprep.subr.bf16.mxu0 0
        %2596 = vmatpush1.bf16.xpose.msra.mxu0 0
        %2597 = vmatprep.subr.bf16.mxu0 0
        %2598 = vmatpush1.bf16.xpose.msra.mxu0 0
        %2599 = vmatprep.subr.bf16.mxu0 0
        %2600 = vmatpush1.bf16.xpose.msra.mxu0 0
        %2601 = vmatprep.subr.bf16.mxu0 0
        %2602 = vmatpush1.bf16.xpose.msra.mxu0 0
        %2603 = vmatprep.subr.bf16.mxu0 0
        %2604 = vmatpush1.bf16.xpose.msra.mxu0 0
        %2605 = vmatprep.subr.bf16.mxu0 0
        %2606 = vmatpush1.bf16.xpose.msra.mxu0 0
        %2607 = vmatprep.subr.bf16.mxu0 0
        %2608 = vmatpush1.bf16.xpose.msra.mxu0 0
        %2609 = vmatprep.subr.bf16.mxu0 0
        %2610 = vmatpush1.bf16.xpose.msra.mxu0 0
        %2611 = vmatprep.subr.bf16.mxu0 0
        %2612 = vmatpush1.bf16.xpose.msra.mxu0 0
        %2613 = vmatprep.subr.bf16.mxu0 0
        %2614 = vmatpush1.bf16.xpose.msra.mxu0 0
        %2615 = vmatprep.subr.bf16.mxu0 0
        %2616 = vmatpush1.bf16.xpose.msra.mxu0 0
        %2617 = vmatprep.mubr.bf16.mxu0 0
        %2618 = vmatmul.mubr.bf16.gmra.mrb[0].mxu0 %v2580
        %v2619 = vpop.f32.mrb[0].mxu0
        %v2620 = vadd.f32 0.0, %v2619
        %v2621 = vpop.f32.mrb[0].mxu0
        %v2622 = vpop.f32.mrb[0].mxu0
        %v2623 = vpop.f32.mrb[0].mxu0
        %2624 = vdwg.mxu0
        %v2625 = vsub.f32 %v2620, %v1240
        %v2626 = vsel %vm1438, %v2625, -inf
        %2627 = vmax.xlane.f32.xlu0 %v2626
        %v2628 = vpop.xlane.xlu0 %2627
        %v2629 = vsub.f32 %v2625, %v2628
        %v2630 = vmul.f32 %v2629, 1.442695
        %v2631 = vpow.pop %v2630
        %v2632 = vsel %vm1438, %v2631, 0.0
        %2633 = vadd.xlane.f32.xlu0 %v2632
        %v2634 = vpop.xlane.xlu0 %2633
        %v2635 = vrcp.pop %v2634
        %v2636 = vmul.f32 %v2631, %v2635
        %v2637 = vpack.c.bf16 %v2636, %v2636
        %s2638 = scalar_lea.vmem %s1214, 12 [#allocation27]
        %2639 = vst.msk [vmem:[%s2638] sm:$0xf] %vm1498, %v2637
        %2640 = vrot.lane.b32.xlu0 %v2221, 104
        %v2641 = vpop.permute.xlu0 %2640
        %v2643 = vsel %vm1438, %v2637, 0
        %v2646 = vsel %vm1503, %v2641, 0
        %2648 = vmatprep.subr.bf16.mxu0 0
        %2649 = vmatpush1.bf16.msra.mxu0 %v2646
        %2650 = vmatprep.subr.bf16.mxu0 0
        %2651 = vmatpush1.bf16.msra.mxu0 0
        %2652 = vmatprep.subr.bf16.mxu0 0
        %2653 = vmatpush1.bf16.msra.mxu0 0
        %2654 = vmatprep.subr.bf16.mxu0 0
        %2655 = vmatpush1.bf16.msra.mxu0 0
        %2656 = vmatprep.subr.bf16.mxu0 0
        %2657 = vmatpush1.bf16.msra.mxu0 0
        %2658 = vmatprep.subr.bf16.mxu0 0
        %2659 = vmatpush1.bf16.msra.mxu0 0
        %2660 = vmatprep.subr.bf16.mxu0 0
        %2661 = vmatpush1.bf16.msra.mxu0 0
        %2662 = vmatprep.subr.bf16.mxu0 0
        %2663 = vmatpush1.bf16.msra.mxu0 0
        %2664 = vmatprep.subr.bf16.mxu0 0
        %2665 = vmatpush1.bf16.msra.mxu0 0
        %2666 = vmatprep.subr.bf16.mxu0 0
        %2667 = vmatpush1.bf16.msra.mxu0 0
        %2668 = vmatprep.subr.bf16.mxu0 0
        %2669 = vmatpush1.bf16.msra.mxu0 0
        %2670 = vmatprep.subr.bf16.mxu0 0
        %2671 = vmatpush1.bf16.msra.mxu0 0
        %2672 = vmatprep.subr.bf16.mxu0 0
        %2673 = vmatpush1.bf16.msra.mxu0 0
        %2674 = vmatprep.subr.bf16.mxu0 0
        %2675 = vmatpush1.bf16.msra.mxu0 0
        %2676 = vmatprep.subr.bf16.mxu0 0
        %2677 = vmatpush1.bf16.msra.mxu0 0
        %2678 = vmatprep.subr.bf16.mxu0 0
        %2679 = vmatpush1.bf16.msra.mxu0 0
        %2680 = vmatprep.mubr.bf16.mxu0 0
        %2681 = vmatmul.mubr.bf16.gmra.mrb[0].mxu0 %v2643
        %v2682 = vpop.f32.mrb[0].mxu0
        %v2683 = vadd.f32 0.0, %v2682
        %v2684 = vpop.f32.mrb[0].mxu0
        %v2685 = vpop.f32.mrb[0].mxu0
        %v2686 = vpop.f32.mrb[0].mxu0
        %2687 = vdwg.mxu0
        %v2688 = vpack.c.bf16 %v2683, %v2683
        %v2690 = vunpack.c.l.b16 %v2688
        %v2691 = vpack.c.b16 %v2690, %v2690
        %2692 = vrot.lane.b32.xlu0 %v2691, 24
        %v2693 = vpop.permute.xlu0 %2692
        %2695 = vst.msk [vmem:[#allocation2] sm:$0xf] %vm1916, %v2693
        %v2696 = vld [vmem:[#allocation2] sm:$0xf]
        %v2697 = vld [vmem:[#allocation21] sm:$0xf]
        %v2698 = vld [vmem:[#allocation21 + $0x4] sm:$0xf]
        %v2699 = vld [vmem:[#allocation21 + $0x8] sm:$0xf]
        %v2700 = vld [vmem:[#allocation21 + $0xc] sm:$0xf]
        %v2701 = vld [vmem:[#allocation23] sm:$0x1]
        %v2703 = vlaneseq
        %v2704 = vshrl.u32 %v2703, 7
        %v2705 = vsub.s32 0, %v2704
        %v2706 = vrot.slane %v2701, %v2705
        %v2712 = vunpack.c.l.b16 %v2697
        %v2713 = vunpack.c.l.b16 %v2698
        %v2714 = vunpack.c.l.b16 %v2699
        %v2715 = vunpack.c.l.b16 %v2700
        %v2716 = vpack.c.b16 %v2713, %v2712
        %v2717 = vpack.c.b16 %v2715, %v2714
        %v2721 = vsel %vm1265, %v2696, 0
        %2723 = vmatprep.subr.bf16.mxu0 0
        %2724 = vmatpush1.bf16.msra.mxu0 %v2716
        %2725 = vmatprep.subr.bf16.mxu0 0
        %2726 = vmatpush1.bf16.msra.mxu0 %v2717
        %2727 = vmatprep.subr.bf16.mxu0 0
        %2728 = vmatpush1.bf16.msra.mxu0 0
        %2729 = vmatprep.subr.bf16.mxu0 0
        %2730 = vmatpush1.bf16.msra.mxu0 0
        %2731 = vmatprep.subr.bf16.mxu0 0
        %2732 = vmatpush1.bf16.msra.mxu0 0
        %2733 = vmatprep.subr.bf16.mxu0 0
        %2734 = vmatpush1.bf16.msra.mxu0 0
        %2735 = vmatprep.subr.bf16.mxu0 0
        %2736 = vmatpush1.bf16.msra.mxu0 0
        %2737 = vmatprep.subr.bf16.mxu0 0
        %2738 = vmatpush1.bf16.msra.mxu0 0
        %2739 = vmatprep.subr.bf16.mxu0 0
        %2740 = vmatpush1.bf16.msra.mxu0 0
        %2741 = vmatprep.subr.bf16.mxu0 0
        %2742 = vmatpush1.bf16.msra.mxu0 0
        %2743 = vmatprep.subr.bf16.mxu0 0
        %2744 = vmatpush1.bf16.msra.mxu0 0
        %2745 = vmatprep.subr.bf16.mxu0 0
        %2746 = vmatpush1.bf16.msra.mxu0 0
        %2747 = vmatprep.subr.bf16.mxu0 0
        %2748 = vmatpush1.bf16.msra.mxu0 0
        %2749 = vmatprep.subr.bf16.mxu0 0
        %2750 = vmatpush1.bf16.msra.mxu0 0
        %2751 = vmatprep.subr.bf16.mxu0 0
        %2752 = vmatpush1.bf16.msra.mxu0 0
        %2753 = vmatprep.subr.bf16.mxu0 0
        %2754 = vmatpush1.bf16.msra.mxu0 0
        %2755 = vmatprep.mubr.bf16.mxu0 0
        %2756 = vmatmul.mubr.bf16.gmra.mrb[0].mxu0 %v2721
        %v2757 = vpop.f32.mrb[0].mxu0
        %v2758 = vadd.f32 %v2706, %v2757
        %v2759 = vpop.f32.mrb[0].mxu0
        %v2760 = vpop.f32.mrb[0].mxu0
        %v2761 = vpop.f32.mrb[0].mxu0
        %2762 = vdwg.mxu0
        %v2763 = vadd.f32 %v2758, %v2021
        %v2764 = vld [vmem:[%s45] sm:$0x1]
        %v2765 = vld [vmem:[%s47] sm:$0x1]
        %v2766 = vsel %vm1265, %v2763, 0.0
        %2767 = vadd.xlane.f32.xlu0 %v2766
        %v2768 = vpop.xlane.xlu0 %2767
        %v2769 = vmul.f32 %v2768, %v1991
        %v2770 = vsub.f32 %v2763, %v2769
        %v2771 = vmul.f32 %v2770, %v2770
        %v2772 = vsel %vm1265, %v2771, 0.0
        %2773 = vadd.xlane.f32.xlu0 %v2772
        %v2774 = vpop.xlane.xlu0 %2773
        %v2775 = vmul.f32 %v2774, %v1991
        %v2776 = vadd.f32 %v2775, 1e-05
        %v2777 = vrsqrt.pop %v2776
        %v2778 = vmul.f32 %v2770, %v2777
        %v2780 = vlaneseq
        %v2781 = vshrl.u32 %v2780, 7
        %v2782 = vsub.s32 0, %v2781
        %v2783 = vrot.slane %v2764, %v2782
        %v2785 = vmul.f32 %v2778, %v2783
        %v2787 = vlaneseq
        %v2788 = vshrl.u32 %v2787, 7
        %v2789 = vsub.s32 0, %v2788
        %v2790 = vrot.slane %v2765, %v2789
        %v2792 = vadd.f32 %v2785, %v2790
        %v2793 = vmul.f32 %v2792, %v2019
        %v2794 = vpack.c.bf16 %v2793, %v2793
        %v2795 = vld [vmem:[%s49] sm:$0xf]
        %v2796 = vld [vmem:[%s49 + $0x4] sm:$0xf]
        %v2797 = vld [vmem:[%s49 + $0x8] sm:$0xf]
        %v2798 = vld [vmem:[%s49 + $0xc] sm:$0xf]
        %v2799 = vld [vmem:[%s51] sm:$0x1]
        %v2801 = vlaneseq
        %v2802 = vshrl.u32 %v2801, 7
        %v2803 = vsub.s32 0, %v2802
        %v2804 = vrot.slane %v2799, %v2803
        %v2810 = vunpack.c.l.b16 %v2795
        %v2811 = vunpack.c.l.b16 %v2796
        %v2812 = vunpack.c.l.b16 %v2797
        %v2813 = vunpack.c.l.b16 %v2798
        %v2814 = vpack.c.b16 %v2811, %v2810
        %v2815 = vpack.c.b16 %v2813, %v2812
        %v2819 = vsel %vm1265, %v2794, 0
        %2821 = vmatprep.subr.bf16.mxu0 0
        %2822 = vmatpush1.bf16.msra.mxu0 %v2814
        %2823 = vmatprep.subr.bf16.mxu0 0
        %2824 = vmatpush1.bf16.msra.mxu0 %v2815
        %2825 = vmatprep.subr.bf16.mxu0 0
        %2826 = vmatpush1.bf16.msra.mxu0 0
        %2827 = vmatprep.subr.bf16.mxu0 0
        %2828 = vmatpush1.bf16.msra.mxu0 0
        %2829 = vmatprep.subr.bf16.mxu0 0
        %2830 = vmatpush1.bf16.msra.mxu0 0
        %2831 = vmatprep.subr.bf16.mxu0 0
        %2832 = vmatpush1.bf16.msra.mxu0 0
        %2833 = vmatprep.subr.bf16.mxu0 0
        %2834 = vmatpush1.bf16.msra.mxu0 0
        %2835 = vmatprep.subr.bf16.mxu0 0
        %2836 = vmatpush1.bf16.msra.mxu0 0
        %2837 = vmatprep.subr.bf16.mxu0 0
        %2838 = vmatpush1.bf16.msra.mxu0 0
        %2839 = vmatprep.subr.bf16.mxu0 0
        %2840 = vmatpush1.bf16.msra.mxu0 0
        %2841 = vmatprep.subr.bf16.mxu0 0
        %2842 = vmatpush1.bf16.msra.mxu0 0
        %2843 = vmatprep.subr.bf16.mxu0 0
        %2844 = vmatpush1.bf16.msra.mxu0 0
        %2845 = vmatprep.subr.bf16.mxu0 0
        %2846 = vmatpush1.bf16.msra.mxu0 0
        %2847 = vmatprep.subr.bf16.mxu0 0
        %2848 = vmatpush1.bf16.msra.mxu0 0
        %2849 = vmatprep.subr.bf16.mxu0 0
        %2850 = vmatpush1.bf16.msra.mxu0 0
        %2851 = vmatprep.subr.bf16.mxu0 0
        %2852 = vmatpush1.bf16.msra.mxu0 0
        %2853 = vmatprep.mubr.bf16.mxu0 0
        %2854 = vmatmul.mubr.bf16.gmra.mrb[0].mxu0 %v2819
        %v2855 = vpop.f32.mrb[0].mxu0
        %v2856 = vadd.f32 %v2804, %v2855
        %v2857 = vpop.f32.mrb[0].mxu0
        %v2858 = vpop.f32.mrb[0].mxu0
        %v2859 = vpop.f32.mrb[0].mxu0
        %2860 = vdwg.mxu0
        %v2861 = vmax.f32 %v2856, 0.0
        %v2862 = vpack.c.bf16 %v2861, %v2861
        %v2863 = vld [vmem:[%s53] sm:$0xf]
        %v2864 = vld [vmem:[%s53 + $0x4] sm:$0xf]
        %v2865 = vld [vmem:[%s53 + $0x8] sm:$0xf]
        %v2866 = vld [vmem:[%s53 + $0xc] sm:$0xf]
        %v2867 = vld [vmem:[%s53 + $0x10] sm:$0xf]
        %v2868 = vld [vmem:[%s53 + $0x14] sm:$0xf]
        %v2869 = vld [vmem:[%s53 + $0x18] sm:$0xf]
        %v2870 = vld [vmem:[%s53 + $0x1c] sm:$0xf]
        %v2871 = vld [vmem:[%s55] sm:$0x1]
        %v2873 = vlaneseq
        %v2874 = vshrl.u32 %v2873, 7
        %v2875 = vsub.s32 0, %v2874
        %v2876 = vrot.slane %v2871, %v2875
        %v2886 = vunpack.c.l.b16 %v2863
        %v2887 = vunpack.c.l.b16 %v2864
        %v2888 = vunpack.c.l.b16 %v2865
        %v2889 = vunpack.c.l.b16 %v2866
        %v2890 = vunpack.c.l.b16 %v2867
        %v2891 = vunpack.c.l.b16 %v2868
        %v2892 = vunpack.c.l.b16 %v2869
        %v2893 = vunpack.c.l.b16 %v2870
        %v2894 = vpack.c.b16 %v2887, %v2886
        %v2895 = vpack.c.b16 %v2889, %v2888
        %v2896 = vpack.c.b16 %v2891, %v2890
        %v2897 = vpack.c.b16 %v2893, %v2892
        %vm2902 = vcmask 523264
        %v2904 = vsel %vm2902, %v2862, 0
        %2906 = vmatprep.subr.bf16.mxu0 0
        %2907 = vmatpush1.bf16.msra.mxu0 %v2894
        %2908 = vmatprep.subr.bf16.mxu0 0
        %2909 = vmatpush1.bf16.msra.mxu0 %v2895
        %2910 = vmatprep.subr.bf16.mxu0 0
        %2911 = vmatpush1.bf16.msra.mxu0 %v2896
        %2912 = vmatprep.subr.bf16.mxu0 0
        %2913 = vmatpush1.bf16.msra.mxu0 %v2897
        %2914 = vmatprep.subr.bf16.mxu0 0
        %2915 = vmatpush1.bf16.msra.mxu0 0
        %2916 = vmatprep.subr.bf16.mxu0 0
        %2917 = vmatpush1.bf16.msra.mxu0 0
        %2918 = vmatprep.subr.bf16.mxu0 0
        %2919 = vmatpush1.bf16.msra.mxu0 0
        %2920 = vmatprep.subr.bf16.mxu0 0
        %2921 = vmatpush1.bf16.msra.mxu0 0
        %2922 = vmatprep.subr.bf16.mxu0 0
        %2923 = vmatpush1.bf16.msra.mxu0 0
        %2924 = vmatprep.subr.bf16.mxu0 0
        %2925 = vmatpush1.bf16.msra.mxu0 0
        %2926 = vmatprep.subr.bf16.mxu0 0
        %2927 = vmatpush1.bf16.msra.mxu0 0
        %2928 = vmatprep.subr.bf16.mxu0 0
        %2929 = vmatpush1.bf16.msra.mxu0 0
        %2930 = vmatprep.subr.bf16.mxu0 0
        %2931 = vmatpush1.bf16.msra.mxu0 0
        %2932 = vmatprep.subr.bf16.mxu0 0
        %2933 = vmatpush1.bf16.msra.mxu0 0
        %2934 = vmatprep.subr.bf16.mxu0 0
        %2935 = vmatpush1.bf16.msra.mxu0 0
        %2936 = vmatprep.subr.bf16.mxu0 0
        %2937 = vmatpush1.bf16.msra.mxu0 0
        %2938 = vmatprep.mubr.bf16.mxu0 0
        %2939 = vmatmul.mubr.bf16.gmra.mrb[0].mxu0 %v2904
        %v2940 = vpop.f32.mrb[0].mxu0
        %v2941 = vadd.f32 %v2876, %v2940
        %v2942 = vpop.f32.mrb[0].mxu0
        %v2943 = vpop.f32.mrb[0].mxu0
        %v2944 = vpop.f32.mrb[0].mxu0
        %2945 = vdwg.mxu0
        %v2946 = vadd.f32 %v2941, %v2793
        %v2947 = vld [vmem:[%s57] sm:$0x1]
        %v2948 = vld [vmem:[%s59] sm:$0x1]
        %v2949 = vsel %vm1265, %v2946, 0.0
        %2950 = vadd.xlane.f32.xlu0 %v2949
        %v2951 = vpop.xlane.xlu0 %2950
        %v2952 = vmul.f32 %v2951, %v1991
        %v2953 = vsub.f32 %v2946, %v2952
        %v2954 = vmul.f32 %v2953, %v2953
        %v2955 = vsel %vm1265, %v2954, 0.0
        %2956 = vadd.xlane.f32.xlu0 %v2955
        %v2957 = vpop.xlane.xlu0 %2956
        %v2958 = vmul.f32 %v2957, %v1991
        %v2959 = vadd.f32 %v2958, 1e-05
        %v2960 = vrsqrt.pop %v2959
        %v2961 = vmul.f32 %v2953, %v2960
        %v2963 = vlaneseq
        %v2964 = vshrl.u32 %v2963, 7
        %v2965 = vsub.s32 0, %v2964
        %v2966 = vrot.slane %v2947, %v2965
        %v2968 = vmul.f32 %v2961, %v2966
        %v2970 = vlaneseq
        %v2971 = vshrl.u32 %v2970, 7
        %v2972 = vsub.s32 0, %v2971
        %v2973 = vrot.slane %v2948, %v2972
        %v2975 = vadd.f32 %v2968, %v2973
        %v2976 = vmul.f32 %v2975, %v2019
        %2977 = vst.msk [vmem:[%s1200] sm:$0xff] %vm1265, %v2976
        %s2978 = sand.u32 %s750, 1
        %s2979 = scalar_lea.sflag [#allocation5], %s2978
        %s2980 = sand.u32 %s750, 1
        %s2981 = smul.addr %s2980, 8
        %s2982 = scalar_lea.vmem [#allocation24], %s2981
        %s2983 = sand.u32 %s92, 1
        %s2984 = scalar_lea.sflag [#allocation26], %s2983
        %s2985 = sand.u32 %s776, 1
        %s2986 = smul.addr %s2985, 16
        %s2987 = scalar_lea.vmem [#allocation25], %s2986
        %s2988 = sand.u32 %s92, 1
        %s2989 = scalar_lea.sflag [#allocation26], %s2988
        %s2990 = sand.u32 %s802, 1
        %s2991 = smul.addr %s2990, 16
        %s2992 = scalar_lea.vmem [#allocation27], %s2991
        // Predicated region
        $region193: #{tpu_custom_call.1} parent=139 // pred_check
          %p2993 = pneg %p760
        $region194: #{tpu_custom_call.1} parent=139 // pred_check_branch
          %2995 = sbr.rel (%p2993) target = $region196
        $region195: #{tpu_custom_call.1} parent=139 // pred_region
          %s2997 = ssub.s32 128, 128
          %2998 = vsyncadd %s2979, %s2997
          %s2999 = smul.addr %s92, 128
          %s3000 = scalar_lea.hbm %s61, %s2999
          %s3002 = sshll.u32 %s2982, 4
          %s3003 = int_to_ptr.vmem [resolvable:$true] %s3002
          %3005 = dma.vmem_to_hbm [thread:$0]  %s3003, 128, %s3000, %s2979
        $region196: #{tpu_custom_call.1} parent=139 // pred_fallthru
          _
        // Predicated region
        $region197: #{tpu_custom_call.1} parent=139 // pred_check
          %p3006 = pneg %p786
        $region198: #{tpu_custom_call.1} parent=139 // pred_check_branch
          %3008 = sbr.rel (%p3006) target = $region200
        $region199: #{tpu_custom_call.1} parent=139 // pred_region
          %s3010 = ssub.s32 256, 256
          %3011 = vsyncadd %s2984, %s3010
          %s3012 = smul.addr %s92, 4
          %s3013 = smul.addr %s3012, 64
          %s3014 = scalar_lea.hbm %s63, %s3013
          %s3015 = sshll.u32 %s2987, 4
          %s3016 = int_to_ptr.vmem [resolvable:$true] %s3015
          %3021 = dma.vmem_to_hbm [thread:$0]  %s3016, 256, %s3014, %s2984, 64, 64, 4
        $region200: #{tpu_custom_call.1} parent=139 // pred_fallthru
          _
        // Predicated region
        $region201: #{tpu_custom_call.1} parent=139 // pred_check
          %p3022 = pneg %p812
        $region202: #{tpu_custom_call.1} parent=139 // pred_check_branch
          %3024 = sbr.rel (%p3022) target = $region204
        $region203: #{tpu_custom_call.1} parent=139 // pred_region
          %s3026 = ssub.s32 256, 256
          %3027 = vsyncadd %s2989, %s3026
          %s3028 = smul.addr %s92, 4
          %s3029 = smul.addr %s3028, 64
          %s3030 = scalar_lea.hbm %s65, %s3029
          %s3031 = sshll.u32 %s2992, 4
          %s3032 = int_to_ptr.vmem [resolvable:$true] %s3031
          %3037 = dma.vmem_to_hbm [thread:$0]  %s3032, 256, %s3030, %s2989, 64, 64, 4
        $region204: #{tpu_custom_call.1} parent=139 // pred_fallthru
          _
      $region140: #{tpu_custom_call.1} parent=5 // pred_fallthru
        _
      %p3038 = scmp.le.s32.totalorder 2, %s87
      // Predicated region
      $region205: #{tpu_custom_call.1} parent=5 // pred_check
        %p3039 = pneg %p3038
      $region206: #{tpu_custom_call.1} parent=5 // pred_check_branch
        %3041 = sbr.rel (%p3039) target = $region208
      $region207: #{tpu_custom_call.1} parent=5 // pred_region
        %s3042 = ssub.s32 %s87, 2
        // Predicated region
        $region209: #{tpu_custom_call.1} parent=207 // pred_check
          %p3043 = pneg %p766
        $region210: #{tpu_custom_call.1} parent=207 // pred_check_branch
          %3045 = sbr.rel (%p3043) target = $region212
        $region211: #{tpu_custom_call.1} parent=207 // pred_region
          %s3046 = sand.u32 %s751, 1
          %s3047 = scalar_lea.sflag [#allocation5], %s3046
          %s3048 = sand.u32 %s751, 1
          %s3049 = smul.addr %s3048, 8
          %s3050 = scalar_lea.vmem [#allocation24], %s3049
          %3051 = dma.done %s3047, 128
        $region212: #{tpu_custom_call.1} parent=207 // pred_fallthru
          _
        // Predicated region
        $region213: #{tpu_custom_call.1} parent=207 // pred_check
          %p3052 = pneg %p792
        $region214: #{tpu_custom_call.1} parent=207 // pred_check_branch
          %3054 = sbr.rel (%p3052) target = $region216
        $region215: #{tpu_custom_call.1} parent=207 // pred_region
          %s3055 = sand.u32 %s93, 1
          %s3056 = scalar_lea.sflag [#allocation26], %s3055
          %s3057 = sand.u32 %s777, 1
          %s3058 = smul.addr %s3057, 16
          %s3059 = scalar_lea.vmem [#allocation25], %s3058
          %3060 = dma.done %s3056, 256
        $region216: #{tpu_custom_call.1} parent=207 // pred_fallthru
          _
        // Predicated region
        $region217: #{tpu_custom_call.1} parent=207 // pred_check
          %p3061 = pneg %p818
        $region218: #{tpu_custom_call.1} parent=207 // pred_check_branch
          %3063 = sbr.rel (%p3061) target = $region220
        $region219: #{tpu_custom_call.1} parent=207 // pred_region
          %s3064 = sand.u32 %s93, 1
          %s3065 = scalar_lea.sflag [#allocation26], %s3064
          %s3066 = sand.u32 %s803, 1
          %s3067 = smul.addr %s3066, 16
          %s3068 = scalar_lea.vmem [#allocation27], %s3067
          %3069 = dma.done %s3065, 256
        $region220: #{tpu_custom_call.1} parent=207 // pred_fallthru
          _
      $region208: #{tpu_custom_call.1} parent=5 // pred_fallthru
        _
    $region6: #{tpu_custom_call.1} parent=1 // loop_footer
      %s91 = sadd.s32 1, %s87
    $region7: #{tpu_custom_call.1} parent=1 // loop_footer_branch
      %86 = sbr.rel target = $region3
    $region8: #{tpu_custom_call.1} parent=1 // loop_exit
      _
    %3070 = vsyncpa [#allocation4], 1
    %s3071 = scalar_lea.sflag [#allocation4], 1
    %3072 = vsyncpa %s3071, 1
    %3073 = vsyncpa [#allocation7], 1
    %3074 = vsyncpa [#allocation10], 1
    %3075 = vsyncpa [#allocation13], 1
    %3076 = vsyncpa [#allocation16], 1
    %3077 = vsyncpa [#allocation19], 1
    %3078 = vsyncpa [#allocation22], 1
    %3079 = vsyncpa [#allocation5], 1
    %s3080 = scalar_lea.sflag [#allocation5], 1
    %3081 = vsyncpa %s3080, 1
    %3082 = vsyncpa [#allocation26], 1
    %s3083 = scalar_lea.sflag [#allocation26], 1
    %3084 = vsyncpa %s3083, 1

</llo_original>
